<compile_context>
chip_gen: v6e
topology: v6e:2x2x1
jax: 0.10.0
libtpu: 0.0.40
codegen_flags: <defaults>
</compile_context>

<pallas_src>
import functools
import math

import jax
import jax.numpy as jnp
from jax.experimental import pallas as pl
from jax.experimental.pallas import tpu as pltpu


# ---------------------------------------------------------------------------
# helpers
# ---------------------------------------------------------------------------

def _round_up(x, m):
    return ((x + m - 1) // m) * m


def _row_tile(m, tile):
    # Never allocate a block wildly larger than the data; keep it a multiple
    # of 8 sublanes so the (8, 128) tiling constraint is always satisfied.
    return min(tile, _round_up(m, 8))


def _bdot(x, w_bf16):
    # bf16 MXU matmul with f32 accumulation.
    return jnp.dot(x.astype(jnp.bfloat16), w_bf16,
                   preferred_element_type=jnp.float32)


# ---------------------------------------------------------------------------
# Kernel 1: fused per-point pre-projections
#   value0 = MLP_Res(cat([feat, feat]))  (concat folded into the weights)
#   key    = feat @ wk + bk
#   query  = feat @ wq + bq
#   value  = value0 @ wv + bv            (value0 stays in VMEM)
# ---------------------------------------------------------------------------

def _preproj_kernel(x_ref, w1_ref, b1_ref, w2_ref, b2_ref, ws_ref, bs_ref,
                    wk_ref, bk_ref, wq_ref, bq_ref, wv_ref, bv_ref,
                    v0_ref, key_ref, qry_ref, vd_ref):
    # all projections share the same LHS tile: cast it to bf16 ONCE
    xb = x_ref[...].astype(jnp.bfloat16)
    h = jnp.maximum(
        jnp.dot(xb, w1_ref[...], preferred_element_type=jnp.float32)
        + b1_ref[...], 0.0)
    v0 = (_bdot(h, w2_ref[...]) + b2_ref[...]
          + jnp.dot(xb, ws_ref[...], preferred_element_type=jnp.float32)
          + bs_ref[...])
    v0_ref[...] = v0.astype(v0_ref.dtype)
    key_ref[...] = (jnp.dot(xb, wk_ref[...], preferred_element_type=jnp.float32)
                    + bk_ref[...]).astype(key_ref.dtype)
    qry_ref[...] = (jnp.dot(xb, wq_ref[...], preferred_element_type=jnp.float32)
                    + bq_ref[...]).astype(qry_ref.dtype)
    vd_ref[...] = (_bdot(v0, wv_ref[...]) + bv_ref[...]).astype(vd_ref.dtype)


def preproj_pallas(feat, w1f, b1, w2, b2, wsf, bs, wk, bk, wq, bq, wv, bv,
                   tile=512):
    m, c = feat.shape
    out = w2.shape[1]
    dim = wk.shape[1]
    tm = _row_tile(m, tile)
    wargs = [w1f, b1.reshape(1, -1), w2, b2.reshape(1, -1), wsf,
             bs.reshape(1, -1), wk, bk.reshape(1, -1), wq, bq.reshape(1, -1),
             wv, bv.reshape(1, -1)]
    w_specs = [pl.BlockSpec(a.shape, lambda i: (0, 0)) for a in wargs]
    return pl.pallas_call(
        _preproj_kernel,
        out_shape=(jax.ShapeDtypeStruct((m, out), jnp.bfloat16),
                   jax.ShapeDtypeStruct((m, dim), jnp.bfloat16),
                   jax.ShapeDtypeStruct((m, dim), jnp.bfloat16),
                   jax.ShapeDtypeStruct((m, dim), jnp.bfloat16)),
        grid=(pl.cdiv(m, tm),),
        in_specs=[pl.BlockSpec((tm, c), lambda i: (i, 0))] + w_specs,
        out_specs=(pl.BlockSpec((tm, out), lambda i: (i, 0)),
                   pl.BlockSpec((tm, dim), lambda i: (i, 0)),
                   pl.BlockSpec((tm, dim), lambda i: (i, 0)),
                   pl.BlockSpec((tm, dim), lambda i: (i, 0))),
        compiler_params=pltpu.CompilerParams(dimension_semantics=("parallel",)),
    )(feat, *wargs)


# ---------------------------------------------------------------------------
# Kernel 2: fused attention tail
#   pos_mlp + (query - key_grp + pos_emb) + (value_grp + pos_emb) + attn MLP
#   + ConvTranspose up-sampling + neighbour reduction + end conv (block-diag
#   matmul) + nearest-upsample identity residual, lane-dense (tm, up*out) out.
# ---------------------------------------------------------------------------

def _attn_fused_kernel(q_ref, kg_ref, vg_ref, pr_ref, id_ref,
                       wp1_ref, bp1_ref, wp2_ref, bp2_ref,
                       wa1_ref, ba1_ref, wtf_ref, btf_ref,
                       wendb_ref, bendf_ref, o_ref, *, up):
    tp, kk, d = kg_ref.shape
    # --- pos_mlp: K=3 first layer as VPU FMAs (no padded MXU contraction) ---
    pos = pr_ref[...].reshape(tp * kk, 3)
    posb = pos.astype(jnp.bfloat16).astype(jnp.float32)
    wp1 = wp1_ref[...].astype(jnp.float32)
    hp = (bp1_ref[...]
          + posb[:, 0:1] * wp1[0:1, :]
          + posb[:, 1:2] * wp1[1:2, :]
          + posb[:, 2:3] * wp1[2:3, :])
    hp = jnp.maximum(hp, 0.0)
    pe = _bdot(hp, wp2_ref[...]) + bp2_ref[...]                 # (tp*kk, d) f32

    # --- qk_rel / value + pos_emb: VMEM-resident, never hit HBM ---
    q = q_ref[...].astype(jnp.float32)
    kg = kg_ref[...].astype(jnp.float32)
    vg = vg_ref[...].astype(jnp.float32)
    pe3 = pe.reshape(tp, kk, d)
    attn_in = (q[:, None, :] - kg) + pe3                        # (tp, kk, d)
    val = (vg + pe3).reshape(tp * kk, d)

    # --- attention MLP + ConvTranspose up-sampling (wtf lane-fused) ---
    h = jnp.maximum(_bdot(attn_in.reshape(tp * kk, d), wa1_ref[...])
                    + ba1_ref[...], 0.0)
    a = _bdot(h, wtf_ref[...]) + btf_ref[...]                   # (tp*kk, up*d)

    # --- neighbour reduction + end conv (ONE block-diag matmul) + residual ---
    val_t = jnp.tile(val, (1, up))                              # (tp*kk, up*d)
    agg = jnp.sum((a * val_t).reshape(tp, kk, up * d), axis=1)  # (tp, up*d)
    ident = jnp.tile(id_ref[...].astype(jnp.float32), (1, up))  # (tp, up*out)
    y = _bdot(agg, wendb_ref[...]) + bendf_ref[...] + ident
    o_ref[...] = y.astype(o_ref.dtype)                          # lane-dense


def attn_fused_pallas(query_d, key_grp, val_grp, pos_rel, ident,
                      wp1, bp1, wp2, bp2, wa1, ba1, wtf, btf, wendb, bendf,
                      up, tile=256):
    P, kk, d = key_grp.shape
    hp = wp1.shape[1]
    ha = wa1.shape[1]
    out = ident.shape[1]
    uo = wendb.shape[1]
    tm = _row_tile(P, tile)
    wargs = [wp1, bp1.reshape(1, -1), wp2, bp2.reshape(1, -1),
             wa1, ba1.reshape(1, -1), wtf, btf.reshape(1, -1),
             wendb, bendf.reshape(1, -1)]
    w_specs = [pl.BlockSpec(a.shape, lambda i: (0, 0)) for a in wargs]
    return pl.pallas_call(
        functools.partial(_attn_fused_kernel, up=up),
        out_shape=jax.ShapeDtypeStruct((P, uo), jnp.bfloat16),
        grid=(pl.cdiv(P, tm),),
        in_specs=[pl.BlockSpec((tm, d), lambda i: (i, 0)),
                  pl.BlockSpec((tm, kk, d), lambda i: (i, 0, 0)),
                  pl.BlockSpec((tm, kk, d), lambda i: (i, 0, 0)),
                  pl.BlockSpec((tm, kk, 3), lambda i: (i, 0, 0)),
                  pl.BlockSpec((tm, out), lambda i: (i, 0))] + w_specs,
        out_specs=pl.BlockSpec((tm, uo), lambda i: (i, 0)),
        compiler_params=pltpu.CompilerParams(dimension_semantics=("parallel",)),
    )(query_d, key_grp, val_grp, pos_rel, ident, *wargs)


# ---------------------------------------------------------------------------
# Kernel 3: fused mlp1 -> mlp2 -> mlp3 -> mlp4 stack
#   Global-feature concat folded into per-batch biases gb = [g@W1b; g@Wsb; ...]
#   All intermediates stay in VMEM; emits seed_features and seed_xyz.
# ---------------------------------------------------------------------------

def _seed_mlp_kernel(x_ref, gb_ref,
                     m1w1, m1b1, m1w2, m1b2, m1ws, m1bs,
                     m2w1, m2b1, m2w2, m2b2, m2ws, m2bs,
                     m3w1, m3b1, m3w2, m3b2, m3ws, m3bs,
                     m4w1, m4b1, m4w2, m4b2,
                     sf_ref, xyz_ref, *, use_tanh):
    gb = gb_ref[...]                                   # (4, out) f32
    xb = x_ref[...]                                    # bf16 tile, cast once
    # mlp1 (global folded into gb[0]/gb[1])
    h = jnp.maximum(_bdot(xb, m1w1[...]) + m1b1[...] + gb[0:1, :], 0.0)
    f1 = (_bdot(h, m1w2[...]) + m1b2[...]
          + _bdot(xb, m1ws[...]) + m1bs[...] + gb[1:2, :])
    # mlp2
    f1b = f1.astype(jnp.bfloat16)
    h = jnp.maximum(_bdot(f1b, m2w1[...]) + m2b1[...], 0.0)
    f2 = _bdot(h, m2w2[...]) + m2b2[...] + _bdot(f1b, m2ws[...]) + m2bs[...]
    # mlp3 (global folded into gb[2]/gb[3])
    f2b = f2.astype(jnp.bfloat16)
    h = jnp.maximum(_bdot(f2b, m3w1[...]) + m3b1[...] + gb[2:3, :], 0.0)
    sf = (_bdot(h, m3w2[...]) + m3b2[...]
          + _bdot(f2b, m3ws[...]) + m3bs[...] + gb[3:4, :])
    sf_ref[...] = sf
    # mlp4 head (relu-linear + (tanh-)linear)
    sfb = sf.astype(jnp.bfloat16)
    h = jnp.maximum(_bdot(sfb, m4w1[...]) + m4b1[...], 0.0)
    xyz = _bdot(h, m4w2[...]) + m4b2[...]
    if use_tanh:
        xyz = jnp.tanh(xyz)
    xyz_ref[...] = xyz


def seed_mlp_pallas(x, gb, m1, m2, m3, m4, use_tanh, tile=512):
    B, NU, c = x.shape
    out = m3["w2"].shape[1]
    tm = _row_tile(NU, tile)
    wargs = [
        m1["w1t"], m1["b1"], m1["w2"], m1["b2"], m1["wst"], m1["bs"],
        m2["w1"], m2["b1"], m2["w2"], m2["b2"], m2["ws"], m2["bs"],
        m3["w1t"], m3["b1"], m3["w2"], m3["b2"], m3["wst"], m3["bs"],
        m4["w1"], m4["b1"], m4["w2"], m4["b2"],
    ]
    wargs = [w if w.ndim == 2 else w.reshape(1, -1) for w in wargs]
    w_specs = [pl.BlockSpec(w.shape, lambda b, i: (0, 0)) for w in wargs]
    return pl.pallas_call(
        functools.partial(_seed_mlp_kernel, use_tanh=use_tanh),
        out_shape=(jax.ShapeDtypeStruct((B, NU, out), jnp.float32),
                   jax.ShapeDtypeStruct((B, NU, 3), jnp.float32)),
        grid=(B, pl.cdiv(NU, tm)),
        in_specs=[pl.BlockSpec((None, tm, c), lambda b, i: (b, i, 0)),
                  pl.BlockSpec((None, 4, out), lambda b, i: (b, 0, 0))] + w_specs,
        out_specs=(pl.BlockSpec((None, tm, out), lambda b, i: (b, i, 0)),
                   pl.BlockSpec((None, tm, 3), lambda b, i: (b, i, 0))),
        compiler_params=pltpu.CompilerParams(
            dimension_semantics=("parallel", "parallel")),
    )(x, gb, *wargs)


# ---------------------------------------------------------------------------
# JAX glue: kNN + gather (data-dependent indexing, outside Pallas)
# ---------------------------------------------------------------------------

def knn_idx(xyz, k):
    sq = jnp.sum(xyz * xyz, axis=-1)
    d = sq[:, :, None] + sq[:, None, :] - 2.0 * jnp.einsum("bnd,bmd->bnm", xyz, xyz)
    return jax.lax.top_k(-d, k)[1]                   # k nearest (incl. self)


def group(feat, idx):
    return jax.vmap(lambda f, i: f[i])(feat, idx)    # [B, N, k, C]


# ---------------------------------------------------------------------------
# Forward pass (Pallas)
# ---------------------------------------------------------------------------

def pallas_forward(params, partial_xyz, partial_features, global_feature,
                   *, k, up, use_tanh=True):
    B, N, _ = partial_xyz.shape
    ut = params["ut"]
    in_dim = partial_features.shape[-1]
    dim = ut["wk"].shape[1]
    out_dim = ut["wend"].shape[1]

    feat = partial_features.reshape(B * N, in_dim)

    # ---------------- UpsampleTransformer -----------------
    # mlp_v input is cat([feat, feat]); fold the concat into the weights.
    vw1, vws = ut["mlp_v"]["w1"], ut["mlp_v"]["ws"]
    w1f = (vw1[:in_dim].astype(jnp.float32)
           + vw1[in_dim:].astype(jnp.float32)).astype(jnp.bfloat16)
    wsf = (vws[:in_dim].astype(jnp.float32)
           + vws[in_dim:].astype(jnp.float32)).astype(jnp.bfloat16)

    value0, key_d, query_d, value_d = preproj_pallas(
        feat, w1f, ut["mlp_v"]["b1"], ut["mlp_v"]["w2"], ut["mlp_v"]["b2"],
        wsf, ut["mlp_v"]["bs"],
        ut["wk"], ut["bk"], ut["wq"], ut["bq"], ut["wv"], ut["bv"])

    idx = knn_idx(partial_xyz, k)                                   # [B, N, k]
    key_grp = group(key_d.reshape(B, N, dim), idx).reshape(B * N, k, dim)
    val_grp = group(value_d.reshape(B, N, dim), idx).reshape(B * N, k, dim)
    pos_rel = (partial_xyz[:, :, None, :]
               - group(partial_xyz, idx)).reshape(B * N, k, 3)

    # end conv lifted to a single block-diagonal matmul over the up axis
    wendb = jnp.kron(jnp.eye(up, dtype=jnp.float32),
                     ut["wend"].astype(jnp.float32)).astype(jnp.bfloat16)
    bendf = jnp.tile(ut["bend"], up)

    features = attn_fused_pallas(
        query_d, key_grp, val_grp, pos_rel, value0,
        ut["wp1"], ut["bp1"], ut["wp2"], ut["bp2"],
        ut["wa1"], ut["ba1"], ut["wtf"], ut["btf"], wendb, bendf, up)
    features = features.reshape(B, N * up, out_dim)                 # bf16

    # ---------------- residual MLP stack (single fused kernel) -----------------
    g = global_feature.reshape(B, -1)
    m1, m2, m3, m4 = params["mlp1"], params["mlp2"], params["mlp3"], params["mlp4"]
    gW = jnp.concatenate([m1["w1b"], m1["wsb"], m3["w1b"], m3["wsb"]], axis=1)
    gb = jnp.dot(g.astype(jnp.bfloat16), gW,
                 preferred_element_type=jnp.float32).reshape(B, 4, out_dim)

    seed_feat, seed_xyz = seed_mlp_pallas(features, gb, m1, m2, m3, m4, use_tanh)
    return seed_xyz, seed_feat, None


# ---------------------------------------------------------------------------
# Pure-JAX reference (module-faithful layout, identical bf16/f32 policy)
# ---------------------------------------------------------------------------

def _rdot(x, w):
    return jnp.dot(x.astype(jnp.bfloat16), w.astype(jnp.bfloat16),
                   preferred_element_type=jnp.float32)


def mlp_res_ref(x, p):
    h = jnp.maximum(_rdot(x, p["w1"]) + p["b1"], 0.0)
    return _rdot(h, p["w2"]) + p["b2"] + _rdot(x, p["ws"]) + p["bs"]


def reference_forward(params, partial_xyz, partial_features, global_feature,
                      *, k, up, use_tanh=True):
    B, N, _ = partial_xyz.shape
    ut = params["ut"]
    dim = ut["wk"].shape[1]
    out_dim = ut["wend"].shape[1]

    feat = partial_features.reshape(B * N, -1)
    kq = jnp.concatenate([feat, feat], axis=-1)
    value0 = mlp_res_ref(kq, ut["mlp_v"]).astype(jnp.bfloat16)      # stored bf16
    identity = value0.reshape(B, N, out_dim)

    key_d = (_rdot(feat, ut["wk"]) + ut["bk"]).astype(jnp.bfloat16).reshape(B, N, dim)
    query_d = (_rdot(feat, ut["wq"]) + ut["bq"]).astype(jnp.bfloat16).reshape(B, N, dim)
    value_d = (_rdot(value0, ut["wv"]) + ut["bv"]).astype(jnp.bfloat16).reshape(B, N, dim)

    idx = knn_idx(partial_xyz, k)
    key_grp = group(key_d, idx)
    qk_rel = (query_d[:, :, None, :].astype(jnp.float32)
              - key_grp.astype(jnp.float32))
    pos_rel = partial_xyz[:, :, None, :] - group(partial_xyz, idx)

    pe = jnp.maximum(_rdot(pos_rel.reshape(-1, 3), ut["wp1"]) + ut["bp1"], 0.0)
    pe = _rdot(pe, ut["wp2"]) + ut["bp2"]
    pos_emb = pe.reshape(B, N, k, dim)

    attn_in = (qk_rel + pos_emb).reshape(B * N, k, dim)
    val_grp = (group(value_d, idx).astype(jnp.float32)
               + pos_emb).reshape(B * N, k, dim)

    h = jnp.maximum(_rdot(attn_in.reshape(-1, dim), ut["wa1"]) + ut["ba1"], 0.0)
    outs = []
    for r in range(up):                              # ConvTranspose2d((up,1),(up,1))
        a = (_rdot(h, ut["wtf"][:, r * dim:(r + 1) * dim])
             + ut["btf"][r * dim:(r + 1) * dim]).reshape(B * N, k, dim)
        outs.append(jnp.sum(a * val_grp, axis=1))    # reduction over k neighbours
    agg = jnp.stack(outs, axis=1)                    # [B*N, up, dim]
    y = _rdot(agg.reshape(-1, dim), ut["wend"]) + ut["bend"]
    features = (y.reshape(B, N * up, out_dim)
                + jnp.repeat(identity.astype(jnp.float32), up, axis=1))
    features = features.astype(jnp.bfloat16)         # stored bf16 (same as Pallas)

    Cg = global_feature.shape[-1]
    gexp = jnp.broadcast_to(global_feature, (B, N * up, Cg))
    m1, m3 = params["mlp1"], params["mlp3"]
    m1f = dict(w1=jnp.concatenate([m1["w1t"], m1["w1b"]], 0), b1=m1["b1"],
               w2=m1["w2"], b2=m1["b2"],
               ws=jnp.concatenate([m1["wst"], m1["wsb"]], 0), bs=m1["bs"])
    m3f = dict(w1=jnp.concatenate([m3["w1t"], m3["w1b"]], 0), b1=m3["b1"],
               w2=m3["w2"], b2=m3["b2"],
               ws=jnp.concatenate([m3["wst"], m3["wsb"]], 0), bs=m3["bs"])
    x1 = jnp.concatenate([features.astype(jnp.float32), gexp], -1).reshape(B * N * up, -1)
    f = mlp_res_ref(x1, m1f)
    f = mlp_res_ref(f, params["mlp2"])
    x3 = jnp.concatenate([f.reshape(B, N * up, out_dim), gexp], -1).reshape(B * N * up, -1)
    sf = mlp_res_ref(x3, m3f)
    hh = jnp.maximum(_rdot(sf, params["mlp4"]["w1"]) + params["mlp4"]["b1"], 0.0)
    xyz = _rdot(hh, params["mlp4"]["w2"]) + params["mlp4"]["b2"]
    if use_tanh:
        xyz = jnp.tanh(xyz)
    return xyz.reshape(B, N * up, 3), sf.reshape(B, N * up, out_dim), None


# ---------------------------------------------------------------------------
# Parameter init (deterministic, synthetic; BN folded, 2-D weights -> bf16)
# ---------------------------------------------------------------------------

def init_params(key, in_dim, out_dim, hidden_dim, global_dim, up):
    dim = hidden_dim
    pos_h = 64
    attn_h = 4 * dim
    bn = 1.0 / math.sqrt(1.0 + 1e-5)                 # eval-mode BatchNorm folded
    keys = iter(jax.random.split(key, 64))

    def w(shape, scale=0.1):
        return scale * jax.random.normal(next(keys), shape, jnp.float32)

    def lin(i, o):
        return w((i, o)), w((o,))

    def mlp_res(i, h, o):
        w1, b1 = lin(i, h); w2, b2 = lin(h, o); ws, bs = lin(i, o)
        return dict(w1=w1, b1=b1, w2=w2, b2=b2, ws=ws, bs=bs)

    def mlp_res_split(cin, cg, h, o):                # input is concat([x, g])
        w1, b1 = lin(cin + cg, h); w2, b2 = lin(h, o); ws, bs = lin(cin + cg, o)
        return dict(w1t=w1[:cin], w1b=w1[cin:], b1=b1, w2=w2, b2=b2,
                    wst=ws[:cin], wsb=ws[cin:], bs=bs)

    wk, bk = lin(in_dim, dim)
    wq, bq = lin(in_dim, dim)
    wv, bv = lin(out_dim, dim)
    wp1, bp1 = lin(3, pos_h)
    wp2, bp2 = lin(pos_h, dim)
    wa1, ba1 = lin(dim, attn_h)
    wtf = w((attn_h, up * dim))                      # ConvTranspose weights, lane-fused
    bt = w((dim,))
    wend, bend = lin(dim, out_dim)

    ut = dict(mlp_v=mlp_res(2 * in_dim, in_dim, out_dim),
              wk=wk, bk=bk, wq=wq, bq=bq, wv=wv, bv=bv,
              wp1=wp1 * bn, bp1=bp1 * bn, wp2=wp2, bp2=bp2,   # BN folded
              wa1=wa1 * bn, ba1=ba1 * bn,                     # BN folded
              wtf=wtf, btf=jnp.tile(bt, up),
              wend=wend, bend=bend)
    params = dict(
        ut=ut,
        mlp1=mlp_res_split(out_dim, global_dim, out_dim, out_dim),
        mlp2=mlp_res(out_dim, hidden_dim, out_dim),
        mlp3=mlp_res_split(out_dim, global_dim, out_dim, out_dim),
        mlp4=dict(zip(("w1", "b1", "w2", "b2"),
                      lin(out_dim, hidden_dim) + lin(hidden_dim, 3))),
    )
    # weights (2-D) -> bf16 for the MXU; biases (1-D) stay f32
    return jax.tree_util.tree_map(
        lambda a: a.astype(jnp.bfloat16) if a.ndim == 2 else a, params)


# ---------------------------------------------------------------------------
if __name__ == "__main__":
    B, N = 2, 16
    in_dim, out_dim, hidden_dim, global_dim = 16, 32, 16, 32
    k, up = 8, 2

    key = jax.random.PRNGKey(0)
    kx, kf, kg, kp = jax.random.split(key, 4)
    partial_xyz = jax.random.normal(kx, (B, N, 3), jnp.float32)
    partial_features = jax.random.normal(kf, (B, N, in_dim), jnp.float32)
    global_feature = jax.random.normal(kg, (B, 1, global_dim), jnp.float32)
    params = init_params(kp, in_dim, out_dim, hidden_dim, global_dim, up)

    fwd = jax.jit(functools.partial(pallas_forward, k=k, up=up, use_tanh=True))
    seed_xyz, seed_feat, _ = fwd(params, partial_xyz, partial_features,
                                 global_feature)
    jax.block_until_ready((seed_xyz, seed_feat))

    ref_xyz, ref_feat, _ = reference_forward(
        params, partial_xyz, partial_features, global_feature,
        k=k, up=up, use_tanh=True)

    assert seed_xyz.shape == (B, N * up, 3)
    assert seed_feat.shape == (B, N * up, out_dim)
    assert jnp.allclose(seed_xyz, ref_xyz, atol=5e-2, rtol=5e-2)
    assert jnp.allclose(seed_feat, ref_feat, atol=5e-2, rtol=5e-2)
    print("KERNEL_OK")
</pallas_src>

<mosaic_0001>
module attributes {stable_mosaic.version = 11 : i64} {
  func.func @_preproj_kernel(%arg0: i32, %arg1: memref<32x16xf32, #tpu.memory_space<vmem>>, %arg2: memref<16x16xbf16, #tpu.memory_space<vmem>>, %arg3: memref<1x16xf32, #tpu.memory_space<vmem>>, %arg4: memref<16x32xbf16, #tpu.memory_space<vmem>>, %arg5: memref<1x32xf32, #tpu.memory_space<vmem>>, %arg6: memref<16x32xbf16, #tpu.memory_space<vmem>>, %arg7: memref<1x32xf32, #tpu.memory_space<vmem>>, %arg8: memref<16x16xbf16, #tpu.memory_space<vmem>>, %arg9: memref<1x16xf32, #tpu.memory_space<vmem>>, %arg10: memref<16x16xbf16, #tpu.memory_space<vmem>>, %arg11: memref<1x16xf32, #tpu.memory_space<vmem>>, %arg12: memref<32x16xbf16, #tpu.memory_space<vmem>>, %arg13: memref<1x16xf32, #tpu.memory_space<vmem>>, %arg14: memref<32x32xbf16, #tpu.memory_space<vmem>>, %arg15: memref<32x16xbf16, #tpu.memory_space<vmem>>, %arg16: memref<32x16xbf16, #tpu.memory_space<vmem>>, %arg17: memref<32x16xbf16, #tpu.memory_space<vmem>>) attributes {dimension_semantics = [#tpu.dimension_semantics<parallel>], iteration_bounds = array<i64: 1>, scalar_prefetch = 0 : i64, scratch_operands = 0 : i64, tpu.core_type = #tpu.core_type<tc>, window_params = [{transform_indices = @transform_0, window_bounds = array<i64: 32, 16>}, {pipeline_mode = #tpu.pipeline_mode<synchronous>, transform_indices = @transform_1, window_bounds = array<i64: 16, 16>}, {pipeline_mode = #tpu.pipeline_mode<synchronous>, transform_indices = @transform_2, window_bounds = array<i64: 1, 16>}, {pipeline_mode = #tpu.pipeline_mode<synchronous>, transform_indices = @transform_3, window_bounds = array<i64: 16, 32>}, {pipeline_mode = #tpu.pipeline_mode<synchronous>, transform_indices = @transform_4, window_bounds = array<i64: 1, 32>}, {pipeline_mode = #tpu.pipeline_mode<synchronous>, transform_indices = @transform_5, window_bounds = array<i64: 16, 32>}, {pipeline_mode = #tpu.pipeline_mode<synchronous>, transform_indices = @transform_6, window_bounds = array<i64: 1, 32>}, {pipeline_mode = #tpu.pipeline_mode<synchronous>, transform_indices = @transform_7, window_bounds = array<i64: 16, 16>}, {pipeline_mode = #tpu.pipeline_mode<synchronous>, transform_indices = @transform_8, window_bounds = array<i64: 1, 16>}, {pipeline_mode = #tpu.pipeline_mode<synchronous>, transform_indices = @transform_9, window_bounds = array<i64: 16, 16>}, {pipeline_mode = #tpu.pipeline_mode<synchronous>, transform_indices = @transform_10, window_bounds = array<i64: 1, 16>}, {pipeline_mode = #tpu.pipeline_mode<synchronous>, transform_indices = @transform_11, window_bounds = array<i64: 32, 16>}, {pipeline_mode = #tpu.pipeline_mode<synchronous>, transform_indices = @transform_12, window_bounds = array<i64: 1, 16>}, {transform_indices = @transform_13, window_bounds = array<i64: 32, 32>}, {transform_indices = @transform_14, window_bounds = array<i64: 32, 16>}, {transform_indices = @transform_15, window_bounds = array<i64: 32, 16>}, {transform_indices = @transform_16, window_bounds = array<i64: 32, 16>}]} {
    %c0 = arith.constant 0 : index
    %c0_0 = arith.constant 0 : index
    %0 = vector.load %arg1[%c0, %c0_0] : memref<32x16xf32, #tpu.memory_space<vmem>>, vector<32x16xf32>
    %1 = arith.truncf %0 : vector<32x16xf32> to vector<32x16xbf16>
    %c0_1 = arith.constant 0 : index
    %c0_2 = arith.constant 0 : index
    %2 = vector.load %arg2[%c0_1, %c0_2] : memref<16x16xbf16, #tpu.memory_space<vmem>>, vector<16x16xbf16>
    %cst = arith.constant dense<0.000000e+00> : vector<32x16xf32>
    %3 = tpu.matmul %1, %2, %cst {dimension_numbers = #tpu.dot_dimension_numbers<[1], [0], [0], [1], [0, 0, 1, 1], [], []>} : vector<32x16xbf16>, vector<16x16xbf16>, vector<32x16xf32> -> vector<32x16xf32>
    %c0_3 = arith.constant 0 : index
    %c0_4 = arith.constant 0 : index
    %4 = vector.load %arg3[%c0_3, %c0_4] : memref<1x16xf32, #tpu.memory_space<vmem>>, vector<1x16xf32>
    %5 = vector.broadcast %4 : vector<1x16xf32> to vector<32x16xf32>
    %6 = arith.addf %3, %5 : vector<32x16xf32>
    %cst_5 = arith.constant 0.000000e+00 : f32
    %7 = vector.broadcast %cst_5 : f32 to vector<32x16xf32>
    %8 = arith.maximumf %6, %7 : vector<32x16xf32>
    %c0_6 = arith.constant 0 : index
    %c0_7 = arith.constant 0 : index
    %9 = vector.load %arg4[%c0_6, %c0_7] : memref<16x32xbf16, #tpu.memory_space<vmem>>, vector<16x32xbf16>
    %10 = arith.truncf %8 : vector<32x16xf32> to vector<32x16xbf16>
    %cst_8 = arith.constant dense<0.000000e+00> : vector<32x32xf32>
    %11 = tpu.matmul %10, %9, %cst_8 {dimension_numbers = #tpu.dot_dimension_numbers<[1], [0], [0], [1], [0, 0, 1, 1], [], []>} : vector<32x16xbf16>, vector<16x32xbf16>, vector<32x32xf32> -> vector<32x32xf32>
    %c0_9 = arith.constant 0 : index
    %c0_10 = arith.constant 0 : index
    %12 = vector.load %arg5[%c0_9, %c0_10] : memref<1x32xf32, #tpu.memory_space<vmem>>, vector<1x32xf32>
    %13 = vector.broadcast %12 : vector<1x32xf32> to vector<32x32xf32>
    %14 = arith.addf %11, %13 : vector<32x32xf32>
    %c0_11 = arith.constant 0 : index
    %c0_12 = arith.constant 0 : index
    %15 = vector.load %arg6[%c0_11, %c0_12] : memref<16x32xbf16, #tpu.memory_space<vmem>>, vector<16x32xbf16>
    %cst_13 = arith.constant dense<0.000000e+00> : vector<32x32xf32>
    %16 = tpu.matmul %1, %15, %cst_13 {dimension_numbers = #tpu.dot_dimension_numbers<[1], [0], [0], [1], [0, 0, 1, 1], [], []>} : vector<32x16xbf16>, vector<16x32xbf16>, vector<32x32xf32> -> vector<32x32xf32>
    %17 = arith.addf %14, %16 : vector<32x32xf32>
    %c0_14 = arith.constant 0 : index
    %c0_15 = arith.constant 0 : index
    %18 = vector.load %arg7[%c0_14, %c0_15] : memref<1x32xf32, #tpu.memory_space<vmem>>, vector<1x32xf32>
    %19 = vector.broadcast %18 : vector<1x32xf32> to vector<32x32xf32>
    %20 = arith.addf %17, %19 : vector<32x32xf32>
    %21 = arith.truncf %20 : vector<32x32xf32> to vector<32x32xbf16>
    %c0_16 = arith.constant 0 : index
    %c0_17 = arith.constant 0 : index
    %22 = vector.load %arg14[%c0_16, %c0_17] : memref<32x32xbf16, #tpu.memory_space<vmem>>, vector<32x32xbf16>
    tpu.vector_store %arg14[%c0_16, %c0_17], %21 {strides = array<i32>} : memref<32x32xbf16, #tpu.memory_space<vmem>>, vector<32x32xbf16>,
    %c0_18 = arith.constant 0 : index
    %c0_19 = arith.constant 0 : index
    %23 = vector.load %arg8[%c0_18, %c0_19] : memref<16x16xbf16, #tpu.memory_space<vmem>>, vector<16x16xbf16>
    %cst_20 = arith.constant dense<0.000000e+00> : vector<32x16xf32>
    %24 = tpu.matmul %1, %23, %cst_20 {dimension_numbers = #tpu.dot_dimension_numbers<[1], [0], [0], [1], [0, 0, 1, 1], [], []>} : vector<32x16xbf16>, vector<16x16xbf16>, vector<32x16xf32> -> vector<32x16xf32>
    %c0_21 = arith.constant 0 : index
    %c0_22 = arith.constant 0 : index
    %25 = vector.load %arg9[%c0_21, %c0_22] : memref<1x16xf32, #tpu.memory_space<vmem>>, vector<1x16xf32>
    %26 = vector.broadcast %25 : vector<1x16xf32> to vector<32x16xf32>
    %27 = arith.addf %24, %26 : vector<32x16xf32>
    %28 = arith.truncf %27 : vector<32x16xf32> to vector<32x16xbf16>
    %c0_23 = arith.constant 0 : index
    %c0_24 = arith.constant 0 : index
    %29 = vector.load %arg15[%c0_23, %c0_24] : memref<32x16xbf16, #tpu.memory_space<vmem>>, vector<32x16xbf16>
    tpu.vector_store %arg15[%c0_23, %c0_24], %28 {strides = array<i32>} : memref<32x16xbf16, #tpu.memory_space<vmem>>, vector<32x16xbf16>,
    %c0_25 = arith.constant 0 : index
    %c0_26 = arith.constant 0 : index
    %30 = vector.load %arg10[%c0_25, %c0_26] : memref<16x16xbf16, #tpu.memory_space<vmem>>, vector<16x16xbf16>
    %cst_27 = arith.constant dense<0.000000e+00> : vector<32x16xf32>
    %31 = tpu.matmul %1, %30, %cst_27 {dimension_numbers = #tpu.dot_dimension_numbers<[1], [0], [0], [1], [0, 0, 1, 1], [], []>} : vector<32x16xbf16>, vector<16x16xbf16>, vector<32x16xf32> -> vector<32x16xf32>
    %c0_28 = arith.constant 0 : index
    %c0_29 = arith.constant 0 : index
    %32 = vector.load %arg11[%c0_28, %c0_29] : memref<1x16xf32, #tpu.memory_space<vmem>>, vector<1x16xf32>
    %33 = vector.broadcast %32 : vector<1x16xf32> to vector<32x16xf32>
    %34 = arith.addf %31, %33 : vector<32x16xf32>
    %35 = arith.truncf %34 : vector<32x16xf32> to vector<32x16xbf16>
    %c0_30 = arith.constant 0 : index
    %c0_31 = arith.constant 0 : index
    %36 = vector.load %arg16[%c0_30, %c0_31] : memref<32x16xbf16, #tpu.memory_space<vmem>>, vector<32x16xbf16>
    tpu.vector_store %arg16[%c0_30, %c0_31], %35 {strides = array<i32>} : memref<32x16xbf16, #tpu.memory_space<vmem>>, vector<32x16xbf16>,
    %c0_32 = arith.constant 0 : index
    %c0_33 = arith.constant 0 : index
    %37 = vector.load %arg12[%c0_32, %c0_33] : memref<32x16xbf16, #tpu.memory_space<vmem>>, vector<32x16xbf16>
    %38 = arith.truncf %20 : vector<32x32xf32> to vector<32x32xbf16>
    %cst_34 = arith.constant dense<0.000000e+00> : vector<32x16xf32>
    %39 = tpu.matmul %38, %37, %cst_34 {dimension_numbers = #tpu.dot_dimension_numbers<[1], [0], [0], [1], [0, 0, 1, 1], [], []>} : vector<32x32xbf16>, vector<32x16xbf16>, vector<32x16xf32> -> vector<32x16xf32>
    %c0_35 = arith.constant 0 : index
    %c0_36 = arith.constant 0 : index
    %40 = vector.load %arg13[%c0_35, %c0_36] : memref<1x16xf32, #tpu.memory_space<vmem>>, vector<1x16xf32>
    %41 = vector.broadcast %40 : vector<1x16xf32> to vector<32x16xf32>
    %42 = arith.addf %39, %41 : vector<32x16xf32>
    %43 = arith.truncf %42 : vector<32x16xf32> to vector<32x16xbf16>
    %c0_37 = arith.constant 0 : index
    %c0_38 = arith.constant 0 : index
    %44 = vector.load %arg17[%c0_37, %c0_38] : memref<32x16xbf16, #tpu.memory_space<vmem>>, vector<32x16xbf16>
    tpu.vector_store %arg17[%c0_37, %c0_38], %43 {strides = array<i32>} : memref<32x16xbf16, #tpu.memory_space<vmem>>, vector<32x16xbf16>,
    return
  }
  func.func @transform_0(%arg0: i32) -> (i32, i32) {
    %c0_i32 = arith.constant 0 : i32
    %c0_i32_0 = arith.constant 0 : i32
    return %arg0, %c0_i32 : i32, i32
  }
  func.func @transform_1(%arg0: i32) -> (i32, i32) {
    %c0_i32 = arith.constant 0 : i32
    %c0_i32_0 = arith.constant 0 : i32
    %c0_i32_1 = arith.constant 0 : i32
    return %c0_i32, %c0_i32_0 : i32, i32
  }
  func.func @transform_2(%arg0: i32) -> (i32, i32) {
    %c0_i32 = arith.constant 0 : i32
    %c0_i32_0 = arith.constant 0 : i32
    %c0_i32_1 = arith.constant 0 : i32
    return %c0_i32, %c0_i32_0 : i32, i32
  }
  func.func @transform_3(%arg0: i32) -> (i32, i32) {
    %c0_i32 = arith.constant 0 : i32
    %c0_i32_0 = arith.constant 0 : i32
    %c0_i32_1 = arith.constant 0 : i32
    return %c0_i32, %c0_i32_0 : i32, i32
  }
  func.func @transform_4(%arg0: i32) -> (i32, i32) {
    %c0_i32 = arith.constant 0 : i32
    %c0_i32_0 = arith.constant 0 : i32
    %c0_i32_1 = arith.constant 0 : i32
    return %c0_i32, %c0_i32_0 : i32, i32
  }
  func.func @transform_5(%arg0: i32) -> (i32, i32) {
    %c0_i32 = arith.constant 0 : i32
    %c0_i32_0 = arith.constant 0 : i32
    %c0_i32_1 = arith.constant 0 : i32
    return %c0_i32, %c0_i32_0 : i32, i32
  }
  func.func @transform_6(%arg0: i32) -> (i32, i32) {
    %c0_i32 = arith.constant 0 : i32
    %c0_i32_0 = arith.constant 0 : i32
    %c0_i32_1 = arith.constant 0 : i32
    return %c0_i32, %c0_i32_0 : i32, i32
  }
  func.func @transform_7(%arg0: i32) -> (i32, i32) {
    %c0_i32 = arith.constant 0 : i32
    %c0_i32_0 = arith.constant 0 : i32
    %c0_i32_1 = arith.constant 0 : i32
    return %c0_i32, %c0_i32_0 : i32, i32
  }
  func.func @transform_8(%arg0: i32) -> (i32, i32) {
    %c0_i32 = arith.constant 0 : i32
    %c0_i32_0 = arith.constant 0 : i32
    %c0_i32_1 = arith.constant 0 : i32
    return %c0_i32, %c0_i32_0 : i32, i32
  }
  func.func @transform_9(%arg0: i32) -> (i32, i32) {
    %c0_i32 = arith.constant 0 : i32
    %c0_i32_0 = arith.constant 0 : i32
    %c0_i32_1 = arith.constant 0 : i32
    return %c0_i32, %c0_i32_0 : i32, i32
  }
  func.func @transform_10(%arg0: i32) -> (i32, i32) {
    %c0_i32 = arith.constant 0 : i32
    %c0_i32_0 = arith.constant 0 : i32
    %c0_i32_1 = arith.constant 0 : i32
    return %c0_i32, %c0_i32_0 : i32, i32
  }
  func.func @transform_11(%arg0: i32) -> (i32, i32) {
    %c0_i32 = arith.constant 0 : i32
    %c0_i32_0 = arith.constant 0 : i32
    %c0_i32_1 = arith.constant 0 : i32
    return %c0_i32, %c0_i32_0 : i32, i32
  }
  func.func @transform_12(%arg0: i32) -> (i32, i32) {
    %c0_i32 = arith.constant 0 : i32
    %c0_i32_0 = arith.constant 0 : i32
    %c0_i32_1 = arith.constant 0 : i32
    return %c0_i32, %c0_i32_0 : i32, i32
  }
  func.func @transform_13(%arg0: i32) -> (i32, i32) {
    %c0_i32 = arith.constant 0 : i32
    %c0_i32_0 = arith.constant 0 : i32
    return %arg0, %c0_i32 : i32, i32
  }
  func.func @transform_14(%arg0: i32) -> (i32, i32) {
    %c0_i32 = arith.constant 0 : i32
    %c0_i32_0 = arith.constant 0 : i32
    return %arg0, %c0_i32 : i32, i32
  }
  func.func @transform_15(%arg0: i32) -> (i32, i32) {
    %c0_i32 = arith.constant 0 : i32
    %c0_i32_0 = arith.constant 0 : i32
    return %arg0, %c0_i32 : i32, i32
  }
  func.func @transform_16(%arg0: i32) -> (i32, i32) {
    %c0_i32 = arith.constant 0 : i32
    %c0_i32_0 = arith.constant 0 : i32
    return %arg0, %c0_i32 : i32, i32
  }
}

module attributes {stable_mosaic.version = 11 : i64} {
  func.func @_attn_fused_kernel(%arg0: i32, %arg1: memref<32x16xbf16, #tpu.memory_space<vmem>>, %arg2: memref<32x8x16xbf16, #tpu.memory_space<vmem>>, %arg3: memref<32x8x16xbf16, #tpu.memory_space<vmem>>, %arg4: memref<32x8x3xf32, #tpu.memory_space<vmem>>, %arg5: memref<32x32xbf16, #tpu.memory_space<vmem>>, %arg6: memref<3x64xbf16, #tpu.memory_space<vmem>>, %arg7: memref<1x64xf32, #tpu.memory_space<vmem>>, %arg8: memref<64x16xbf16, #tpu.memory_space<vmem>>, %arg9: memref<1x16xf32, #tpu.memory_space<vmem>>, %arg10: memref<16x64xbf16, #tpu.memory_space<vmem>>, %arg11: memref<1x64xf32, #tpu.memory_space<vmem>>, %arg12: memref<64x32xbf16, #tpu.memory_space<vmem>>, %arg13: memref<1x32xf32, #tpu.memory_space<vmem>>, %arg14: memref<32x64xbf16, #tpu.memory_space<vmem>>, %arg15: memref<1x64xf32, #tpu.memory_space<vmem>>, %arg16: memref<32x64xbf16, #tpu.memory_space<vmem>>) attributes {dimension_semantics = [#tpu.dimension_semantics<parallel>], iteration_bounds = array<i64: 1>, scalar_prefetch = 0 : i64, scratch_operands = 0 : i64, tpu.core_type = #tpu.core_type<tc>, window_params = [{transform_indices = @transform_0, window_bounds = array<i64: 32, 16>}, {transform_indices = @transform_1, window_bounds = array<i64: 32, 8, 16>}, {transform_indices = @transform_2, window_bounds = array<i64: 32, 8, 16>}, {transform_indices = @transform_3, window_bounds = array<i64: 32, 8, 3>}, {transform_indices = @transform_4, window_bounds = array<i64: 32, 32>}, {pipeline_mode = #tpu.pipeline_mode<synchronous>, transform_indices = @transform_5, window_bounds = array<i64: 3, 64>}, {pipeline_mode = #tpu.pipeline_mode<synchronous>, transform_indices = @transform_6, window_bounds = array<i64: 1, 64>}, {pipeline_mode = #tpu.pipeline_mode<synchronous>, transform_indices = @transform_7, window_bounds = array<i64: 64, 16>}, {pipeline_mode = #tpu.pipeline_mode<synchronous>, transform_indices = @transform_8, window_bounds = array<i64: 1, 16>}, {pipeline_mode = #tpu.pipeline_mode<synchronous>, transform_indices = @transform_9, window_bounds = array<i64: 16, 64>}, {pipeline_mode = #tpu.pipeline_mode<synchronous>, transform_indices = @transform_10, window_bounds = array<i64: 1, 64>}, {pipeline_mode = #tpu.pipeline_mode<synchronous>, transform_indices = @transform_11, window_bounds = array<i64: 64, 32>}, {pipeline_mode = #tpu.pipeline_mode<synchronous>, transform_indices = @transform_12, window_bounds = array<i64: 1, 32>}, {pipeline_mode = #tpu.pipeline_mode<synchronous>, transform_indices = @transform_13, window_bounds = array<i64: 32, 64>}, {pipeline_mode = #tpu.pipeline_mode<synchronous>, transform_indices = @transform_14, window_bounds = array<i64: 1, 64>}, {transform_indices = @transform_15, window_bounds = array<i64: 32, 64>}]} {
    %c0 = arith.constant 0 : index
    %c0_0 = arith.constant 0 : index
    %c0_1 = arith.constant 0 : index
    %0 = vector.load %arg4[%c0, %c0_0, %c0_1] : memref<32x8x3xf32, #tpu.memory_space<vmem>>, vector<32x8x3xf32>
    %1 = vector.shape_cast %0 : vector<32x8x3xf32> to vector<256x3xf32>
    %2 = arith.truncf %1 : vector<256x3xf32> to vector<256x3xbf16>
    %3 = arith.extf %2 : vector<256x3xbf16> to vector<256x3xf32>
    %c0_2 = arith.constant 0 : index
    %c0_3 = arith.constant 0 : index
    %4 = vector.load %arg6[%c0_2, %c0_3] : memref<3x64xbf16, #tpu.memory_space<vmem>>, vector<3x64xbf16>
    %5 = arith.extf %4 : vector<3x64xbf16> to vector<3x64xf32>
    %c0_4 = arith.constant 0 : index
    %c0_5 = arith.constant 0 : index
    %6 = vector.load %arg7[%c0_4, %c0_5] : memref<1x64xf32, #tpu.memory_space<vmem>>, vector<1x64xf32>
    %7 = vector.extract_strided_slice %3 {offsets = [0, 0], sizes = [256, 1], strides = [1, 1]} : vector<256x3xf32> to vector<256x1xf32>
    %8 = vector.extract_strided_slice %5 {offsets = [0, 0], sizes = [1, 64], strides = [1, 1]} : vector<3x64xf32> to vector<1x64xf32>
    %9 = vector.broadcast %7 : vector<256x1xf32> to vector<256x64xf32>
    %10 = vector.broadcast %8 : vector<1x64xf32> to vector<256x64xf32>
    %11 = arith.mulf %9, %10 : vector<256x64xf32>
    %12 = vector.broadcast %6 : vector<1x64xf32> to vector<256x64xf32>
    %13 = arith.addf %12, %11 : vector<256x64xf32>
    %14 = vector.extract_strided_slice %3 {offsets = [0, 1], sizes = [256, 1], strides = [1, 1]} : vector<256x3xf32> to vector<256x1xf32>
    %15 = vector.extract_strided_slice %5 {offsets = [1, 0], sizes = [1, 64], strides = [1, 1]} : vector<3x64xf32> to vector<1x64xf32>
    %16 = vector.broadcast %14 : vector<256x1xf32> to vector<256x64xf32>
    %17 = vector.broadcast %15 : vector<1x64xf32> to vector<256x64xf32>
    %18 = arith.mulf %16, %17 : vector<256x64xf32>
    %19 = arith.addf %13, %18 : vector<256x64xf32>
    %20 = vector.extract_strided_slice %3 {offsets = [0, 2], sizes = [256, 1], strides = [1, 1]} : vector<256x3xf32> to vector<256x1xf32>
    %21 = vector.extract_strided_slice %5 {offsets = [2, 0], sizes = [1, 64], strides = [1, 1]} : vector<3x64xf32> to vector<1x64xf32>
    %22 = vector.broadcast %20 : vector<256x1xf32> to vector<256x64xf32>
    %23 = vector.broadcast %21 : vector<1x64xf32> to vector<256x64xf32>
    %24 = arith.mulf %22, %23 : vector<256x64xf32>
    %25 = arith.addf %19, %24 : vector<256x64xf32>
    %cst = arith.constant 0.000000e+00 : f32
    %26 = vector.broadcast %cst : f32 to vector<256x64xf32>
    %27 = arith.maximumf %25, %26 : vector<256x64xf32>
    %c0_6 = arith.constant 0 : index
    %c0_7 = arith.constant 0 : index
    %28 = vector.load %arg8[%c0_6, %c0_7] : memref<64x16xbf16, #tpu.memory_space<vmem>>, vector<64x16xbf16>
    %29 = arith.truncf %27 : vector<256x64xf32> to vector<256x64xbf16>
    %cst_8 = arith.constant dense<0.000000e+00> : vector<256x16xf32>
    %30 = tpu.matmul %29, %28, %cst_8 {dimension_numbers = #tpu.dot_dimension_numbers<[1], [0], [0], [1], [0, 0, 1, 1], [], []>} : vector<256x64xbf16>, vector<64x16xbf16>, vector<256x16xf32> -> vector<256x16xf32>
    %c0_9 = arith.constant 0 : index
    %c0_10 = arith.constant 0 : index
    %31 = vector.load %arg9[%c0_9, %c0_10] : memref<1x16xf32, #tpu.memory_space<vmem>>, vector<1x16xf32>
    %32 = vector.broadcast %31 : vector<1x16xf32> to vector<256x16xf32>
    %33 = arith.addf %30, %32 : vector<256x16xf32>
    %c0_11 = arith.constant 0 : index
    %c0_12 = arith.constant 0 : index
    %34 = vector.load %arg1[%c0_11, %c0_12] : memref<32x16xbf16, #tpu.memory_space<vmem>>, vector<32x16xbf16>
    %35 = arith.extf %34 : vector<32x16xbf16> to vector<32x16xf32>
    %c0_13 = arith.constant 0 : index
    %c0_14 = arith.constant 0 : index
    %c0_15 = arith.constant 0 : index
    %36 = vector.load %arg2[%c0_13, %c0_14, %c0_15] : memref<32x8x16xbf16, #tpu.memory_space<vmem>>, vector<32x8x16xbf16>
    %37 = arith.extf %36 : vector<32x8x16xbf16> to vector<32x8x16xf32>
    %c0_16 = arith.constant 0 : index
    %c0_17 = arith.constant 0 : index
    %c0_18 = arith.constant 0 : index
    %38 = vector.load %arg3[%c0_16, %c0_17, %c0_18] : memref<32x8x16xbf16, #tpu.memory_space<vmem>>, vector<32x8x16xbf16>
    %39 = arith.extf %38 : vector<32x8x16xbf16> to vector<32x8x16xf32>
    %40 = vector.shape_cast %33 : vector<256x16xf32> to vector<32x8x16xf32>
    %41 = vector.shape_cast %35 : vector<32x16xf32> to vector<32x1x16xf32>
    %42 = vector.broadcast %41 : vector<32x1x16xf32> to vector<32x8x16xf32>
    %43 = arith.subf %42, %37 : vector<32x8x16xf32>
    %44 = arith.addf %43, %40 : vector<32x8x16xf32>
    %45 = arith.addf %39, %40 : vector<32x8x16xf32>
    %46 = vector.shape_cast %45 : vector<32x8x16xf32> to vector<256x16xf32>
    %47 = vector.shape_cast %44 : vector<32x8x16xf32> to vector<256x16xf32>
    %c0_19 = arith.constant 0 : index
    %c0_20 = arith.constant 0 : index
    %48 = vector.load %arg10[%c0_19, %c0_20] : memref<16x64xbf16, #tpu.memory_space<vmem>>, vector<16x64xbf16>
    %49 = arith.truncf %47 : vector<256x16xf32> to vector<256x16xbf16>
    %cst_21 = arith.constant dense<0.000000e+00> : vector<256x64xf32>
    %50 = tpu.matmul %49, %48, %cst_21 {dimension_numbers = #tpu.dot_dimension_numbers<[1], [0], [0], [1], [0, 0, 1, 1], [], []>} : vector<256x16xbf16>, vector<16x64xbf16>, vector<256x64xf32> -> vector<256x64xf32>
    %c0_22 = arith.constant 0 : index
    %c0_23 = arith.constant 0 : index
    %51 = vector.load %arg11[%c0_22, %c0_23] : memref<1x64xf32, #tpu.memory_space<vmem>>, vector<1x64xf32>
    %52 = vector.broadcast %51 : vector<1x64xf32> to vector<256x64xf32>
    %53 = arith.addf %50, %52 : vector<256x64xf32>
    %cst_24 = arith.constant 0.000000e+00 : f32
    %54 = vector.broadcast %cst_24 : f32 to vector<256x64xf32>
    %55 = arith.maximumf %53, %54 : vector<256x64xf32>
    %c0_25 = arith.constant 0 : index
    %c0_26 = arith.constant 0 : index
    %56 = vector.load %arg12[%c0_25, %c0_26] : memref<64x32xbf16, #tpu.memory_space<vmem>>, vector<64x32xbf16>
    %57 = arith.truncf %55 : vector<256x64xf32> to vector<256x64xbf16>
    %cst_27 = arith.constant dense<0.000000e+00> : vector<256x32xf32>
    %58 = tpu.matmul %57, %56, %cst_27 {dimension_numbers = #tpu.dot_dimension_numbers<[1], [0], [0], [1], [0, 0, 1, 1], [], []>} : vector<256x64xbf16>, vector<64x32xbf16>, vector<256x32xf32> -> vector<256x32xf32>
    %c0_28 = arith.constant 0 : index
    %c0_29 = arith.constant 0 : index
    %59 = vector.load %arg13[%c0_28, %c0_29] : memref<1x32xf32, #tpu.memory_space<vmem>>, vector<1x32xf32>
    %60 = vector.broadcast %59 : vector<1x32xf32> to vector<256x32xf32>
    %61 = arith.addf %58, %60 : vector<256x32xf32>
    %62 = tpu.concatenate %46, %46 in 1 : vector<256x16xf32>, vector<256x16xf32> -> vector<256x32xf32>
    %63 = arith.mulf %61, %62 : vector<256x32xf32>
    %64 = vector.shape_cast %63 : vector<256x32xf32> to vector<32x8x32xf32>
    %cst_30 = arith.constant dense<0.000000e+00> : vector<32x32xf32>
    %65 = vector.multi_reduction <add>, %64, %cst_30 [1] : vector<32x8x32xf32> to vector<32x32xf32>
    %c0_31 = arith.constant 0 : index
    %c0_32 = arith.constant 0 : index
    %66 = vector.load %arg5[%c0_31, %c0_32] : memref<32x32xbf16, #tpu.memory_space<vmem>>, vector<32x32xbf16>
    %67 = arith.extf %66 : vector<32x32xbf16> to vector<32x32xf32>
    %68 = tpu.concatenate %67, %67 in 1 : vector<32x32xf32>, vector<32x32xf32> -> vector<32x64xf32>
    %c0_33 = arith.constant 0 : index
    %c0_34 = arith.constant 0 : index
    %69 = vector.load %arg14[%c0_33, %c0_34] : memref<32x64xbf16, #tpu.memory_space<vmem>>, vector<32x64xbf16>
    %70 = arith.truncf %65 : vector<32x32xf32> to vector<32x32xbf16>
    %cst_35 = arith.constant dense<0.000000e+00> : vector<32x64xf32>
    %71 = tpu.matmul %70, %69, %cst_35 {dimension_numbers = #tpu.dot_dimension_numbers<[1], [0], [0], [1], [0, 0, 1, 1], [], []>} : vector<32x32xbf16>, vector<32x64xbf16>, vector<32x64xf32> -> vector<32x64xf32>
    %c0_36 = arith.constant 0 : index
    %c0_37 = arith.constant 0 : index
    %72 = vector.load %arg15[%c0_36, %c0_37] : memref<1x64xf32, #tpu.memory_space<vmem>>, vector<1x64xf32>
    %73 = vector.broadcast %72 : vector<1x64xf32> to vector<32x64xf32>
    %74 = arith.addf %71, %73 : vector<32x64xf32>
    %75 = arith.addf %74, %68 : vector<32x64xf32>
    %76 = arith.truncf %75 : vector<32x64xf32> to vector<32x64xbf16>
    %c0_38 = arith.constant 0 : index
    %c0_39 = arith.constant 0 : index
    %77 = vector.load %arg16[%c0_38, %c0_39] : memref<32x64xbf16, #tpu.memory_space<vmem>>, vector<32x64xbf16>
    tpu.vector_store %arg16[%c0_38, %c0_39], %76 {strides = array<i32>} : memref<32x64xbf16, #tpu.memory_space<vmem>>, vector<32x64xbf16>,
    return
  }
  func.func @transform_0(%arg0: i32) -> (i32, i32) {
    %c0_i32 = arith.constant 0 : i32
    %c0_i32_0 = arith.constant 0 : i32
    return %arg0, %c0_i32 : i32, i32
  }
  func.func @transform_1(%arg0: i32) -> (i32, i32, i32) {
    %c0_i32 = arith.constant 0 : i32
    %c0_i32_0 = arith.constant 0 : i32
    %c0_i32_1 = arith.constant 0 : i32
    return %arg0, %c0_i32, %c0_i32_0 : i32, i32, i32
  }
  func.func @transform_2(%arg0: i32) -> (i32, i32, i32) {
    %c0_i32 = arith.constant 0 : i32
    %c0_i32_0 = arith.constant 0 : i32
    %c0_i32_1 = arith.constant 0 : i32
    return %arg0, %c0_i32, %c0_i32_0 : i32, i32, i32
  }
  func.func @transform_3(%arg0: i32) -> (i32, i32, i32) {
    %c0_i32 = arith.constant 0 : i32
    %c0_i32_0 = arith.constant 0 : i32
    %c0_i32_1 = arith.constant 0 : i32
    return %arg0, %c0_i32, %c0_i32_0 : i32, i32, i32
  }
  func.func @transform_4(%arg0: i32) -> (i32, i32) {
    %c0_i32 = arith.constant 0 : i32
    %c0_i32_0 = arith.constant 0 : i32
    return %arg0, %c0_i32 : i32, i32
  }
  func.func @transform_5(%arg0: i32) -> (i32, i32) {
    %c0_i32 = arith.constant 0 : i32
    %c0_i32_0 = arith.constant 0 : i32
    %c0_i32_1 = arith.constant 0 : i32
    return %c0_i32, %c0_i32_0 : i32, i32
  }
  func.func @transform_6(%arg0: i32) -> (i32, i32) {
    %c0_i32 = arith.constant 0 : i32
    %c0_i32_0 = arith.constant 0 : i32
    %c0_i32_1 = arith.constant 0 : i32
    return %c0_i32, %c0_i32_0 : i32, i32
  }
  func.func @transform_7(%arg0: i32) -> (i32, i32) {
    %c0_i32 = arith.constant 0 : i32
    %c0_i32_0 = arith.constant 0 : i32
    %c0_i32_1 = arith.constant 0 : i32
    return %c0_i32, %c0_i32_0 : i32, i32
  }
  func.func @transform_8(%arg0: i32) -> (i32, i32) {
    %c0_i32 = arith.constant 0 : i32
    %c0_i32_0 = arith.constant 0 : i32
    %c0_i32_1 = arith.constant 0 : i32
    return %c0_i32, %c0_i32_0 : i32, i32
  }
  func.func @transform_9(%arg0: i32) -> (i32, i32) {
    %c0_i32 = arith.constant 0 : i32
    %c0_i32_0 = arith.constant 0 : i32
    %c0_i32_1 = arith.constant 0 : i32
    return %c0_i32, %c0_i32_0 : i32, i32
  }
  func.func @transform_10(%arg0: i32) -> (i32, i32) {
    %c0_i32 = arith.constant 0 : i32
    %c0_i32_0 = arith.constant 0 : i32
    %c0_i32_1 = arith.constant 0 : i32
    return %c0_i32, %c0_i32_0 : i32, i32
  }
  func.func @transform_11(%arg0: i32) -> (i32, i32) {
    %c0_i32 = arith.constant 0 : i32
    %c0_i32_0 = arith.constant 0 : i32
    %c0_i32_1 = arith.constant 0 : i32
    return %c0_i32, %c0_i32_0 : i32, i32
  }
  func.func @transform_12(%arg0: i32) -> (i32, i32) {
    %c0_i32 = arith.constant 0 : i32
    %c0_i32_0 = arith.constant 0 : i32
    %c0_i32_1 = arith.constant 0 : i32
    return %c0_i32, %c0_i32_0 : i32, i32
  }
  func.func @transform_13(%arg0: i32) -> (i32, i32) {
    %c0_i32 = arith.constant 0 : i32
    %c0_i32_0 = arith.constant 0 : i32
    %c0_i32_1 = arith.constant 0 : i32
    return %c0_i32, %c0_i32_0 : i32, i32
  }
  func.func @transform_14(%arg0: i32) -> (i32, i32) {
    %c0_i32 = arith.constant 0 : i32
    %c0_i32_0 = arith.constant 0 : i32
    %c0_i32_1 = arith.constant 0 : i32
    return %c0_i32, %c0_i32_0 : i32, i32
  }
  func.func @transform_15(%arg0: i32) -> (i32, i32) {
    %c0_i32 = arith.constant 0 : i32
    %c0_i32_0 = arith.constant 0 : i32
    return %arg0, %c0_i32 : i32, i32
  }
}

module attributes {stable_mosaic.version = 11 : i64} {
  func.func @_seed_mlp_kernel(%arg0: i32, %arg1: i32, %arg2: memref<1x32x32xbf16, #tpu.memory_space<vmem>>, %arg3: memref<1x4x32xf32, #tpu.memory_space<vmem>>, %arg4: memref<32x32xbf16, #tpu.memory_space<vmem>>, %arg5: memref<1x32xf32, #tpu.memory_space<vmem>>, %arg6: memref<32x32xbf16, #tpu.memory_space<vmem>>, %arg7: memref<1x32xf32, #tpu.memory_space<vmem>>, %arg8: memref<32x32xbf16, #tpu.memory_space<vmem>>, %arg9: memref<1x32xf32, #tpu.memory_space<vmem>>, %arg10: memref<32x16xbf16, #tpu.memory_space<vmem>>, %arg11: memref<1x16xf32, #tpu.memory_space<vmem>>, %arg12: memref<16x32xbf16, #tpu.memory_space<vmem>>, %arg13: memref<1x32xf32, #tpu.memory_space<vmem>>, %arg14: memref<32x32xbf16, #tpu.memory_space<vmem>>, %arg15: memref<1x32xf32, #tpu.memory_space<vmem>>, %arg16: memref<32x32xbf16, #tpu.memory_space<vmem>>, %arg17: memref<1x32xf32, #tpu.memory_space<vmem>>, %arg18: memref<32x32xbf16, #tpu.memory_space<vmem>>, %arg19: memref<1x32xf32, #tpu.memory_space<vmem>>, %arg20: memref<32x32xbf16, #tpu.memory_space<vmem>>, %arg21: memref<1x32xf32, #tpu.memory_space<vmem>>, %arg22: memref<32x16xbf16, #tpu.memory_space<vmem>>, %arg23: memref<1x16xf32, #tpu.memory_space<vmem>>, %arg24: memref<16x3xbf16, #tpu.memory_space<vmem>>, %arg25: memref<1x3xf32, #tpu.memory_space<vmem>>, %arg26: memref<1x32x32xf32, #tpu.memory_space<vmem>>, %arg27: memref<1x32x3xf32, #tpu.memory_space<vmem>>) attributes {dimension_semantics = [#tpu.dimension_semantics<parallel>, #tpu.dimension_semantics<parallel>], iteration_bounds = array<i64: 2, 1>, scalar_prefetch = 0 : i64, scratch_operands = 0 : i64, tpu.core_type = #tpu.core_type<tc>, window_params = [{transform_indices = @transform_0, window_bounds = array<i64: 1, 32, 32>}, {transform_indices = @transform_1, window_bounds = array<i64: 1, 4, 32>}, {pipeline_mode = #tpu.pipeline_mode<synchronous>, transform_indices = @transform_2, window_bounds = array<i64: 32, 32>}, {pipeline_mode = #tpu.pipeline_mode<synchronous>, transform_indices = @transform_3, window_bounds = array<i64: 1, 32>}, {pipeline_mode = #tpu.pipeline_mode<synchronous>, transform_indices = @transform_4, window_bounds = array<i64: 32, 32>}, {pipeline_mode = #tpu.pipeline_mode<synchronous>, transform_indices = @transform_5, window_bounds = array<i64: 1, 32>}, {pipeline_mode = #tpu.pipeline_mode<synchronous>, transform_indices = @transform_6, window_bounds = array<i64: 32, 32>}, {pipeline_mode = #tpu.pipeline_mode<synchronous>, transform_indices = @transform_7, window_bounds = array<i64: 1, 32>}, {pipeline_mode = #tpu.pipeline_mode<synchronous>, transform_indices = @transform_8, window_bounds = array<i64: 32, 16>}, {pipeline_mode = #tpu.pipeline_mode<synchronous>, transform_indices = @transform_9, window_bounds = array<i64: 1, 16>}, {pipeline_mode = #tpu.pipeline_mode<synchronous>, transform_indices = @transform_10, window_bounds = array<i64: 16, 32>}, {pipeline_mode = #tpu.pipeline_mode<synchronous>, transform_indices = @transform_11, window_bounds = array<i64: 1, 32>}, {pipeline_mode = #tpu.pipeline_mode<synchronous>, transform_indices = @transform_12, window_bounds = array<i64: 32, 32>}, {pipeline_mode = #tpu.pipeline_mode<synchronous>, transform_indices = @transform_13, window_bounds = array<i64: 1, 32>}, {pipeline_mode = #tpu.pipeline_mode<synchronous>, transform_indices = @transform_14, window_bounds = array<i64: 32, 32>}, {pipeline_mode = #tpu.pipeline_mode<synchronous>, transform_indices = @transform_15, window_bounds = array<i64: 1, 32>}, {pipeline_mode = #tpu.pipeline_mode<synchronous>, transform_indices = @transform_16, window_bounds = array<i64: 32, 32>}, {pipeline_mode = #tpu.pipeline_mode<synchronous>, transform_indices = @transform_17, window_bounds = array<i64: 1, 32>}, {pipeline_mode = #tpu.pipeline_mode<synchronous>, transform_indices = @transform_18, window_bounds = array<i64: 32, 32>}, {pipeline_mode = #tpu.pipeline_mode<synchronous>, transform_indices = @transform_19, window_bounds = array<i64: 1, 32>}, {pipeline_mode = #tpu.pipeline_mode<synchronous>, transform_indices = @transform_20, window_bounds = array<i64: 32, 16>}, {pipeline_mode = #tpu.pipeline_mode<synchronous>, transform_indices = @transform_21, window_bounds = array<i64: 1, 16>}, {pipeline_mode = #tpu.pipeline_mode<synchronous>, transform_indices = @transform_22, window_bounds = array<i64: 16, 3>}, {pipeline_mode = #tpu.pipeline_mode<synchronous>, transform_indices = @transform_23, window_bounds = array<i64: 1, 3>}, {transform_indices = @transform_24, window_bounds = array<i64: 1, 32, 32>}, {transform_indices = @transform_25, window_bounds = array<i64: 1, 32, 3>}]} {
    %c0 = arith.constant 0 : index
    %c0_0 = arith.constant 0 : index
    %c0_1 = arith.constant 0 : index
    %0 = vector.load %arg3[%c0, %c0_0, %c0_1] : memref<1x4x32xf32, #tpu.memory_space<vmem>>, vector<1x4x32xf32>
    %1 = vector.shape_cast %0 : vector<1x4x32xf32> to vector<4x32xf32>
    %c0_2 = arith.constant 0 : index
    %c0_3 = arith.constant 0 : index
    %c0_4 = arith.constant 0 : index
    %2 = vector.load %arg2[%c0_2, %c0_3, %c0_4] : memref<1x32x32xbf16, #tpu.memory_space<vmem>>, vector<1x32x32xbf16>
    %3 = vector.shape_cast %2 : vector<1x32x32xbf16> to vector<32x32xbf16>
    %c0_5 = arith.constant 0 : index
    %c0_6 = arith.constant 0 : index
    %4 = vector.load %arg4[%c0_5, %c0_6] : memref<32x32xbf16, #tpu.memory_space<vmem>>, vector<32x32xbf16>
    %cst = arith.constant dense<0.000000e+00> : vector<32x32xf32>
    %5 = tpu.matmul %3, %4, %cst {dimension_numbers = #tpu.dot_dimension_numbers<[1], [0], [0], [1], [0, 0, 1, 1], [], []>} : vector<32x32xbf16>, vector<32x32xbf16>, vector<32x32xf32> -> vector<32x32xf32>
    %c0_7 = arith.constant 0 : index
    %c0_8 = arith.constant 0 : index
    %6 = vector.load %arg5[%c0_7, %c0_8] : memref<1x32xf32, #tpu.memory_space<vmem>>, vector<1x32xf32>
    %7 = vector.broadcast %6 : vector<1x32xf32> to vector<32x32xf32>
    %8 = arith.addf %5, %7 : vector<32x32xf32>
    %9 = vector.extract_strided_slice %1 {offsets = [0, 0], sizes = [1, 32], strides = [1, 1]} : vector<4x32xf32> to vector<1x32xf32>
    %10 = vector.broadcast %9 : vector<1x32xf32> to vector<32x32xf32>
    %11 = arith.addf %8, %10 : vector<32x32xf32>
    %cst_9 = arith.constant 0.000000e+00 : f32
    %12 = vector.broadcast %cst_9 : f32 to vector<32x32xf32>
    %13 = arith.maximumf %11, %12 : vector<32x32xf32>
    %c0_10 = arith.constant 0 : index
    %c0_11 = arith.constant 0 : index
    %14 = vector.load %arg6[%c0_10, %c0_11] : memref<32x32xbf16, #tpu.memory_space<vmem>>, vector<32x32xbf16>
    %15 = arith.truncf %13 : vector<32x32xf32> to vector<32x32xbf16>
    %cst_12 = arith.constant dense<0.000000e+00> : vector<32x32xf32>
    %16 = tpu.matmul %15, %14, %cst_12 {dimension_numbers = #tpu.dot_dimension_numbers<[1], [0], [0], [1], [0, 0, 1, 1], [], []>} : vector<32x32xbf16>, vector<32x32xbf16>, vector<32x32xf32> -> vector<32x32xf32>
    %c0_13 = arith.constant 0 : index
    %c0_14 = arith.constant 0 : index
    %17 = vector.load %arg7[%c0_13, %c0_14] : memref<1x32xf32, #tpu.memory_space<vmem>>, vector<1x32xf32>
    %18 = vector.broadcast %17 : vector<1x32xf32> to vector<32x32xf32>
    %19 = arith.addf %16, %18 : vector<32x32xf32>
    %c0_15 = arith.constant 0 : index
    %c0_16 = arith.constant 0 : index
    %20 = vector.load %arg8[%c0_15, %c0_16] : memref<32x32xbf16, #tpu.memory_space<vmem>>, vector<32x32xbf16>
    %cst_17 = arith.constant dense<0.000000e+00> : vector<32x32xf32>
    %21 = tpu.matmul %3, %20, %cst_17 {dimension_numbers = #tpu.dot_dimension_numbers<[1], [0], [0], [1], [0, 0, 1, 1], [], []>} : vector<32x32xbf16>, vector<32x32xbf16>, vector<32x32xf32> -> vector<32x32xf32>
    %22 = arith.addf %19, %21 : vector<32x32xf32>
    %c0_18 = arith.constant 0 : index
    %c0_19 = arith.constant 0 : index
    %23 = vector.load %arg9[%c0_18, %c0_19] : memref<1x32xf32, #tpu.memory_space<vmem>>, vector<1x32xf32>
    %24 = vector.broadcast %23 : vector<1x32xf32> to vector<32x32xf32>
    %25 = arith.addf %22, %24 : vector<32x32xf32>
    %26 = vector.extract_strided_slice %1 {offsets = [1, 0], sizes = [1, 32], strides = [1, 1]} : vector<4x32xf32> to vector<1x32xf32>
    %27 = vector.broadcast %26 : vector<1x32xf32> to vector<32x32xf32>
    %28 = arith.addf %25, %27 : vector<32x32xf32>
    %29 = arith.truncf %28 : vector<32x32xf32> to vector<32x32xbf16>
    %c0_20 = arith.constant 0 : index
    %c0_21 = arith.constant 0 : index
    %30 = vector.load %arg10[%c0_20, %c0_21] : memref<32x16xbf16, #tpu.memory_space<vmem>>, vector<32x16xbf16>
    %cst_22 = arith.constant dense<0.000000e+00> : vector<32x16xf32>
    %31 = tpu.matmul %29, %30, %cst_22 {dimension_numbers = #tpu.dot_dimension_numbers<[1], [0], [0], [1], [0, 0, 1, 1], [], []>} : vector<32x32xbf16>, vector<32x16xbf16>, vector<32x16xf32> -> vector<32x16xf32>
    %c0_23 = arith.constant 0 : index
    %c0_24 = arith.constant 0 : index
    %32 = vector.load %arg11[%c0_23, %c0_24] : memref<1x16xf32, #tpu.memory_space<vmem>>, vector<1x16xf32>
    %33 = vector.broadcast %32 : vector<1x16xf32> to vector<32x16xf32>
    %34 = arith.addf %31, %33 : vector<32x16xf32>
    %cst_25 = arith.constant 0.000000e+00 : f32
    %35 = vector.broadcast %cst_25 : f32 to vector<32x16xf32>
    %36 = arith.maximumf %34, %35 : vector<32x16xf32>
    %c0_26 = arith.constant 0 : index
    %c0_27 = arith.constant 0 : index
    %37 = vector.load %arg12[%c0_26, %c0_27] : memref<16x32xbf16, #tpu.memory_space<vmem>>, vector<16x32xbf16>
    %38 = arith.truncf %36 : vector<32x16xf32> to vector<32x16xbf16>
    %cst_28 = arith.constant dense<0.000000e+00> : vector<32x32xf32>
    %39 = tpu.matmul %38, %37, %cst_28 {dimension_numbers = #tpu.dot_dimension_numbers<[1], [0], [0], [1], [0, 0, 1, 1], [], []>} : vector<32x16xbf16>, vector<16x32xbf16>, vector<32x32xf32> -> vector<32x32xf32>
    %c0_29 = arith.constant 0 : index
    %c0_30 = arith.constant 0 : index
    %40 = vector.load %arg13[%c0_29, %c0_30] : memref<1x32xf32, #tpu.memory_space<vmem>>, vector<1x32xf32>
    %41 = vector.broadcast %40 : vector<1x32xf32> to vector<32x32xf32>
    %42 = arith.addf %39, %41 : vector<32x32xf32>
    %c0_31 = arith.constant 0 : index
    %c0_32 = arith.constant 0 : index
    %43 = vector.load %arg14[%c0_31, %c0_32] : memref<32x32xbf16, #tpu.memory_space<vmem>>, vector<32x32xbf16>
    %cst_33 = arith.constant dense<0.000000e+00> : vector<32x32xf32>
    %44 = tpu.matmul %29, %43, %cst_33 {dimension_numbers = #tpu.dot_dimension_numbers<[1], [0], [0], [1], [0, 0, 1, 1], [], []>} : vector<32x32xbf16>, vector<32x32xbf16>, vector<32x32xf32> -> vector<32x32xf32>
    %45 = arith.addf %42, %44 : vector<32x32xf32>
    %c0_34 = arith.constant 0 : index
    %c0_35 = arith.constant 0 : index
    %46 = vector.load %arg15[%c0_34, %c0_35] : memref<1x32xf32, #tpu.memory_space<vmem>>, vector<1x32xf32>
    %47 = vector.broadcast %46 : vector<1x32xf32> to vector<32x32xf32>
    %48 = arith.addf %45, %47 : vector<32x32xf32>
    %49 = arith.truncf %48 : vector<32x32xf32> to vector<32x32xbf16>
    %c0_36 = arith.constant 0 : index
    %c0_37 = arith.constant 0 : index
    %50 = vector.load %arg16[%c0_36, %c0_37] : memref<32x32xbf16, #tpu.memory_space<vmem>>, vector<32x32xbf16>
    %cst_38 = arith.constant dense<0.000000e+00> : vector<32x32xf32>
    %51 = tpu.matmul %49, %50, %cst_38 {dimension_numbers = #tpu.dot_dimension_numbers<[1], [0], [0], [1], [0, 0, 1, 1], [], []>} : vector<32x32xbf16>, vector<32x32xbf16>, vector<32x32xf32> -> vector<32x32xf32>
    %c0_39 = arith.constant 0 : index
    %c0_40 = arith.constant 0 : index
    %52 = vector.load %arg17[%c0_39, %c0_40] : memref<1x32xf32, #tpu.memory_space<vmem>>, vector<1x32xf32>
    %53 = vector.broadcast %52 : vector<1x32xf32> to vector<32x32xf32>
    %54 = arith.addf %51, %53 : vector<32x32xf32>
    %55 = vector.extract_strided_slice %1 {offsets = [2, 0], sizes = [1, 32], strides = [1, 1]} : vector<4x32xf32> to vector<1x32xf32>
    %56 = vector.broadcast %55 : vector<1x32xf32> to vector<32x32xf32>
    %57 = arith.addf %54, %56 : vector<32x32xf32>
    %cst_41 = arith.constant 0.000000e+00 : f32
    %58 = vector.broadcast %cst_41 : f32 to vector<32x32xf32>
    %59 = arith.maximumf %57, %58 : vector<32x32xf32>
    %c0_42 = arith.constant 0 : index
    %c0_43 = arith.constant 0 : index
    %60 = vector.load %arg18[%c0_42, %c0_43] : memref<32x32xbf16, #tpu.memory_space<vmem>>, vector<32x32xbf16>
    %61 = arith.truncf %59 : vector<32x32xf32> to vector<32x32xbf16>
    %cst_44 = arith.constant dense<0.000000e+00> : vector<32x32xf32>
    %62 = tpu.matmul %61, %60, %cst_44 {dimension_numbers = #tpu.dot_dimension_numbers<[1], [0], [0], [1], [0, 0, 1, 1], [], []>} : vector<32x32xbf16>, vector<32x32xbf16>, vector<32x32xf32> -> vector<32x32xf32>
    %c0_45 = arith.constant 0 : index
    %c0_46 = arith.constant 0 : index
    %63 = vector.load %arg19[%c0_45, %c0_46] : memref<1x32xf32, #tpu.memory_space<vmem>>, vector<1x32xf32>
    %64 = vector.broadcast %63 : vector<1x32xf32> to vector<32x32xf32>
    %65 = arith.addf %62, %64 : vector<32x32xf32>
    %c0_47 = arith.constant 0 : index
    %c0_48 = arith.constant 0 : index
    %66 = vector.load %arg20[%c0_47, %c0_48] : memref<32x32xbf16, #tpu.memory_space<vmem>>, vector<32x32xbf16>
    %cst_49 = arith.constant dense<0.000000e+00> : vector<32x32xf32>
    %67 = tpu.matmul %49, %66, %cst_49 {dimension_numbers = #tpu.dot_dimension_numbers<[1], [0], [0], [1], [0, 0, 1, 1], [], []>} : vector<32x32xbf16>, vector<32x32xbf16>, vector<32x32xf32> -> vector<32x32xf32>
    %68 = arith.addf %65, %67 : vector<32x32xf32>
    %c0_50 = arith.constant 0 : index
    %c0_51 = arith.constant 0 : index
    %69 = vector.load %arg21[%c0_50, %c0_51] : memref<1x32xf32, #tpu.memory_space<vmem>>, vector<1x32xf32>
    %70 = vector.broadcast %69 : vector<1x32xf32> to vector<32x32xf32>
    %71 = arith.addf %68, %70 : vector<32x32xf32>
    %72 = vector.extract_strided_slice %1 {offsets = [3, 0], sizes = [1, 32], strides = [1, 1]} : vector<4x32xf32> to vector<1x32xf32>
    %73 = vector.broadcast %72 : vector<1x32xf32> to vector<32x32xf32>
    %74 = arith.addf %71, %73 : vector<32x32xf32>
    %c0_52 = arith.constant 0 : index
    %c0_53 = arith.constant 0 : index
    %c0_54 = arith.constant 0 : index
    %75 = vector.load %arg26[%c0_52, %c0_53, %c0_54] : memref<1x32x32xf32, #tpu.memory_space<vmem>>, vector<1x32x32xf32>
    %76 = vector.shape_cast %75 : vector<1x32x32xf32> to vector<32x32xf32>
    %77 = vector.shape_cast %74 : vector<32x32xf32> to vector<1x32x32xf32>
    tpu.vector_store %arg26[%c0_52, %c0_53, %c0_54], %77 {strides = array<i32>} : memref<1x32x32xf32, #tpu.memory_space<vmem>>, vector<1x32x32xf32>,
    %78 = arith.truncf %74 : vector<32x32xf32> to vector<32x32xbf16>
    %c0_55 = arith.constant 0 : index
    %c0_56 = arith.constant 0 : index
    %79 = vector.load %arg22[%c0_55, %c0_56] : memref<32x16xbf16, #tpu.memory_space<vmem>>, vector<32x16xbf16>
    %cst_57 = arith.constant dense<0.000000e+00> : vector<32x16xf32>
    %80 = tpu.matmul %78, %79, %cst_57 {dimension_numbers = #tpu.dot_dimension_numbers<[1], [0], [0], [1], [0, 0, 1, 1], [], []>} : vector<32x32xbf16>, vector<32x16xbf16>, vector<32x16xf32> -> vector<32x16xf32>
    %c0_58 = arith.constant 0 : index
    %c0_59 = arith.constant 0 : index
    %81 = vector.load %arg23[%c0_58, %c0_59] : memref<1x16xf32, #tpu.memory_space<vmem>>, vector<1x16xf32>
    %82 = vector.broadcast %81 : vector<1x16xf32> to vector<32x16xf32>
    %83 = arith.addf %80, %82 : vector<32x16xf32>
    %cst_60 = arith.constant 0.000000e+00 : f32
    %84 = vector.broadcast %cst_60 : f32 to vector<32x16xf32>
    %85 = arith.maximumf %83, %84 : vector<32x16xf32>
    %c0_61 = arith.constant 0 : index
    %c0_62 = arith.constant 0 : index
    %86 = vector.load %arg24[%c0_61, %c0_62] : memref<16x3xbf16, #tpu.memory_space<vmem>>, vector<16x3xbf16>
    %87 = arith.truncf %85 : vector<32x16xf32> to vector<32x16xbf16>
    %cst_63 = arith.constant dense<0.000000e+00> : vector<32x3xf32>
    %88 = tpu.matmul %87, %86, %cst_63 {dimension_numbers = #tpu.dot_dimension_numbers<[1], [0], [0], [1], [0, 0, 1, 1], [], []>} : vector<32x16xbf16>, vector<16x3xbf16>, vector<32x3xf32> -> vector<32x3xf32>
    %c0_64 = arith.constant 0 : index
    %c0_65 = arith.constant 0 : index
    %89 = vector.load %arg25[%c0_64, %c0_65] : memref<1x3xf32, #tpu.memory_space<vmem>>, vector<1x3xf32>
    %90 = vector.broadcast %89 : vector<1x3xf32> to vector<32x3xf32>
    %91 = arith.addf %88, %90 : vector<32x3xf32>
    %92 = math.tanh %91 : vector<32x3xf32>
    %c0_66 = arith.constant 0 : index
    %c0_67 = arith.constant 0 : index
    %c0_68 = arith.constant 0 : index
    %93 = vector.load %arg27[%c0_66, %c0_67, %c0_68] : memref<1x32x3xf32, #tpu.memory_space<vmem>>, vector<1x32x3xf32>
    %94 = vector.shape_cast %93 : vector<1x32x3xf32> to vector<32x3xf32>
    %95 = vector.shape_cast %92 : vector<32x3xf32> to vector<1x32x3xf32>
    tpu.vector_store %arg27[%c0_66, %c0_67, %c0_68], %95 {strides = array<i32>} : memref<1x32x3xf32, #tpu.memory_space<vmem>>, vector<1x32x3xf32>,
    return
  }
  func.func @transform_0(%arg0: i32, %arg1: i32) -> (i32, i32, i32) {
    %c0_i32 = arith.constant 0 : i32
    %c0_i32_0 = arith.constant 0 : i32
    return %arg0, %arg1, %c0_i32 : i32, i32, i32
  }
  func.func @transform_1(%arg0: i32, %arg1: i32) -> (i32, i32, i32) {
    %c0_i32 = arith.constant 0 : i32
    %c0_i32_0 = arith.constant 0 : i32
    %c0_i32_1 = arith.constant 0 : i32
    return %arg0, %c0_i32, %c0_i32_0 : i32, i32, i32
  }
  func.func @transform_2(%arg0: i32, %arg1: i32) -> (i32, i32) {
    %c0_i32 = arith.constant 0 : i32
    %c0_i32_0 = arith.constant 0 : i32
    %c0_i32_1 = arith.constant 0 : i32
    return %c0_i32, %c0_i32_0 : i32, i32
  }
  func.func @transform_3(%arg0: i32, %arg1: i32) -> (i32, i32) {
    %c0_i32 = arith.constant 0 : i32
    %c0_i32_0 = arith.constant 0 : i32
    %c0_i32_1 = arith.constant 0 : i32
    return %c0_i32, %c0_i32_0 : i32, i32
  }
  func.func @transform_4(%arg0: i32, %arg1: i32) -> (i32, i32) {
    %c0_i32 = arith.constant 0 : i32
    %c0_i32_0 = arith.constant 0 : i32
    %c0_i32_1 = arith.constant 0 : i32
    return %c0_i32, %c0_i32_0 : i32, i32
  }
  func.func @transform_5(%arg0: i32, %arg1: i32) -> (i32, i32) {
    %c0_i32 = arith.constant 0 : i32
    %c0_i32_0 = arith.constant 0 : i32
    %c0_i32_1 = arith.constant 0 : i32
    return %c0_i32, %c0_i32_0 : i32, i32
  }
  func.func @transform_6(%arg0: i32, %arg1: i32) -> (i32, i32) {
    %c0_i32 = arith.constant 0 : i32
    %c0_i32_0 = arith.constant 0 : i32
    %c0_i32_1 = arith.constant 0 : i32
    return %c0_i32, %c0_i32_0 : i32, i32
  }
  func.func @transform_7(%arg0: i32, %arg1: i32) -> (i32, i32) {
    %c0_i32 = arith.constant 0 : i32
    %c0_i32_0 = arith.constant 0 : i32
    %c0_i32_1 = arith.constant 0 : i32
    return %c0_i32, %c0_i32_0 : i32, i32
  }
  func.func @transform_8(%arg0: i32, %arg1: i32) -> (i32, i32) {
    %c0_i32 = arith.constant 0 : i32
    %c0_i32_0 = arith.constant 0 : i32
    %c0_i32_1 = arith.constant 0 : i32
    return %c0_i32, %c0_i32_0 : i32, i32
  }
  func.func @transform_9(%arg0: i32, %arg1: i32) -> (i32, i32) {
    %c0_i32 = arith.constant 0 : i32
    %c0_i32_0 = arith.constant 0 : i32
    %c0_i32_1 = arith.constant 0 : i32
    return %c0_i32, %c0_i32_0 : i32, i32
  }
  func.func @transform_10(%arg0: i32, %arg1: i32) -> (i32, i32) {
    %c0_i32 = arith.constant 0 : i32
    %c0_i32_0 = arith.constant 0 : i32
    %c0_i32_1 = arith.constant 0 : i32
    return %c0_i32, %c0_i32_0 : i32, i32
  }
  func.func @transform_11(%arg0: i32, %arg1: i32) -> (i32, i32) {
    %c0_i32 = arith.constant 0 : i32
    %c0_i32_0 = arith.constant 0 : i32
    %c0_i32_1 = arith.constant 0 : i32
    return %c0_i32, %c0_i32_0 : i32, i32
  }
  func.func @transform_12(%arg0: i32, %arg1: i32) -> (i32, i32) {
    %c0_i32 = arith.constant 0 : i32
    %c0_i32_0 = arith.constant 0 : i32
    %c0_i32_1 = arith.constant 0 : i32
    return %c0_i32, %c0_i32_0 : i32, i32
  }
  func.func @transform_13(%arg0: i32, %arg1: i32) -> (i32, i32) {
    %c0_i32 = arith.constant 0 : i32
    %c0_i32_0 = arith.constant 0 : i32
    %c0_i32_1 = arith.constant 0 : i32
    return %c0_i32, %c0_i32_0 : i32, i32
  }
  func.func @transform_14(%arg0: i32, %arg1: i32) -> (i32, i32) {
    %c0_i32 = arith.constant 0 : i32
    %c0_i32_0 = arith.constant 0 : i32
    %c0_i32_1 = arith.constant 0 : i32
    return %c0_i32, %c0_i32_0 : i32, i32
  }
  func.func @transform_15(%arg0: i32, %arg1: i32) -> (i32, i32) {
    %c0_i32 = arith.constant 0 : i32
    %c0_i32_0 = arith.constant 0 : i32
    %c0_i32_1 = arith.constant 0 : i32
    return %c0_i32, %c0_i32_0 : i32, i32
  }
  func.func @transform_16(%arg0: i32, %arg1: i32) -> (i32, i32) {
    %c0_i32 = arith.constant 0 : i32
    %c0_i32_0 = arith.constant 0 : i32
    %c0_i32_1 = arith.constant 0 : i32
    return %c0_i32, %c0_i32_0 : i32, i32
  }
  func.func @transform_17(%arg0: i32, %arg1: i32) -> (i32, i32) {
    %c0_i32 = arith.constant 0 : i32
    %c0_i32_0 = arith.constant 0 : i32
    %c0_i32_1 = arith.constant 0 : i32
    return %c0_i32, %c0_i32_0 : i32, i32
  }
  func.func @transform_18(%arg0: i32, %arg1: i32) -> (i32, i32) {
    %c0_i32 = arith.constant 0 : i32
    %c0_i32_0 = arith.constant 0 : i32
    %c0_i32_1 = arith.constant 0 : i32
    return %c0_i32, %c0_i32_0 : i32, i32
  }
  func.func @transform_19(%arg0: i32, %arg1: i32) -> (i32, i32) {
    %c0_i32 = arith.constant 0 : i32
    %c0_i32_0 = arith.constant 0 : i32
    %c0_i32_1 = arith.constant 0 : i32
    return %c0_i32, %c0_i32_0 : i32, i32
  }
  func.func @transform_20(%arg0: i32, %arg1: i32) -> (i32, i32) {
    %c0_i32 = arith.constant 0 : i32
    %c0_i32_0 = arith.constant 0 : i32
    %c0_i32_1 = arith.constant 0 : i32
    return %c0_i32, %c0_i32_0 : i32, i32
  }
  func.func @transform_21(%arg0: i32, %arg1: i32) -> (i32, i32) {
    %c0_i32 = arith.constant 0 : i32
    %c0_i32_0 = arith.constant 0 : i32
    %c0_i32_1 = arith.constant 0 : i32
    return %c0_i32, %c0_i32_0 : i32, i32
  }
  func.func @transform_22(%arg0: i32, %arg1: i32) -> (i32, i32) {
    %c0_i32 = arith.constant 0 : i32
    %c0_i32_0 = arith.constant 0 : i32
    %c0_i32_1 = arith.constant 0 : i32
    return %c0_i32, %c0_i32_0 : i32, i32
  }
  func.func @transform_23(%arg0: i32, %arg1: i32) -> (i32, i32) {
    %c0_i32 = arith.constant 0 : i32
    %c0_i32_0 = arith.constant 0 : i32
    %c0_i32_1 = arith.constant 0 : i32
    return %c0_i32, %c0_i32_0 : i32, i32
  }
  func.func @transform_24(%arg0: i32, %arg1: i32) -> (i32, i32, i32) {
    %c0_i32 = arith.constant 0 : i32
    %c0_i32_0 = arith.constant 0 : i32
    return %arg0, %arg1, %c0_i32 : i32, i32, i32
  }
  func.func @transform_25(%arg0: i32, %arg1: i32) -> (i32, i32, i32) {
    %c0_i32 = arith.constant 0 : i32
    %c0_i32_0 = arith.constant 0 : i32
    return %arg0, %arg1, %c0_i32 : i32, i32, i32
  }
}

</mosaic_0001>

<llo_original>
// kernel: pallas_forward.3
$region0: #{pallas_forward.3}
  #allocation0 [shape = 'u32[]', space=smem, size = 0x4, offset = 0x4, fixed_abs, tag = 'smem constant byte address 0x4 - core index']
  #allocation1 [shape = 'u32[144,128]{1,0:T(1,128)}', space=vmem, size = 0x12000, scoped, tag = 'internal scratch']
  %s0 = inlined_call_operand.vmem [shape: f32[32,16], index: 0, kind: input, shape index: {}]
  %s1 = inlined_call_operand.vmem [shape: bf16[16,16], index: 1, kind: input, shape index: {}]
  %s2 = inlined_call_operand.vmem [shape: f32[1,16], index: 2, kind: input, shape index: {}]
  %s3 = inlined_call_operand.vmem [shape: bf16[16,32], index: 3, kind: input, shape index: {}]
  %s4 = inlined_call_operand.vmem [shape: f32[1,32], index: 4, kind: input, shape index: {}]
  %s5 = inlined_call_operand.vmem [shape: bf16[16,32], index: 5, kind: input, shape index: {}]
  %s6 = inlined_call_operand.vmem [shape: f32[1,32], index: 6, kind: input, shape index: {}]
  %s7 = inlined_call_operand.vmem [shape: bf16[16,16], index: 7, kind: input, shape index: {}]
  %s8 = inlined_call_operand.vmem [shape: f32[1,16], index: 8, kind: input, shape index: {}]
  %s9 = inlined_call_operand.vmem [shape: bf16[16,16], index: 9, kind: input, shape index: {}]
  %s10 = inlined_call_operand.vmem [shape: f32[1,16], index: 10, kind: input, shape index: {}]
  %s11 = inlined_call_operand.vmem [shape: bf16[32,16], index: 11, kind: input, shape index: {}]
  %s12 = inlined_call_operand.vmem [shape: f32[1,16], index: 12, kind: input, shape index: {}]
  %s13 = inlined_call_operand.vmem [shape: bf16[32,32], index: 13, kind: output, shape index: {0}]
  %s14 = inlined_call_operand.vmem [shape: bf16[32,16], index: 14, kind: output, shape index: {1}]
  %s15 = inlined_call_operand.vmem [shape: bf16[32,16], index: 15, kind: output, shape index: {2}]
  %s16 = inlined_call_operand.vmem [shape: bf16[32,16], index: 16, kind: output, shape index: {3}]
  %17 = xla_tuple %s13, %s14, %s15, %s16
  %s18 = sld [smem:[#allocation0]]
  $region86: #{pallas_forward.3} parent=0
    _
  %s20 = ssub.s32 1, %s18
  %s21 = scalar_select 0, %s20, %s18
  // Predicated region
  $region2: #{pallas_forward.3} parent=0 // pred_check
    _
  $region3: #{pallas_forward.3} parent=0 // pred_check_branch
    %23 = sbr.rel (0) target = $region5
  $region4: #{pallas_forward.3} parent=0 // pred_region
    _
  $region5: #{pallas_forward.3} parent=0 // pred_fallthru
    _
  // Predicated region
  $region6: #{pallas_forward.3} parent=0 // pred_check
    _
  $region7: #{pallas_forward.3} parent=0 // pred_check_branch
    %25 = sbr.rel (0) target = $region9
  $region8: #{pallas_forward.3} parent=0 // pred_region
    _
  $region9: #{pallas_forward.3} parent=0 // pred_fallthru
    _
  // Predicated region
  $region10: #{pallas_forward.3} parent=0 // pred_check
    _
  $region11: #{pallas_forward.3} parent=0 // pred_check_branch
    %27 = sbr.rel (0) target = $region13
  $region12: #{pallas_forward.3} parent=0 // pred_region
    _
  $region13: #{pallas_forward.3} parent=0 // pred_fallthru
    _
  // Predicated region
  $region14: #{pallas_forward.3} parent=0 // pred_check
    _
  $region15: #{pallas_forward.3} parent=0 // pred_check_branch
    %29 = sbr.rel (0) target = $region17
  $region16: #{pallas_forward.3} parent=0 // pred_region
    _
  $region17: #{pallas_forward.3} parent=0 // pred_fallthru
    _
  // Predicated region
  $region18: #{pallas_forward.3} parent=0 // pred_check
    _
  $region19: #{pallas_forward.3} parent=0 // pred_check_branch
    %31 = sbr.rel (0) target = $region21
  $region20: #{pallas_forward.3} parent=0 // pred_region
    _
  $region21: #{pallas_forward.3} parent=0 // pred_fallthru
    _
  // Predicated region
  $region22: #{pallas_forward.3} parent=0 // pred_check
    _
  $region23: #{pallas_forward.3} parent=0 // pred_check_branch
    %33 = sbr.rel (0) target = $region25
  $region24: #{pallas_forward.3} parent=0 // pred_region
    _
  $region25: #{pallas_forward.3} parent=0 // pred_fallthru
    _
  // Predicated region
  $region26: #{pallas_forward.3} parent=0 // pred_check
    _
  $region27: #{pallas_forward.3} parent=0 // pred_check_branch
    %35 = sbr.rel (0) target = $region29
  $region28: #{pallas_forward.3} parent=0 // pred_region
    _
  $region29: #{pallas_forward.3} parent=0 // pred_fallthru
    _
  // Predicated region
  $region30: #{pallas_forward.3} parent=0 // pred_check
    _
  $region31: #{pallas_forward.3} parent=0 // pred_check_branch
    %37 = sbr.rel (0) target = $region33
  $region32: #{pallas_forward.3} parent=0 // pred_region
    _
  $region33: #{pallas_forward.3} parent=0 // pred_fallthru
    _
  // Predicated region
  $region34: #{pallas_forward.3} parent=0 // pred_check
    _
  $region35: #{pallas_forward.3} parent=0 // pred_check_branch
    %39 = sbr.rel (0) target = $region37
  $region36: #{pallas_forward.3} parent=0 // pred_region
    _
  $region37: #{pallas_forward.3} parent=0 // pred_fallthru
    _
  // Predicated region
  $region38: #{pallas_forward.3} parent=0 // pred_check
    _
  $region39: #{pallas_forward.3} parent=0 // pred_check_branch
    %41 = sbr.rel (0) target = $region41
  $region40: #{pallas_forward.3} parent=0 // pred_region
    _
  $region41: #{pallas_forward.3} parent=0 // pred_fallthru
    _
  // Predicated region
  $region42: #{pallas_forward.3} parent=0 // pred_check
    _
  $region43: #{pallas_forward.3} parent=0 // pred_check_branch
    %43 = sbr.rel (0) target = $region45
  $region44: #{pallas_forward.3} parent=0 // pred_region
    _
  $region45: #{pallas_forward.3} parent=0 // pred_fallthru
    _
  // Predicated region
  $region46: #{pallas_forward.3} parent=0 // pred_check
    _
  $region47: #{pallas_forward.3} parent=0 // pred_check_branch
    %45 = sbr.rel (0) target = $region49
  $region48: #{pallas_forward.3} parent=0 // pred_region
    _
  $region49: #{pallas_forward.3} parent=0 // pred_fallthru
    _
  // Predicated region
  $region50: #{pallas_forward.3} parent=0 // pred_check
    _
  $region51: #{pallas_forward.3} parent=0 // pred_check_branch
    %47 = sbr.rel (0) target = $region53
  $region52: #{pallas_forward.3} parent=0 // pred_region
    _
  $region53: #{pallas_forward.3} parent=0 // pred_fallthru
    _
  %v49 = vld [vmem:[%s0] sm:$0xff]
  %v50 = vld [vmem:[%s0 + $0x8] sm:$0xff]
  %v51 = vld [vmem:[%s0 + $0x10] sm:$0xff]
  %v52 = vld [vmem:[%s0 + $0x18] sm:$0xff]
  %v53 = vpack.c.bf16 %v50, %v49
  %v54 = vpack.c.bf16 %v52, %v51
  %v55 = vld [vmem:[%s1] sm:$0xf]
  %v56 = vld [vmem:[%s1 + $0x4] sm:$0xf]
  %v57 = vld [vmem:[%s2] sm:$0x1]
  %v59 = vlaneseq
  %v60 = vshrl.u32 %v59, 7
  %v61 = vsub.s32 0, %v60
  %v62 = vrot.slane %v57, %v61
  %v66 = vunpack.c.l.b16 %v55
  %v67 = vunpack.c.l.b16 %v56
  %v68 = vpack.c.b16 %v67, %v66
  %vm70 = vcmask 130048
  %v72 = vsel %vm70, %v53, 0
  %v75 = vsel %vm70, %v54, 0
  %77 = vmatprep.subr.bf16.mxu0 0
  %78 = vmatpush1.bf16.msra.mxu0 0
  %79 = vmatprep.subr.bf16.mxu0 0
  %80 = vmatpush1.bf16.msra.mxu0 0
  %81 = vmatprep.subr.bf16.mxu0 0
  %82 = vmatpush1.bf16.msra.mxu0 0
  %83 = vmatprep.subr.bf16.mxu0 0
  %84 = vmatpush1.bf16.msra.mxu0 0
  %85 = vmatprep.subr.bf16.mxu0 0
  %86 = vmatpush1.bf16.msra.mxu0 0
  %87 = vmatprep.subr.bf16.mxu0 0
  %88 = vmatpush1.bf16.msra.mxu0 0
  %89 = vmatprep.subr.bf16.mxu0 0
  %90 = vmatpush1.bf16.msra.mxu0 0
  %91 = vmatprep.subr.bf16.mxu0 0
  %92 = vmatpush1.bf16.msra.mxu0 %v68
  %93 = vmatprep.subr.bf16.mxu0 0
  %94 = vmatpush2.bf16.msra.mxu0 0
  %95 = vmatprep.subr.bf16.mxu0 0
  %96 = vmatpush2.bf16.msra.mxu0 0
  %97 = vmatprep.subr.bf16.mxu0 0
  %98 = vmatpush2.bf16.msra.mxu0 0
  %99 = vmatprep.subr.bf16.mxu0 0
  %100 = vmatpush2.bf16.msra.mxu0 0
  %101 = vmatprep.subr.bf16.mxu0 0
  %102 = vmatpush2.bf16.msra.mxu0 0
  %103 = vmatprep.subr.bf16.mxu0 0
  %104 = vmatpush2.bf16.msra.mxu0 0
  %105 = vmatprep.subr.bf16.mxu0 0
  %106 = vmatpush2.bf16.msra.mxu0 0
  %107 = vmatprep.subr.bf16.mxu0 0
  %108 = vmatpush2.bf16.msra.mxu0 0
  %109 = vmatprep.mubr.bf16.mxu0 0
  %110 = vmatmul.mubr.bf16.gmra.mxu0 %v72
  %v111 = vpop.f32.mrf.mxu0
  %v112 = vadd.f32 %v62, %v111
  %v113 = vpop.f32.mrf.mxu0
  %v114 = vpop.f32.mrf.mxu0
  %v115 = vadd.f32 %v62, %v114
  %v116 = vpop.f32.mrf.mxu0
  %117 = vmatprep.mubr.bf16.mxu0 0
  %118 = vmatmul.mubr.bf16.gmra.mxu0 %v75
  %v119 = vpop.f32.mrf.mxu0
  %v120 = vadd.f32 %v62, %v119
  %v121 = vpop.f32.mrf.mxu0
  %v122 = vpop.f32.mrf.mxu0
  %v123 = vadd.f32 %v62, %v122
  %v124 = vpop.f32.mrf.mxu0
  %125 = vdwg.mxu0
  %v126 = vmax.f32 %v112, 0.0
  %v127 = vmax.f32 %v115, 0.0
  %v128 = vmax.f32 %v120, 0.0
  %v129 = vmax.f32 %v123, 0.0
  %v130 = vld [vmem:[%s3] sm:$0xf]
  %v131 = vld [vmem:[%s3 + $0x4] sm:$0xf]
  %v132 = vpack.c.bf16 %v127, %v126
  %v133 = vpack.c.bf16 %v129, %v128
  %v134 = vld [vmem:[%s4] sm:$0x1]
  %v136 = vlaneseq
  %v137 = vshrl.u32 %v136, 7
  %v138 = vsub.s32 0, %v137
  %v139 = vrot.slane %v134, %v138
  %v143 = vunpack.c.l.b16 %v130
  %v144 = vunpack.c.l.b16 %v131
  %v145 = vpack.c.b16 %v144, %v143
  %v148 = vsel %vm70, %v132, 0
  %v151 = vsel %vm70, %v133, 0
  %153 = vmatprep.subr.bf16.mxu0 0
  %154 = vmatpush1.bf16.msra.mxu0 0
  %155 = vmatprep.subr.bf16.mxu0 0
  %156 = vmatpush1.bf16.msra.mxu0 0
  %157 = vmatprep.subr.bf16.mxu0 0
  %158 = vmatpush1.bf16.msra.mxu0 0
  %159 = vmatprep.subr.bf16.mxu0 0
  %160 = vmatpush1.bf16.msra.mxu0 0
  %161 = vmatprep.subr.bf16.mxu0 0
  %162 = vmatpush1.bf16.msra.mxu0 0
  %163 = vmatprep.subr.bf16.mxu0 0
  %164 = vmatpush1.bf16.msra.mxu0 0
  %165 = vmatprep.subr.bf16.mxu0 0
  %166 = vmatpush1.bf16.msra.mxu0 0
  %167 = vmatprep.subr.bf16.mxu0 0
  %168 = vmatpush1.bf16.msra.mxu0 %v145
  %169 = vmatprep.subr.bf16.mxu0 0
  %170 = vmatpush2.bf16.msra.mxu0 0
  %171 = vmatprep.subr.bf16.mxu0 0
  %172 = vmatpush2.bf16.msra.mxu0 0
  %173 = vmatprep.subr.bf16.mxu0 0
  %174 = vmatpush2.bf16.msra.mxu0 0
  %175 = vmatprep.subr.bf16.mxu0 0
  %176 = vmatpush2.bf16.msra.mxu0 0
  %177 = vmatprep.subr.bf16.mxu0 0
  %178 = vmatpush2.bf16.msra.mxu0 0
  %179 = vmatprep.subr.bf16.mxu0 0
  %180 = vmatpush2.bf16.msra.mxu0 0
  %181 = vmatprep.subr.bf16.mxu0 0
  %182 = vmatpush2.bf16.msra.mxu0 0
  %183 = vmatprep.subr.bf16.mxu0 0
  %184 = vmatpush2.bf16.msra.mxu0 0
  %185 = vmatprep.mubr.bf16.mxu0 0
  %186 = vmatmul.mubr.bf16.gmra.mxu0 %v148
  %v187 = vpop.f32.mrf.mxu0
  %v188 = vadd.f32 %v139, %v187
  %v189 = vpop.f32.mrf.mxu0
  %v190 = vpop.f32.mrf.mxu0
  %v191 = vadd.f32 %v139, %v190
  %v192 = vpop.f32.mrf.mxu0
  %193 = vmatprep.mubr.bf16.mxu0 0
  %194 = vmatmul.mubr.bf16.gmra.mxu0 %v151
  %v195 = vpop.f32.mrf.mxu0
  %v196 = vadd.f32 %v139, %v195
  %v197 = vpop.f32.mrf.mxu0
  %v198 = vpop.f32.mrf.mxu0
  %v199 = vadd.f32 %v139, %v198
  %v200 = vpop.f32.mrf.mxu0
  %201 = vdwg.mxu0
  %v202 = vld [vmem:[%s5] sm:$0xf]
  %v203 = vld [vmem:[%s5 + $0x4] sm:$0xf]
  %v206 = vunpack.c.l.b16 %v202
  %v207 = vunpack.c.l.b16 %v203
  %v208 = vpack.c.b16 %v207, %v206
  %210 = vmatprep.subr.bf16.mxu0 0
  %211 = vmatpush1.bf16.msra.mxu0 0
  %212 = vmatprep.subr.bf16.mxu0 0
  %213 = vmatpush1.bf16.msra.mxu0 0
  %214 = vmatprep.subr.bf16.mxu0 0
  %215 = vmatpush1.bf16.msra.mxu0 0
  %216 = vmatprep.subr.bf16.mxu0 0
  %217 = vmatpush1.bf16.msra.mxu0 0
  %218 = vmatprep.subr.bf16.mxu0 0
  %219 = vmatpush1.bf16.msra.mxu0 0
  %220 = vmatprep.subr.bf16.mxu0 0
  %221 = vmatpush1.bf16.msra.mxu0 0
  %222 = vmatprep.subr.bf16.mxu0 0
  %223 = vmatpush1.bf16.msra.mxu0 0
  %224 = vmatprep.subr.bf16.mxu0 0
  %225 = vmatpush1.bf16.msra.mxu0 %v208
  %226 = vmatprep.subr.bf16.mxu0 0
  %227 = vmatpush2.bf16.msra.mxu0 0
  %228 = vmatprep.subr.bf16.mxu0 0
  %229 = vmatpush2.bf16.msra.mxu0 0
  %230 = vmatprep.subr.bf16.mxu0 0
  %231 = vmatpush2.bf16.msra.mxu0 0
  %232 = vmatprep.subr.bf16.mxu0 0
  %233 = vmatpush2.bf16.msra.mxu0 0
  %234 = vmatprep.subr.bf16.mxu0 0
  %235 = vmatpush2.bf16.msra.mxu0 0
  %236 = vmatprep.subr.bf16.mxu0 0
  %237 = vmatpush2.bf16.msra.mxu0 0
  %238 = vmatprep.subr.bf16.mxu0 0
  %239 = vmatpush2.bf16.msra.mxu0 0
  %240 = vmatprep.subr.bf16.mxu0 0
  %241 = vmatpush2.bf16.msra.mxu0 0
  %242 = vmatprep.mubr.bf16.mxu0 0
  %243 = vmatmul.mubr.bf16.gmra.mxu0 %v72
  %v244 = vpop.f32.mrf.mxu0
  %v245 = vadd.f32 0.0, %v244
  %v246 = vpop.f32.mrf.mxu0
  %v247 = vpop.f32.mrf.mxu0
  %v248 = vadd.f32 0.0, %v247
  %v249 = vpop.f32.mrf.mxu0
  %250 = vmatprep.mubr.bf16.mxu0 0
  %251 = vmatmul.mubr.bf16.gmra.mxu0 %v75
  %v252 = vpop.f32.mrf.mxu0
  %v253 = vadd.f32 0.0, %v252
  %v254 = vpop.f32.mrf.mxu0
  %v255 = vpop.f32.mrf.mxu0
  %v256 = vadd.f32 0.0, %v255
  %v257 = vpop.f32.mrf.mxu0
  %258 = vdwg.mxu0
  %v259 = vadd.f32 %v188, %v245
  %v260 = vadd.f32 %v191, %v248
  %v261 = vadd.f32 %v196, %v253
  %v262 = vadd.f32 %v199, %v256
  %v263 = vld [vmem:[%s6] sm:$0x1]
  %v265 = vlaneseq
  %v266 = vshrl.u32 %v265, 7
  %v267 = vsub.s32 0, %v266
  %v268 = vrot.slane %v263, %v267
  %v270 = vadd.f32 %v259, %v268
  %v271 = vadd.f32 %v260, %v268
  %v272 = vadd.f32 %v261, %v268
  %v273 = vadd.f32 %v262, %v268
  %v274 = vpack.c.bf16 %v271, %v270
  %v275 = vpack.c.bf16 %v273, %v272
  %v278 = vunpack.c.l.b16 %v274
  %v279 = vunpack.c.h.b16 %v274
  %v280 = vunpack.c.l.b16 %v275
  %v281 = vunpack.c.h.b16 %v275
  %v282 = vpack.c.b16 %v278, %v278
  %v283 = vpack.c.b16 %v279, %v279
  %v284 = vpack.c.b16 %v280, %v280
  %v285 = vpack.c.b16 %v281, %v281
  %vm290 = vcmask 257024
  %291 = vst.msk [vmem:[%s13] sm:$0xf] %vm290, %v282
  %292 = vst.msk [vmem:[%s13 + $0x4] sm:$0xf] %vm290, %v283
  %293 = vst.msk [vmem:[%s13 + $0x8] sm:$0xf] %vm290, %v284
  %294 = vst.msk [vmem:[%s13 + $0xc] sm:$0xf] %vm290, %v285
  %v295 = vld [vmem:[%s7] sm:$0xf]
  %v296 = vld [vmem:[%s7 + $0x4] sm:$0xf]
  %v297 = vld [vmem:[%s8] sm:$0x1]
  %v299 = vlaneseq
  %v300 = vshrl.u32 %v299, 7
  %v301 = vsub.s32 0, %v300
  %v302 = vrot.slane %v297, %v301
  %v306 = vunpack.c.l.b16 %v295
  %v307 = vunpack.c.l.b16 %v296
  %v308 = vpack.c.b16 %v307, %v306
  %310 = vmatprep.subr.bf16.mxu0 0
  %311 = vmatpush1.bf16.msra.mxu0 0
  %312 = vmatprep.subr.bf16.mxu0 0
  %313 = vmatpush1.bf16.msra.mxu0 0
  %314 = vmatprep.subr.bf16.mxu0 0
  %315 = vmatpush1.bf16.msra.mxu0 0
  %316 = vmatprep.subr.bf16.mxu0 0
  %317 = vmatpush1.bf16.msra.mxu0 0
  %318 = vmatprep.subr.bf16.mxu0 0
  %319 = vmatpush1.bf16.msra.mxu0 0
  %320 = vmatprep.subr.bf16.mxu0 0
  %321 = vmatpush1.bf16.msra.mxu0 0
  %322 = vmatprep.subr.bf16.mxu0 0
  %323 = vmatpush1.bf16.msra.mxu0 0
  %324 = vmatprep.subr.bf16.mxu0 0
  %325 = vmatpush1.bf16.msra.mxu0 %v308
  %326 = vmatprep.subr.bf16.mxu0 0
  %327 = vmatpush2.bf16.msra.mxu0 0
  %328 = vmatprep.subr.bf16.mxu0 0
  %329 = vmatpush2.bf16.msra.mxu0 0
  %330 = vmatprep.subr.bf16.mxu0 0
  %331 = vmatpush2.bf16.msra.mxu0 0
  %332 = vmatprep.subr.bf16.mxu0 0
  %333 = vmatpush2.bf16.msra.mxu0 0
  %334 = vmatprep.subr.bf16.mxu0 0
  %335 = vmatpush2.bf16.msra.mxu0 0
  %336 = vmatprep.subr.bf16.mxu0 0
  %337 = vmatpush2.bf16.msra.mxu0 0
  %338 = vmatprep.subr.bf16.mxu0 0
  %339 = vmatpush2.bf16.msra.mxu0 0
  %340 = vmatprep.subr.bf16.mxu0 0
  %341 = vmatpush2.bf16.msra.mxu0 0
  %342 = vmatprep.mubr.bf16.mxu0 0
  %343 = vmatmul.mubr.bf16.gmra.mxu0 %v72
  %v344 = vpop.f32.mrf.mxu0
  %v345 = vadd.f32 %v302, %v344
  %v346 = vpop.f32.mrf.mxu0
  %v347 = vpop.f32.mrf.mxu0
  %v348 = vadd.f32 %v302, %v347
  %v349 = vpop.f32.mrf.mxu0
  %350 = vmatprep.mubr.bf16.mxu0 0
  %351 = vmatmul.mubr.bf16.gmra.mxu0 %v75
  %v352 = vpop.f32.mrf.mxu0
  %v353 = vadd.f32 %v302, %v352
  %v354 = vpop.f32.mrf.mxu0
  %v355 = vpop.f32.mrf.mxu0
  %v356 = vadd.f32 %v302, %v355
  %v357 = vpop.f32.mrf.mxu0
  %358 = vdwg.mxu0
  %v359 = vpack.c.bf16 %v348, %v345
  %v360 = vpack.c.bf16 %v356, %v353
  %v363 = vunpack.c.l.b16 %v359
  %v364 = vunpack.c.h.b16 %v359
  %v365 = vunpack.c.l.b16 %v360
  %v366 = vunpack.c.h.b16 %v360
  %v367 = vpack.c.b16 %v363, %v363
  %v368 = vpack.c.b16 %v364, %v364
  %v369 = vpack.c.b16 %v365, %v365
  %v370 = vpack.c.b16 %v366, %v366
  %vm375 = vcmask 125952
  %376 = vst.msk [vmem:[%s14] sm:$0xf] %vm375, %v367
  %377 = vst.msk [vmem:[%s14 + $0x4] sm:$0xf] %vm375, %v368
  %378 = vst.msk [vmem:[%s14 + $0x8] sm:$0xf] %vm375, %v369
  %379 = vst.msk [vmem:[%s14 + $0xc] sm:$0xf] %vm375, %v370
  %v380 = vld [vmem:[%s9] sm:$0xf]
  %v381 = vld [vmem:[%s9 + $0x4] sm:$0xf]
  %v382 = vld [vmem:[%s10] sm:$0x1]
  %v384 = vlaneseq
  %v385 = vshrl.u32 %v384, 7
  %v386 = vsub.s32 0, %v385
  %v387 = vrot.slane %v382, %v386
  %v391 = vunpack.c.l.b16 %v380
  %v392 = vunpack.c.l.b16 %v381
  %v393 = vpack.c.b16 %v392, %v391
  %395 = vmatprep.subr.bf16.mxu0 0
  %396 = vmatpush1.bf16.msra.mxu0 0
  %397 = vmatprep.subr.bf16.mxu0 0
  %398 = vmatpush1.bf16.msra.mxu0 0
  %399 = vmatprep.subr.bf16.mxu0 0
  %400 = vmatpush1.bf16.msra.mxu0 0
  %401 = vmatprep.subr.bf16.mxu0 0
  %402 = vmatpush1.bf16.msra.mxu0 0
  %403 = vmatprep.subr.bf16.mxu0 0
  %404 = vmatpush1.bf16.msra.mxu0 0
  %405 = vmatprep.subr.bf16.mxu0 0
  %406 = vmatpush1.bf16.msra.mxu0 0
  %407 = vmatprep.subr.bf16.mxu0 0
  %408 = vmatpush1.bf16.msra.mxu0 0
  %409 = vmatprep.subr.bf16.mxu0 0
  %410 = vmatpush1.bf16.msra.mxu0 %v393
  %411 = vmatprep.subr.bf16.mxu0 0
  %412 = vmatpush2.bf16.msra.mxu0 0
  %413 = vmatprep.subr.bf16.mxu0 0
  %414 = vmatpush2.bf16.msra.mxu0 0
  %415 = vmatprep.subr.bf16.mxu0 0
  %416 = vmatpush2.bf16.msra.mxu0 0
  %417 = vmatprep.subr.bf16.mxu0 0
  %418 = vmatpush2.bf16.msra.mxu0 0
  %419 = vmatprep.subr.bf16.mxu0 0
  %420 = vmatpush2.bf16.msra.mxu0 0
  %421 = vmatprep.subr.bf16.mxu0 0
  %422 = vmatpush2.bf16.msra.mxu0 0
  %423 = vmatprep.subr.bf16.mxu0 0
  %424 = vmatpush2.bf16.msra.mxu0 0
  %425 = vmatprep.subr.bf16.mxu0 0
  %426 = vmatpush2.bf16.msra.mxu0 0
  %427 = vmatprep.mubr.bf16.mxu0 0
  %428 = vmatmul.mubr.bf16.gmra.mxu0 %v72
  %v429 = vpop.f32.mrf.mxu0
  %v430 = vadd.f32 %v387, %v429
  %v431 = vpop.f32.mrf.mxu0
  %v432 = vpop.f32.mrf.mxu0
  %v433 = vadd.f32 %v387, %v432
  %v434 = vpop.f32.mrf.mxu0
  %435 = vmatprep.mubr.bf16.mxu0 0
  %436 = vmatmul.mubr.bf16.gmra.mxu0 %v75
  %v437 = vpop.f32.mrf.mxu0
  %v438 = vadd.f32 %v387, %v437
  %v439 = vpop.f32.mrf.mxu0
  %v440 = vpop.f32.mrf.mxu0
  %v441 = vadd.f32 %v387, %v440
  %v442 = vpop.f32.mrf.mxu0
  %443 = vdwg.mxu0
  %v444 = vpack.c.bf16 %v433, %v430
  %v445 = vpack.c.bf16 %v441, %v438
  %v448 = vunpack.c.l.b16 %v444
  %v449 = vunpack.c.h.b16 %v444
  %v450 = vunpack.c.l.b16 %v445
  %v451 = vunpack.c.h.b16 %v445
  %v452 = vpack.c.b16 %v448, %v448
  %v453 = vpack.c.b16 %v449, %v449
  %v454 = vpack.c.b16 %v450, %v450
  %v455 = vpack.c.b16 %v451, %v451
  %460 = vst.msk [vmem:[%s15] sm:$0xf] %vm375, %v452
  %461 = vst.msk [vmem:[%s15 + $0x4] sm:$0xf] %vm375, %v453
  %462 = vst.msk [vmem:[%s15 + $0x8] sm:$0xf] %vm375, %v454
  %463 = vst.msk [vmem:[%s15 + $0xc] sm:$0xf] %vm375, %v455
  %v464 = vld [vmem:[%s11] sm:$0xf]
  %v465 = vld [vmem:[%s11 + $0x4] sm:$0xf]
  %v466 = vld [vmem:[%s11 + $0x8] sm:$0xf]
  %v467 = vld [vmem:[%s11 + $0xc] sm:$0xf]
  %v468 = vld [vmem:[%s12] sm:$0x1]
  %v470 = vlaneseq
  %v471 = vshrl.u32 %v470, 7
  %v472 = vsub.s32 0, %v471
  %v473 = vrot.slane %v468, %v472
  %v479 = vunpack.c.l.b16 %v464
  %v480 = vunpack.c.l.b16 %v465
  %v481 = vunpack.c.l.b16 %v466
  %v482 = vunpack.c.l.b16 %v467
  %v483 = vpack.c.b16 %v480, %v479
  %v484 = vpack.c.b16 %v482, %v481
  %vm487 = vcmask 261120
  %v489 = vsel %vm487, %v274, 0
  %v492 = vsel %vm487, %v275, 0
  %494 = vmatprep.subr.bf16.mxu0 0
  %495 = vmatpush1.bf16.msra.mxu0 0
  %496 = vmatprep.subr.bf16.mxu0 0
  %497 = vmatpush1.bf16.msra.mxu0 0
  %498 = vmatprep.subr.bf16.mxu0 0
  %499 = vmatpush1.bf16.msra.mxu0 0
  %500 = vmatprep.subr.bf16.mxu0 0
  %501 = vmatpush1.bf16.msra.mxu0 0
  %502 = vmatprep.subr.bf16.mxu0 0
  %503 = vmatpush1.bf16.msra.mxu0 0
  %504 = vmatprep.subr.bf16.mxu0 0
  %505 = vmatpush1.bf16.msra.mxu0 0
  %506 = vmatprep.subr.bf16.mxu0 0
  %507 = vmatpush1.bf16.msra.mxu0 %v484
  %508 = vmatprep.subr.bf16.mxu0 0
  %509 = vmatpush1.bf16.msra.mxu0 %v483
  %510 = vmatprep.subr.bf16.mxu0 0
  %511 = vmatpush2.bf16.msra.mxu0 0
  %512 = vmatprep.subr.bf16.mxu0 0
  %513 = vmatpush2.bf16.msra.mxu0 0
  %514 = vmatprep.subr.bf16.mxu0 0
  %515 = vmatpush2.bf16.msra.mxu0 0
  %516 = vmatprep.subr.bf16.mxu0 0
  %517 = vmatpush2.bf16.msra.mxu0 0
  %518 = vmatprep.subr.bf16.mxu0 0
  %519 = vmatpush2.bf16.msra.mxu0 0
  %520 = vmatprep.subr.bf16.mxu0 0
  %521 = vmatpush2.bf16.msra.mxu0 0
  %522 = vmatprep.subr.bf16.mxu0 0
  %523 = vmatpush2.bf16.msra.mxu0 0
  %524 = vmatprep.subr.bf16.mxu0 0
  %525 = vmatpush2.bf16.msra.mxu0 0
  %526 = vmatprep.mubr.bf16.mxu0 0
  %527 = vmatmul.mubr.bf16.gmra.mxu0 %v489
  %v528 = vpop.f32.mrf.mxu0
  %v529 = vadd.f32 %v473, %v528
  %v530 = vpop.f32.mrf.mxu0
  %v531 = vpop.f32.mrf.mxu0
  %v532 = vadd.f32 %v473, %v531
  %v533 = vpop.f32.mrf.mxu0
  %534 = vmatprep.mubr.bf16.mxu0 0
  %535 = vmatmul.mubr.bf16.gmra.mxu0 %v492
  %v536 = vpop.f32.mrf.mxu0
  %v537 = vadd.f32 %v473, %v536
  %v538 = vpop.f32.mrf.mxu0
  %v539 = vpop.f32.mrf.mxu0
  %v540 = vadd.f32 %v473, %v539
  %v541 = vpop.f32.mrf.mxu0
  %542 = vdwg.mxu0
  %v543 = vpack.c.bf16 %v532, %v529
  %v544 = vpack.c.bf16 %v540, %v537
  %v547 = vunpack.c.l.b16 %v543
  %v548 = vunpack.c.h.b16 %v543
  %v549 = vunpack.c.l.b16 %v544
  %v550 = vunpack.c.h.b16 %v544
  %v551 = vpack.c.b16 %v547, %v547
  %v552 = vpack.c.b16 %v548, %v548
  %v553 = vpack.c.b16 %v549, %v549
  %v554 = vpack.c.b16 %v550, %v550
  %559 = vst.msk [vmem:[%s16] sm:$0xf] %vm375, %v551
  %560 = vst.msk [vmem:[%s16 + $0x4] sm:$0xf] %vm375, %v552
  %561 = vst.msk [vmem:[%s16 + $0x8] sm:$0xf] %vm375, %v553
  %562 = vst.msk [vmem:[%s16 + $0xc] sm:$0xf] %vm375, %v554
  // Predicated region
  $region54: #{pallas_forward.3} parent=0 // pred_check
    _
  $region55: #{pallas_forward.3} parent=0 // pred_check_branch
    %564 = sbr.rel (0) target = $region57
  $region56: #{pallas_forward.3} parent=0 // pred_region
    _
  $region57: #{pallas_forward.3} parent=0 // pred_fallthru
    _
  // Predicated region
  $region58: #{pallas_forward.3} parent=0 // pred_check
    _
  $region59: #{pallas_forward.3} parent=0 // pred_check_branch
    %566 = sbr.rel (0) target = $region61
  $region60: #{pallas_forward.3} parent=0 // pred_region
    _
  $region61: #{pallas_forward.3} parent=0 // pred_fallthru
    _
  // Predicated region
  $region62: #{pallas_forward.3} parent=0 // pred_check
    _
  $region63: #{pallas_forward.3} parent=0 // pred_check_branch
    %568 = sbr.rel (0) target = $region65
  $region64: #{pallas_forward.3} parent=0 // pred_region
    _
  $region65: #{pallas_forward.3} parent=0 // pred_fallthru
    _
  // Predicated region
  $region66: #{pallas_forward.3} parent=0 // pred_check
    _
  $region67: #{pallas_forward.3} parent=0 // pred_check_branch
    %570 = sbr.rel (0) target = $region69
  $region68: #{pallas_forward.3} parent=0 // pred_region
    _
  $region69: #{pallas_forward.3} parent=0 // pred_fallthru
    _
  // Predicated region
  $region70: #{pallas_forward.3} parent=0 // pred_check
    _
  $region71: #{pallas_forward.3} parent=0 // pred_check_branch
    %572 = sbr.rel (0) target = $region73
  $region72: #{pallas_forward.3} parent=0 // pred_region
    _
  $region73: #{pallas_forward.3} parent=0 // pred_fallthru
    _
  // Predicated region
  $region74: #{pallas_forward.3} parent=0 // pred_check
    _
  $region75: #{pallas_forward.3} parent=0 // pred_check_branch
    %574 = sbr.rel (0) target = $region77
  $region76: #{pallas_forward.3} parent=0 // pred_region
    _
  $region77: #{pallas_forward.3} parent=0 // pred_fallthru
    _
  // Predicated region
  $region78: #{pallas_forward.3} parent=0 // pred_check
    _
  $region79: #{pallas_forward.3} parent=0 // pred_check_branch
    %576 = sbr.rel (0) target = $region81
  $region80: #{pallas_forward.3} parent=0 // pred_region
    _
  $region81: #{pallas_forward.3} parent=0 // pred_fallthru
    _
  // Predicated region
  $region82: #{pallas_forward.3} parent=0 // pred_check
    _
  $region83: #{pallas_forward.3} parent=0 // pred_check_branch
    %578 = sbr.rel (0) target = $region85
  $region84: #{pallas_forward.3} parent=0 // pred_region
    _
  $region85: #{pallas_forward.3} parent=0 // pred_fallthru
    _

// kernel: tile.8
$region0: #{tile.8}
  #allocation0 [shape = 's32[1]{0}', space=sflag, size = 0x4, scoped, tag = 'scoped memory for tile.8']
  %s0 = inlined_call_operand.vmem [shape: f32[32], index: 0, kind: input, shape index: {}]
  %s1 = inlined_call_operand.vmem [shape: f32[2,32], index: 1, kind: output, shape index: {}]
  // Predicated region
  $region2: #{tile.8} parent=0 // pred_check
    _
  $region3: #{tile.8} parent=0 // pred_check_branch
    %3 = sbr.rel (0) target = $region5
  $region4: #{tile.8} parent=0 // pred_region
    _
  $region5: #{tile.8} parent=0 // pred_fallthru
    _
  %v4 = vld [vmem:[%s0] ss:$0 sm:$0xff]
  %5 = vst [vmem:[%s1] sm:$0x3] %v4

// kernel: tile.9
$region0: #{tile.9}
  %s0 = inlined_call_operand.vmem [shape: f32[2,32], index: 0, kind: input, shape index: {}]
  %s1 = inlined_call_operand.vmem [shape: f32[1,64], index: 1, kind: output, shape index: {}]
  $region1: #{tile.9} parent=0
    #allocation0 [shape = 'u8[4096]{0}', space=vmem, size = 0x1000, scoped, tag = 'scoped mem for output reshape']
    #allocation1 [shape = 'u8[4096]{0}', space=vmem, size = 0x1000, scoped, tag = 'scoped mem for input reshape']
    %s3 = sshll.u32 1, 2
    %s4 = ssub.s32 %s3, 1
    %v5 = vld [vmem:[%s0] sm:%s4]
    %6 = vst [vmem:[#allocation1] sm:%s4] %v5
    %v7 = vld [vmem:[#allocation1] sm:$0x1]
    %vm8 = vcmask 261120
    %9 = vst.msk [vmem:[#allocation0] sm:$0x1] %vm8, %v7
    %s10 = scalar_lea.vmem [#allocation1], 1
    %v11 = vld [vmem:[%s10] sm:$0x1]
    %12 = vrot.lane.b32.xlu0 %v11, 32
    %v13 = vpop.permute.xlu0 %12
    %vm14 = vcmask 523520
    %15 = vst.msk [vmem:[#allocation0] sm:$0x1] %vm14, %v13
    %s17 = sshll.u32 1, 1
    %s18 = ssub.s32 %s17, 1
    %v20 = vld [vmem:[#allocation0] sm:%s18]
    %s21 = sshll.u32 1, 1
    %s22 = ssub.s32 %s21, 1
    %23 = vst [vmem:[%s1] sm:%s22] %v20

// kernel: pallas_forward.4
$region0: #{pallas_forward.4}
  #allocation0 [shape = 'u32[]', space=smem, size = 0x4, offset = 0x4, fixed_abs, tag = 'smem constant byte address 0x4 - core index']
  #allocation1 [shape = 'u32[144,128]{1,0:T(1,128)}', space=vmem, size = 0x12000, scoped, tag = 'internal scratch']
  %s0 = inlined_call_operand.vmem [shape: bf16[32,16], index: 0, kind: input, shape index: {}]
  %s1 = inlined_call_operand.vmem [shape: bf16[32,8,16], index: 1, kind: input, shape index: {}]
  %s2 = inlined_call_operand.vmem [shape: bf16[32,8,16], index: 2, kind: input, shape index: {}]
  %s3 = inlined_call_operand.vmem [shape: f32[32,8,3], index: 3, kind: input, shape index: {}]
  %s4 = inlined_call_operand.vmem [shape: bf16[32,32], index: 4, kind: input, shape index: {}]
  %s5 = inlined_call_operand.vmem [shape: bf16[3,64], index: 5, kind: input, shape index: {}]
  %s6 = inlined_call_operand.vmem [shape: f32[1,64], index: 6, kind: input, shape index: {}]
  %s7 = inlined_call_operand.vmem [shape: bf16[64,16], index: 7, kind: input, shape index: {}]
  %s8 = inlined_call_operand.vmem [shape: f32[1,16], index: 8, kind: input, shape index: {}]
  %s9 = inlined_call_operand.vmem [shape: bf16[16,64], index: 9, kind: input, shape index: {}]
  %s10 = inlined_call_operand.vmem [shape: f32[1,64], index: 10, kind: input, shape index: {}]
  %s11 = inlined_call_operand.vmem [shape: bf16[64,32], index: 11, kind: input, shape index: {}]
  %s12 = inlined_call_operand.vmem [shape: f32[1,32], index: 12, kind: input, shape index: {}]
  %s13 = inlined_call_operand.vmem [shape: bf16[32,64], index: 13, kind: input, shape index: {}]
  %s14 = inlined_call_operand.vmem [shape: f32[1,64], index: 14, kind: input, shape index: {}]
  %s15 = inlined_call_operand.vmem [shape: bf16[32,64], index: 15, kind: output, shape index: {}]
  %s16 = sld [smem:[#allocation0]]
  $region70: #{pallas_forward.4} parent=0
    _
  %s18 = ssub.s32 1, %s16
  %s19 = scalar_select 0, %s18, %s16
  // Predicated region
  $region2: #{pallas_forward.4} parent=0 // pred_check
    _
  $region3: #{pallas_forward.4} parent=0 // pred_check_branch
    %21 = sbr.rel (0) target = $region5
  $region4: #{pallas_forward.4} parent=0 // pred_region
    _
  $region5: #{pallas_forward.4} parent=0 // pred_fallthru
    _
  // Predicated region
  $region6: #{pallas_forward.4} parent=0 // pred_check
    _
  $region7: #{pallas_forward.4} parent=0 // pred_check_branch
    %23 = sbr.rel (0) target = $region9
  $region8: #{pallas_forward.4} parent=0 // pred_region
    _
  $region9: #{pallas_forward.4} parent=0 // pred_fallthru
    _
  // Predicated region
  $region10: #{pallas_forward.4} parent=0 // pred_check
    _
  $region11: #{pallas_forward.4} parent=0 // pred_check_branch
    %25 = sbr.rel (0) target = $region13
  $region12: #{pallas_forward.4} parent=0 // pred_region
    _
  $region13: #{pallas_forward.4} parent=0 // pred_fallthru
    _
  // Predicated region
  $region14: #{pallas_forward.4} parent=0 // pred_check
    _
  $region15: #{pallas_forward.4} parent=0 // pred_check_branch
    %27 = sbr.rel (0) target = $region17
  $region16: #{pallas_forward.4} parent=0 // pred_region
    _
  $region17: #{pallas_forward.4} parent=0 // pred_fallthru
    _
  // Predicated region
  $region18: #{pallas_forward.4} parent=0 // pred_check
    _
  $region19: #{pallas_forward.4} parent=0 // pred_check_branch
    %29 = sbr.rel (0) target = $region21
  $region20: #{pallas_forward.4} parent=0 // pred_region
    _
  $region21: #{pallas_forward.4} parent=0 // pred_fallthru
    _
  // Predicated region
  $region22: #{pallas_forward.4} parent=0 // pred_check
    _
  $region23: #{pallas_forward.4} parent=0 // pred_check_branch
    %31 = sbr.rel (0) target = $region25
  $region24: #{pallas_forward.4} parent=0 // pred_region
    _
  $region25: #{pallas_forward.4} parent=0 // pred_fallthru
    _
  // Predicated region
  $region26: #{pallas_forward.4} parent=0 // pred_check
    _
  $region27: #{pallas_forward.4} parent=0 // pred_check_branch
    %33 = sbr.rel (0) target = $region29
  $region28: #{pallas_forward.4} parent=0 // pred_region
    _
  $region29: #{pallas_forward.4} parent=0 // pred_fallthru
    _
  // Predicated region
  $region30: #{pallas_forward.4} parent=0 // pred_check
    _
  $region31: #{pallas_forward.4} parent=0 // pred_check_branch
    %35 = sbr.rel (0) target = $region33
  $region32: #{pallas_forward.4} parent=0 // pred_region
    _
  $region33: #{pallas_forward.4} parent=0 // pred_fallthru
    _
  // Predicated region
  $region34: #{pallas_forward.4} parent=0 // pred_check
    _
  $region35: #{pallas_forward.4} parent=0 // pred_check_branch
    %37 = sbr.rel (0) target = $region37
  $region36: #{pallas_forward.4} parent=0 // pred_region
    _
  $region37: #{pallas_forward.4} parent=0 // pred_fallthru
    _
  // Predicated region
  $region38: #{pallas_forward.4} parent=0 // pred_check
    _
  $region39: #{pallas_forward.4} parent=0 // pred_check_branch
    %39 = sbr.rel (0) target = $region41
  $region40: #{pallas_forward.4} parent=0 // pred_region
    _
  $region41: #{pallas_forward.4} parent=0 // pred_fallthru
    _
  // Predicated region
  $region42: #{pallas_forward.4} parent=0 // pred_check
    _
  $region43: #{pallas_forward.4} parent=0 // pred_check_branch
    %41 = sbr.rel (0) target = $region45
  $region44: #{pallas_forward.4} parent=0 // pred_region
    _
  $region45: #{pallas_forward.4} parent=0 // pred_fallthru
    _
  // Predicated region
  $region46: #{pallas_forward.4} parent=0 // pred_check
    _
  $region47: #{pallas_forward.4} parent=0 // pred_check_branch
    %43 = sbr.rel (0) target = $region49
  $region48: #{pallas_forward.4} parent=0 // pred_region
    _
  $region49: #{pallas_forward.4} parent=0 // pred_fallthru
    _
  // Predicated region
  $region50: #{pallas_forward.4} parent=0 // pred_check
    _
  $region51: #{pallas_forward.4} parent=0 // pred_check_branch
    %45 = sbr.rel (0) target = $region53
  $region52: #{pallas_forward.4} parent=0 // pred_region
    _
  $region53: #{pallas_forward.4} parent=0 // pred_fallthru
    _
  // Predicated region
  $region54: #{pallas_forward.4} parent=0 // pred_check
    _
  $region55: #{pallas_forward.4} parent=0 // pred_check_branch
    %47 = sbr.rel (0) target = $region57
  $region56: #{pallas_forward.4} parent=0 // pred_region
    _
  $region57: #{pallas_forward.4} parent=0 // pred_fallthru
    _
  // Predicated region
  $region58: #{pallas_forward.4} parent=0 // pred_check
    _
  $region59: #{pallas_forward.4} parent=0 // pred_check_branch
    %49 = sbr.rel (0) target = $region61
  $region60: #{pallas_forward.4} parent=0 // pred_region
    _
  $region61: #{pallas_forward.4} parent=0 // pred_fallthru
    _
  %v51 = vld [vmem:[%s3] sm:$0xff]
  %v52 = vld [vmem:[%s3 + $0x8] sm:$0xff]
  %v53 = vld [vmem:[%s3 + $0x10] sm:$0xff]
  %v54 = vld [vmem:[%s3 + $0x18] sm:$0xff]
  %v55 = vld [vmem:[%s3 + $0x20] sm:$0xff]
  %v56 = vld [vmem:[%s3 + $0x28] sm:$0xff]
  %v57 = vld [vmem:[%s3 + $0x30] sm:$0xff]
  %v58 = vld [vmem:[%s3 + $0x38] sm:$0xff]
  %v59 = vld [vmem:[%s3 + $0x40] sm:$0xff]
  %v60 = vld [vmem:[%s3 + $0x48] sm:$0xff]
  %v61 = vld [vmem:[%s3 + $0x50] sm:$0xff]
  %v62 = vld [vmem:[%s3 + $0x58] sm:$0xff]
  %v63 = vld [vmem:[%s3 + $0x60] sm:$0xff]
  %v64 = vld [vmem:[%s3 + $0x68] sm:$0xff]
  %v65 = vld [vmem:[%s3 + $0x70] sm:$0xff]
  %v66 = vld [vmem:[%s3 + $0x78] sm:$0xff]
  %v67 = vld [vmem:[%s3 + $0x80] sm:$0xff]
  %v68 = vld [vmem:[%s3 + $0x88] sm:$0xff]
  %v69 = vld [vmem:[%s3 + $0x90] sm:$0xff]
  %v70 = vld [vmem:[%s3 + $0x98] sm:$0xff]
  %v71 = vld [vmem:[%s3 + $0xa0] sm:$0xff]
  %v72 = vld [vmem:[%s3 + $0xa8] sm:$0xff]
  %v73 = vld [vmem:[%s3 + $0xb0] sm:$0xff]
  %v74 = vld [vmem:[%s3 + $0xb8] sm:$0xff]
  %v75 = vld [vmem:[%s3 + $0xc0] sm:$0xff]
  %v76 = vld [vmem:[%s3 + $0xc8] sm:$0xff]
  %v77 = vld [vmem:[%s3 + $0xd0] sm:$0xff]
  %v78 = vld [vmem:[%s3 + $0xd8] sm:$0xff]
  %v79 = vld [vmem:[%s3 + $0xe0] sm:$0xff]
  %v80 = vld [vmem:[%s3 + $0xe8] sm:$0xff]
  %v81 = vld [vmem:[%s3 + $0xf0] sm:$0xff]
  %v82 = vld [vmem:[%s3 + $0xf8] sm:$0xff]
  %v83 = vpack.c.bf16 %v52, %v51
  %v84 = vpack.c.bf16 %v54, %v53
  %v85 = vpack.c.bf16 %v56, %v55
  %v86 = vpack.c.bf16 %v58, %v57
  %v87 = vpack.c.bf16 %v60, %v59
  %v88 = vpack.c.bf16 %v62, %v61
  %v89 = vpack.c.bf16 %v64, %v63
  %v90 = vpack.c.bf16 %v66, %v65
  %v91 = vpack.c.bf16 %v68, %v67
  %v92 = vpack.c.bf16 %v70, %v69
  %v93 = vpack.c.bf16 %v72, %v71
  %v94 = vpack.c.bf16 %v74, %v73
  %v95 = vpack.c.bf16 %v76, %v75
  %v96 = vpack.c.bf16 %v78, %v77
  %v97 = vpack.c.bf16 %v80, %v79
  %v98 = vpack.c.bf16 %v82, %v81
  %v99 = vunpack.c.l.bf16 %v83
  %v100 = vunpack.c.h.bf16 %v83
  %v101 = vunpack.c.l.bf16 %v84
  %v102 = vunpack.c.h.bf16 %v84
  %v103 = vunpack.c.l.bf16 %v85
  %v104 = vunpack.c.h.bf16 %v85
  %v105 = vunpack.c.l.bf16 %v86
  %v106 = vunpack.c.h.bf16 %v86
  %v107 = vunpack.c.l.bf16 %v87
  %v108 = vunpack.c.h.bf16 %v87
  %v109 = vunpack.c.l.bf16 %v88
  %v110 = vunpack.c.h.bf16 %v88
  %v111 = vunpack.c.l.bf16 %v89
  %v112 = vunpack.c.h.bf16 %v89
  %v113 = vunpack.c.l.bf16 %v90
  %v114 = vunpack.c.h.bf16 %v90
  %v115 = vunpack.c.l.bf16 %v91
  %v116 = vunpack.c.h.bf16 %v91
  %v117 = vunpack.c.l.bf16 %v92
  %v118 = vunpack.c.h.bf16 %v92
  %v119 = vunpack.c.l.bf16 %v93
  %v120 = vunpack.c.h.bf16 %v93
  %v121 = vunpack.c.l.bf16 %v94
  %v122 = vunpack.c.h.bf16 %v94
  %v123 = vunpack.c.l.bf16 %v95
  %v124 = vunpack.c.h.bf16 %v95
  %v125 = vunpack.c.l.bf16 %v96
  %v126 = vunpack.c.h.bf16 %v96
  %v127 = vunpack.c.l.bf16 %v97
  %v128 = vunpack.c.h.bf16 %v97
  %v129 = vunpack.c.l.bf16 %v98
  %v130 = vunpack.c.h.bf16 %v98
  %v131 = vld [vmem:[%s5] sm:$0x3]
  %v132 = vunpack.c.l.bf16 %v131
  %v133 = vld [vmem:[%s6] sm:$0x1]
  %135 = vset.pattern.permute.xlu0 0
  %136 = vperm.xlu0 %135, %v99
  %v137 = vpop.permute.xlu0 %136
  %140 = vset.pattern.permute.xlu0 0
  %141 = vperm.xlu0 %140, %v100
  %v142 = vpop.permute.xlu0 %141
  %145 = vset.pattern.permute.xlu0 0
  %146 = vperm.xlu0 %145, %v101
  %v147 = vpop.permute.xlu0 %146
  %150 = vset.pattern.permute.xlu0 0
  %151 = vperm.xlu0 %150, %v102
  %v152 = vpop.permute.xlu0 %151
  %155 = vset.pattern.permute.xlu0 0
  %156 = vperm.xlu0 %155, %v103
  %v157 = vpop.permute.xlu0 %156
  %160 = vset.pattern.permute.xlu0 0
  %161 = vperm.xlu0 %160, %v104
  %v162 = vpop.permute.xlu0 %161
  %165 = vset.pattern.permute.xlu0 0
  %166 = vperm.xlu0 %165, %v105
  %v167 = vpop.permute.xlu0 %166
  %170 = vset.pattern.permute.xlu0 0
  %171 = vperm.xlu0 %170, %v106
  %v172 = vpop.permute.xlu0 %171
  %175 = vset.pattern.permute.xlu0 0
  %176 = vperm.xlu0 %175, %v107
  %v177 = vpop.permute.xlu0 %176
  %180 = vset.pattern.permute.xlu0 0
  %181 = vperm.xlu0 %180, %v108
  %v182 = vpop.permute.xlu0 %181
  %185 = vset.pattern.permute.xlu0 0
  %186 = vperm.xlu0 %185, %v109
  %v187 = vpop.permute.xlu0 %186
  %190 = vset.pattern.permute.xlu0 0
  %191 = vperm.xlu0 %190, %v110
  %v192 = vpop.permute.xlu0 %191
  %195 = vset.pattern.permute.xlu0 0
  %196 = vperm.xlu0 %195, %v111
  %v197 = vpop.permute.xlu0 %196
  %200 = vset.pattern.permute.xlu0 0
  %201 = vperm.xlu0 %200, %v112
  %v202 = vpop.permute.xlu0 %201
  %205 = vset.pattern.permute.xlu0 0
  %206 = vperm.xlu0 %205, %v113
  %v207 = vpop.permute.xlu0 %206
  %210 = vset.pattern.permute.xlu0 0
  %211 = vperm.xlu0 %210, %v114
  %v212 = vpop.permute.xlu0 %211
  %215 = vset.pattern.permute.xlu0 0
  %216 = vperm.xlu0 %215, %v115
  %v217 = vpop.permute.xlu0 %216
  %220 = vset.pattern.permute.xlu0 0
  %221 = vperm.xlu0 %220, %v116
  %v222 = vpop.permute.xlu0 %221
  %225 = vset.pattern.permute.xlu0 0
  %226 = vperm.xlu0 %225, %v117
  %v227 = vpop.permute.xlu0 %226
  %230 = vset.pattern.permute.xlu0 0
  %231 = vperm.xlu0 %230, %v118
  %v232 = vpop.permute.xlu0 %231
  %235 = vset.pattern.permute.xlu0 0
  %236 = vperm.xlu0 %235, %v119
  %v237 = vpop.permute.xlu0 %236
  %240 = vset.pattern.permute.xlu0 0
  %241 = vperm.xlu0 %240, %v120
  %v242 = vpop.permute.xlu0 %241
  %245 = vset.pattern.permute.xlu0 0
  %246 = vperm.xlu0 %245, %v121
  %v247 = vpop.permute.xlu0 %246
  %250 = vset.pattern.permute.xlu0 0
  %251 = vperm.xlu0 %250, %v122
  %v252 = vpop.permute.xlu0 %251
  %255 = vset.pattern.permute.xlu0 0
  %256 = vperm.xlu0 %255, %v123
  %v257 = vpop.permute.xlu0 %256
  %260 = vset.pattern.permute.xlu0 0
  %261 = vperm.xlu0 %260, %v124
  %v262 = vpop.permute.xlu0 %261
  %265 = vset.pattern.permute.xlu0 0
  %266 = vperm.xlu0 %265, %v125
  %v267 = vpop.permute.xlu0 %266
  %270 = vset.pattern.permute.xlu0 0
  %271 = vperm.xlu0 %270, %v126
  %v272 = vpop.permute.xlu0 %271
  %275 = vset.pattern.permute.xlu0 0
  %276 = vperm.xlu0 %275, %v127
  %v277 = vpop.permute.xlu0 %276
  %280 = vset.pattern.permute.xlu0 0
  %281 = vperm.xlu0 %280, %v128
  %v282 = vpop.permute.xlu0 %281
  %285 = vset.pattern.permute.xlu0 0
  %286 = vperm.xlu0 %285, %v129
  %v287 = vpop.permute.xlu0 %286
  %290 = vset.pattern.permute.xlu0 0
  %291 = vperm.xlu0 %290, %v130
  %v292 = vpop.permute.xlu0 %291
  %v294 = vlaneseq
  %v295 = vshrl.u32 %v294, 7
  %v296 = vsub.s32 0, %v295
  %v297 = vrot.slane %v132, %v296
  %v298 = vmul.f32 %v137, %v297
  %v299 = vmul.f32 %v142, %v297
  %v300 = vmul.f32 %v147, %v297
  %v301 = vmul.f32 %v152, %v297
  %v302 = vmul.f32 %v157, %v297
  %v303 = vmul.f32 %v162, %v297
  %v304 = vmul.f32 %v167, %v297
  %v305 = vmul.f32 %v172, %v297
  %v306 = vmul.f32 %v177, %v297
  %v307 = vmul.f32 %v182, %v297
  %v308 = vmul.f32 %v187, %v297
  %v309 = vmul.f32 %v192, %v297
  %v310 = vmul.f32 %v197, %v297
  %v311 = vmul.f32 %v202, %v297
  %v312 = vmul.f32 %v207, %v297
  %v313 = vmul.f32 %v212, %v297
  %v314 = vmul.f32 %v217, %v297
  %v315 = vmul.f32 %v222, %v297
  %v316 = vmul.f32 %v227, %v297
  %v317 = vmul.f32 %v232, %v297
  %v318 = vmul.f32 %v237, %v297
  %v319 = vmul.f32 %v242, %v297
  %v320 = vmul.f32 %v247, %v297
  %v321 = vmul.f32 %v252, %v297
  %v322 = vmul.f32 %v257, %v297
  %v323 = vmul.f32 %v262, %v297
  %v324 = vmul.f32 %v267, %v297
  %v325 = vmul.f32 %v272, %v297
  %v326 = vmul.f32 %v277, %v297
  %v327 = vmul.f32 %v282, %v297
  %v328 = vmul.f32 %v287, %v297
  %v329 = vmul.f32 %v292, %v297
  %v331 = vlaneseq
  %v332 = vshrl.u32 %v331, 7
  %v333 = vsub.s32 0, %v332
  %v334 = vrot.slane %v133, %v333
  %v336 = vadd.f32 %v334, %v298
  %v337 = vadd.f32 %v334, %v299
  %v338 = vadd.f32 %v334, %v300
  %v339 = vadd.f32 %v334, %v301
  %v340 = vadd.f32 %v334, %v302
  %v341 = vadd.f32 %v334, %v303
  %v342 = vadd.f32 %v334, %v304
  %v343 = vadd.f32 %v334, %v305
  %v344 = vadd.f32 %v334, %v306
  %v345 = vadd.f32 %v334, %v307
  %v346 = vadd.f32 %v334, %v308
  %v347 = vadd.f32 %v334, %v309
  %v348 = vadd.f32 %v334, %v310
  %v349 = vadd.f32 %v334, %v311
  %v350 = vadd.f32 %v334, %v312
  %v351 = vadd.f32 %v334, %v313
  %v352 = vadd.f32 %v334, %v314
  %v353 = vadd.f32 %v334, %v315
  %v354 = vadd.f32 %v334, %v316
  %v355 = vadd.f32 %v334, %v317
  %v356 = vadd.f32 %v334, %v318
  %v357 = vadd.f32 %v334, %v319
  %v358 = vadd.f32 %v334, %v320
  %v359 = vadd.f32 %v334, %v321
  %v360 = vadd.f32 %v334, %v322
  %v361 = vadd.f32 %v334, %v323
  %v362 = vadd.f32 %v334, %v324
  %v363 = vadd.f32 %v334, %v325
  %v364 = vadd.f32 %v334, %v326
  %v365 = vadd.f32 %v334, %v327
  %v366 = vadd.f32 %v334, %v328
  %v367 = vadd.f32 %v334, %v329
  %368 = vset.pattern.permute.xlu0 1
  %369 = vperm.xlu0 %368, %v99
  %v370 = vpop.permute.xlu0 %369
  %372 = vset.pattern.permute.xlu0 1
  %373 = vperm.xlu0 %372, %v100
  %v374 = vpop.permute.xlu0 %373
  %376 = vset.pattern.permute.xlu0 1
  %377 = vperm.xlu0 %376, %v101
  %v378 = vpop.permute.xlu0 %377
  %380 = vset.pattern.permute.xlu0 1
  %381 = vperm.xlu0 %380, %v102
  %v382 = vpop.permute.xlu0 %381
  %384 = vset.pattern.permute.xlu0 1
  %385 = vperm.xlu0 %384, %v103
  %v386 = vpop.permute.xlu0 %385
  %388 = vset.pattern.permute.xlu0 1
  %389 = vperm.xlu0 %388, %v104
  %v390 = vpop.permute.xlu0 %389
  %392 = vset.pattern.permute.xlu0 1
  %393 = vperm.xlu0 %392, %v105
  %v394 = vpop.permute.xlu0 %393
  %396 = vset.pattern.permute.xlu0 1
  %397 = vperm.xlu0 %396, %v106
  %v398 = vpop.permute.xlu0 %397
  %400 = vset.pattern.permute.xlu0 1
  %401 = vperm.xlu0 %400, %v107
  %v402 = vpop.permute.xlu0 %401
  %404 = vset.pattern.permute.xlu0 1
  %405 = vperm.xlu0 %404, %v108
  %v406 = vpop.permute.xlu0 %405
  %408 = vset.pattern.permute.xlu0 1
  %409 = vperm.xlu0 %408, %v109
  %v410 = vpop.permute.xlu0 %409
  %412 = vset.pattern.permute.xlu0 1
  %413 = vperm.xlu0 %412, %v110
  %v414 = vpop.permute.xlu0 %413
  %416 = vset.pattern.permute.xlu0 1
  %417 = vperm.xlu0 %416, %v111
  %v418 = vpop.permute.xlu0 %417
  %420 = vset.pattern.permute.xlu0 1
  %421 = vperm.xlu0 %420, %v112
  %v422 = vpop.permute.xlu0 %421
  %424 = vset.pattern.permute.xlu0 1
  %425 = vperm.xlu0 %424, %v113
  %v426 = vpop.permute.xlu0 %425
  %428 = vset.pattern.permute.xlu0 1
  %429 = vperm.xlu0 %428, %v114
  %v430 = vpop.permute.xlu0 %429
  %432 = vset.pattern.permute.xlu0 1
  %433 = vperm.xlu0 %432, %v115
  %v434 = vpop.permute.xlu0 %433
  %436 = vset.pattern.permute.xlu0 1
  %437 = vperm.xlu0 %436, %v116
  %v438 = vpop.permute.xlu0 %437
  %440 = vset.pattern.permute.xlu0 1
  %441 = vperm.xlu0 %440, %v117
  %v442 = vpop.permute.xlu0 %441
  %444 = vset.pattern.permute.xlu0 1
  %445 = vperm.xlu0 %444, %v118
  %v446 = vpop.permute.xlu0 %445
  %448 = vset.pattern.permute.xlu0 1
  %449 = vperm.xlu0 %448, %v119
  %v450 = vpop.permute.xlu0 %449
  %452 = vset.pattern.permute.xlu0 1
  %453 = vperm.xlu0 %452, %v120
  %v454 = vpop.permute.xlu0 %453
  %456 = vset.pattern.permute.xlu0 1
  %457 = vperm.xlu0 %456, %v121
  %v458 = vpop.permute.xlu0 %457
  %460 = vset.pattern.permute.xlu0 1
  %461 = vperm.xlu0 %460, %v122
  %v462 = vpop.permute.xlu0 %461
  %464 = vset.pattern.permute.xlu0 1
  %465 = vperm.xlu0 %464, %v123
  %v466 = vpop.permute.xlu0 %465
  %468 = vset.pattern.permute.xlu0 1
  %469 = vperm.xlu0 %468, %v124
  %v470 = vpop.permute.xlu0 %469
  %472 = vset.pattern.permute.xlu0 1
  %473 = vperm.xlu0 %472, %v125
  %v474 = vpop.permute.xlu0 %473
  %476 = vset.pattern.permute.xlu0 1
  %477 = vperm.xlu0 %476, %v126
  %v478 = vpop.permute.xlu0 %477
  %480 = vset.pattern.permute.xlu0 1
  %481 = vperm.xlu0 %480, %v127
  %v482 = vpop.permute.xlu0 %481
  %484 = vset.pattern.permute.xlu0 1
  %485 = vperm.xlu0 %484, %v128
  %v486 = vpop.permute.xlu0 %485
  %488 = vset.pattern.permute.xlu0 1
  %489 = vperm.xlu0 %488, %v129
  %v490 = vpop.permute.xlu0 %489
  %492 = vset.pattern.permute.xlu0 1
  %493 = vperm.xlu0 %492, %v130
  %v494 = vpop.permute.xlu0 %493
  %v496 = vlaneseq
  %v497 = vshrl.u32 %v496, 7
  %v498 = vsub.s32 1, %v497
  %v499 = vrot.slane %v132, %v498
  %v500 = vmul.f32 %v370, %v499
  %v501 = vmul.f32 %v374, %v499
  %v502 = vmul.f32 %v378, %v499
  %v503 = vmul.f32 %v382, %v499
  %v504 = vmul.f32 %v386, %v499
  %v505 = vmul.f32 %v390, %v499
  %v506 = vmul.f32 %v394, %v499
  %v507 = vmul.f32 %v398, %v499
  %v508 = vmul.f32 %v402, %v499
  %v509 = vmul.f32 %v406, %v499
  %v510 = vmul.f32 %v410, %v499
  %v511 = vmul.f32 %v414, %v499
  %v512 = vmul.f32 %v418, %v499
  %v513 = vmul.f32 %v422, %v499
  %v514 = vmul.f32 %v426, %v499
  %v515 = vmul.f32 %v430, %v499
  %v516 = vmul.f32 %v434, %v499
  %v517 = vmul.f32 %v438, %v499
  %v518 = vmul.f32 %v442, %v499
  %v519 = vmul.f32 %v446, %v499
  %v520 = vmul.f32 %v450, %v499
  %v521 = vmul.f32 %v454, %v499
  %v522 = vmul.f32 %v458, %v499
  %v523 = vmul.f32 %v462, %v499
  %v524 = vmul.f32 %v466, %v499
  %v525 = vmul.f32 %v470, %v499
  %v526 = vmul.f32 %v474, %v499
  %v527 = vmul.f32 %v478, %v499
  %v528 = vmul.f32 %v482, %v499
  %v529 = vmul.f32 %v486, %v499
  %v530 = vmul.f32 %v490, %v499
  %v531 = vmul.f32 %v494, %v499
  %v532 = vadd.f32 %v336, %v500
  %v533 = vadd.f32 %v337, %v501
  %v534 = vadd.f32 %v338, %v502
  %v535 = vadd.f32 %v339, %v503
  %v536 = vadd.f32 %v340, %v504
  %v537 = vadd.f32 %v341, %v505
  %v538 = vadd.f32 %v342, %v506
  %v539 = vadd.f32 %v343, %v507
  %v540 = vadd.f32 %v344, %v508
  %v541 = vadd.f32 %v345, %v509
  %v542 = vadd.f32 %v346, %v510
  %v543 = vadd.f32 %v347, %v511
  %v544 = vadd.f32 %v348, %v512
  %v545 = vadd.f32 %v349, %v513
  %v546 = vadd.f32 %v350, %v514
  %v547 = vadd.f32 %v351, %v515
  %v548 = vadd.f32 %v352, %v516
  %v549 = vadd.f32 %v353, %v517
  %v550 = vadd.f32 %v354, %v518
  %v551 = vadd.f32 %v355, %v519
  %v552 = vadd.f32 %v356, %v520
  %v553 = vadd.f32 %v357, %v521
  %v554 = vadd.f32 %v358, %v522
  %v555 = vadd.f32 %v359, %v523
  %v556 = vadd.f32 %v360, %v524
  %v557 = vadd.f32 %v361, %v525
  %v558 = vadd.f32 %v362, %v526
  %v559 = vadd.f32 %v363, %v527
  %v560 = vadd.f32 %v364, %v528
  %v561 = vadd.f32 %v365, %v529
  %v562 = vadd.f32 %v366, %v530
  %v563 = vadd.f32 %v367, %v531
  %564 = vset.pattern.permute.xlu0 2
  %565 = vperm.xlu0 %564, %v99
  %v566 = vpop.permute.xlu0 %565
  %568 = vset.pattern.permute.xlu0 2
  %569 = vperm.xlu0 %568, %v100
  %v570 = vpop.permute.xlu0 %569
  %572 = vset.pattern.permute.xlu0 2
  %573 = vperm.xlu0 %572, %v101
  %v574 = vpop.permute.xlu0 %573
  %576 = vset.pattern.permute.xlu0 2
  %577 = vperm.xlu0 %576, %v102
  %v578 = vpop.permute.xlu0 %577
  %580 = vset.pattern.permute.xlu0 2
  %581 = vperm.xlu0 %580, %v103
  %v582 = vpop.permute.xlu0 %581
  %584 = vset.pattern.permute.xlu0 2
  %585 = vperm.xlu0 %584, %v104
  %v586 = vpop.permute.xlu0 %585
  %588 = vset.pattern.permute.xlu0 2
  %589 = vperm.xlu0 %588, %v105
  %v590 = vpop.permute.xlu0 %589
  %592 = vset.pattern.permute.xlu0 2
  %593 = vperm.xlu0 %592, %v106
  %v594 = vpop.permute.xlu0 %593
  %596 = vset.pattern.permute.xlu0 2
  %597 = vperm.xlu0 %596, %v107
  %v598 = vpop.permute.xlu0 %597
  %600 = vset.pattern.permute.xlu0 2
  %601 = vperm.xlu0 %600, %v108
  %v602 = vpop.permute.xlu0 %601
  %604 = vset.pattern.permute.xlu0 2
  %605 = vperm.xlu0 %604, %v109
  %v606 = vpop.permute.xlu0 %605
  %608 = vset.pattern.permute.xlu0 2
  %609 = vperm.xlu0 %608, %v110
  %v610 = vpop.permute.xlu0 %609
  %612 = vset.pattern.permute.xlu0 2
  %613 = vperm.xlu0 %612, %v111
  %v614 = vpop.permute.xlu0 %613
  %616 = vset.pattern.permute.xlu0 2
  %617 = vperm.xlu0 %616, %v112
  %v618 = vpop.permute.xlu0 %617
  %620 = vset.pattern.permute.xlu0 2
  %621 = vperm.xlu0 %620, %v113
  %v622 = vpop.permute.xlu0 %621
  %624 = vset.pattern.permute.xlu0 2
  %625 = vperm.xlu0 %624, %v114
  %v626 = vpop.permute.xlu0 %625
  %628 = vset.pattern.permute.xlu0 2
  %629 = vperm.xlu0 %628, %v115
  %v630 = vpop.permute.xlu0 %629
  %632 = vset.pattern.permute.xlu0 2
  %633 = vperm.xlu0 %632, %v116
  %v634 = vpop.permute.xlu0 %633
  %636 = vset.pattern.permute.xlu0 2
  %637 = vperm.xlu0 %636, %v117
  %v638 = vpop.permute.xlu0 %637
  %640 = vset.pattern.permute.xlu0 2
  %641 = vperm.xlu0 %640, %v118
  %v642 = vpop.permute.xlu0 %641
  %644 = vset.pattern.permute.xlu0 2
  %645 = vperm.xlu0 %644, %v119
  %v646 = vpop.permute.xlu0 %645
  %648 = vset.pattern.permute.xlu0 2
  %649 = vperm.xlu0 %648, %v120
  %v650 = vpop.permute.xlu0 %649
  %652 = vset.pattern.permute.xlu0 2
  %653 = vperm.xlu0 %652, %v121
  %v654 = vpop.permute.xlu0 %653
  %656 = vset.pattern.permute.xlu0 2
  %657 = vperm.xlu0 %656, %v122
  %v658 = vpop.permute.xlu0 %657
  %660 = vset.pattern.permute.xlu0 2
  %661 = vperm.xlu0 %660, %v123
  %v662 = vpop.permute.xlu0 %661
  %664 = vset.pattern.permute.xlu0 2
  %665 = vperm.xlu0 %664, %v124
  %v666 = vpop.permute.xlu0 %665
  %668 = vset.pattern.permute.xlu0 2
  %669 = vperm.xlu0 %668, %v125
  %v670 = vpop.permute.xlu0 %669
  %672 = vset.pattern.permute.xlu0 2
  %673 = vperm.xlu0 %672, %v126
  %v674 = vpop.permute.xlu0 %673
  %676 = vset.pattern.permute.xlu0 2
  %677 = vperm.xlu0 %676, %v127
  %v678 = vpop.permute.xlu0 %677
  %680 = vset.pattern.permute.xlu0 2
  %681 = vperm.xlu0 %680, %v128
  %v682 = vpop.permute.xlu0 %681
  %684 = vset.pattern.permute.xlu0 2
  %685 = vperm.xlu0 %684, %v129
  %v686 = vpop.permute.xlu0 %685
  %688 = vset.pattern.permute.xlu0 2
  %689 = vperm.xlu0 %688, %v130
  %v690 = vpop.permute.xlu0 %689
  %v692 = vlaneseq
  %v693 = vshrl.u32 %v692, 7
  %v694 = vsub.s32 2, %v693
  %v695 = vrot.slane %v132, %v694
  %v696 = vmul.f32 %v566, %v695
  %v697 = vmul.f32 %v570, %v695
  %v698 = vmul.f32 %v574, %v695
  %v699 = vmul.f32 %v578, %v695
  %v700 = vmul.f32 %v582, %v695
  %v701 = vmul.f32 %v586, %v695
  %v702 = vmul.f32 %v590, %v695
  %v703 = vmul.f32 %v594, %v695
  %v704 = vmul.f32 %v598, %v695
  %v705 = vmul.f32 %v602, %v695
  %v706 = vmul.f32 %v606, %v695
  %v707 = vmul.f32 %v610, %v695
  %v708 = vmul.f32 %v614, %v695
  %v709 = vmul.f32 %v618, %v695
  %v710 = vmul.f32 %v622, %v695
  %v711 = vmul.f32 %v626, %v695
  %v712 = vmul.f32 %v630, %v695
  %v713 = vmul.f32 %v634, %v695
  %v714 = vmul.f32 %v638, %v695
  %v715 = vmul.f32 %v642, %v695
  %v716 = vmul.f32 %v646, %v695
  %v717 = vmul.f32 %v650, %v695
  %v718 = vmul.f32 %v654, %v695
  %v719 = vmul.f32 %v658, %v695
  %v720 = vmul.f32 %v662, %v695
  %v721 = vmul.f32 %v666, %v695
  %v722 = vmul.f32 %v670, %v695
  %v723 = vmul.f32 %v674, %v695
  %v724 = vmul.f32 %v678, %v695
  %v725 = vmul.f32 %v682, %v695
  %v726 = vmul.f32 %v686, %v695
  %v727 = vmul.f32 %v690, %v695
  %v728 = vadd.f32 %v532, %v696
  %v729 = vadd.f32 %v533, %v697
  %v730 = vadd.f32 %v534, %v698
  %v731 = vadd.f32 %v535, %v699
  %v732 = vadd.f32 %v536, %v700
  %v733 = vadd.f32 %v537, %v701
  %v734 = vadd.f32 %v538, %v702
  %v735 = vadd.f32 %v539, %v703
  %v736 = vadd.f32 %v540, %v704
  %v737 = vadd.f32 %v541, %v705
  %v738 = vadd.f32 %v542, %v706
  %v739 = vadd.f32 %v543, %v707
  %v740 = vadd.f32 %v544, %v708
  %v741 = vadd.f32 %v545, %v709
  %v742 = vadd.f32 %v546, %v710
  %v743 = vadd.f32 %v547, %v711
  %v744 = vadd.f32 %v548, %v712
  %v745 = vadd.f32 %v549, %v713
  %v746 = vadd.f32 %v550, %v714
  %v747 = vadd.f32 %v551, %v715
  %v748 = vadd.f32 %v552, %v716
  %v749 = vadd.f32 %v553, %v717
  %v750 = vadd.f32 %v554, %v718
  %v751 = vadd.f32 %v555, %v719
  %v752 = vadd.f32 %v556, %v720
  %v753 = vadd.f32 %v557, %v721
  %v754 = vadd.f32 %v558, %v722
  %v755 = vadd.f32 %v559, %v723
  %v756 = vadd.f32 %v560, %v724
  %v757 = vadd.f32 %v561, %v725
  %v758 = vadd.f32 %v562, %v726
  %v759 = vadd.f32 %v563, %v727
  %v760 = vmax.f32 %v728, 0.0
  %v761 = vmax.f32 %v729, 0.0
  %v762 = vmax.f32 %v730, 0.0
  %v763 = vmax.f32 %v731, 0.0
  %v764 = vmax.f32 %v732, 0.0
  %v765 = vmax.f32 %v733, 0.0
  %v766 = vmax.f32 %v734, 0.0
  %v767 = vmax.f32 %v735, 0.0
  %v768 = vmax.f32 %v736, 0.0
  %v769 = vmax.f32 %v737, 0.0
  %v770 = vmax.f32 %v738, 0.0
  %v771 = vmax.f32 %v739, 0.0
  %v772 = vmax.f32 %v740, 0.0
  %v773 = vmax.f32 %v741, 0.0
  %v774 = vmax.f32 %v742, 0.0
  %v775 = vmax.f32 %v743, 0.0
  %v776 = vmax.f32 %v744, 0.0
  %v777 = vmax.f32 %v745, 0.0
  %v778 = vmax.f32 %v746, 0.0
  %v779 = vmax.f32 %v747, 0.0
  %v780 = vmax.f32 %v748, 0.0
  %v781 = vmax.f32 %v749, 0.0
  %v782 = vmax.f32 %v750, 0.0
  %v783 = vmax.f32 %v751, 0.0
  %v784 = vmax.f32 %v752, 0.0
  %v785 = vmax.f32 %v753, 0.0
  %v786 = vmax.f32 %v754, 0.0
  %v787 = vmax.f32 %v755, 0.0
  %v788 = vmax.f32 %v756, 0.0
  %v789 = vmax.f32 %v757, 0.0
  %v790 = vmax.f32 %v758, 0.0
  %v791 = vmax.f32 %v759, 0.0
  %v792 = vld [vmem:[%s7] sm:$0xf]
  %v793 = vld [vmem:[%s7 + $0x4] sm:$0xf]
  %v794 = vld [vmem:[%s7 + $0x8] sm:$0xf]
  %v795 = vld [vmem:[%s7 + $0xc] sm:$0xf]
  %v796 = vld [vmem:[%s7 + $0x10] sm:$0xf]
  %v797 = vld [vmem:[%s7 + $0x14] sm:$0xf]
  %v798 = vld [vmem:[%s7 + $0x18] sm:$0xf]
  %v799 = vld [vmem:[%s7 + $0x1c] sm:$0xf]
  %v800 = vpack.c.bf16 %v761, %v760
  %v801 = vpack.c.bf16 %v763, %v762
  %v802 = vpack.c.bf16 %v765, %v764
  %v803 = vpack.c.bf16 %v767, %v766
  %v804 = vpack.c.bf16 %v769, %v768
  %v805 = vpack.c.bf16 %v771, %v770
  %v806 = vpack.c.bf16 %v773, %v772
  %v807 = vpack.c.bf16 %v775, %v774
  %v808 = vpack.c.bf16 %v777, %v776
  %v809 = vpack.c.bf16 %v779, %v778
  %v810 = vpack.c.bf16 %v781, %v780
  %v811 = vpack.c.bf16 %v783, %v782
  %v812 = vpack.c.bf16 %v785, %v784
  %v813 = vpack.c.bf16 %v787, %v786
  %v814 = vpack.c.bf16 %v789, %v788
  %v815 = vpack.c.bf16 %v791, %v790
  %v816 = vld [vmem:[%s8] sm:$0x1]
  %v818 = vlaneseq
  %v819 = vshrl.u32 %v818, 7
  %v820 = vsub.s32 0, %v819
  %v821 = vrot.slane %v816, %v820
  %v831 = vunpack.c.l.b16 %v792
  %v832 = vunpack.c.l.b16 %v793
  %v833 = vunpack.c.l.b16 %v794
  %v834 = vunpack.c.l.b16 %v795
  %v835 = vunpack.c.l.b16 %v796
  %v836 = vunpack.c.l.b16 %v797
  %v837 = vunpack.c.l.b16 %v798
  %v838 = vunpack.c.l.b16 %v799
  %v839 = vpack.c.b16 %v832, %v831
  %v840 = vpack.c.b16 %v834, %v833
  %v841 = vpack.c.b16 %v836, %v835
  %v842 = vpack.c.b16 %v838, %v837
  %vm847 = vcmask 523264
  %v849 = vsel %vm847, %v800, 0
  %v852 = vsel %vm847, %v801, 0
  %v855 = vsel %vm847, %v802, 0
  %v858 = vsel %vm847, %v803, 0
  %v861 = vsel %vm847, %v804, 0
  %v864 = vsel %vm847, %v805, 0
  %v867 = vsel %vm847, %v806, 0
  %v870 = vsel %vm847, %v807, 0
  %v873 = vsel %vm847, %v808, 0
  %v876 = vsel %vm847, %v809, 0
  %v879 = vsel %vm847, %v810, 0
  %v882 = vsel %vm847, %v811, 0
  %v885 = vsel %vm847, %v812, 0
  %v888 = vsel %vm847, %v813, 0
  %v891 = vsel %vm847, %v814, 0
  %v894 = vsel %vm847, %v815, 0
  %896 = vmatprep.subr.bf16.mxu0 0
  %897 = vmatpush1.bf16.msra.mxu0 0
  %898 = vmatprep.subr.bf16.mxu0 0
  %899 = vmatpush1.bf16.msra.mxu0 0
  %900 = vmatprep.subr.bf16.mxu0 0
  %901 = vmatpush1.bf16.msra.mxu0 0
  %902 = vmatprep.subr.bf16.mxu0 0
  %903 = vmatpush1.bf16.msra.mxu0 0
  %904 = vmatprep.subr.bf16.mxu0 0
  %905 = vmatpush1.bf16.msra.mxu0 %v842
  %906 = vmatprep.subr.bf16.mxu0 0
  %907 = vmatpush1.bf16.msra.mxu0 %v841
  %908 = vmatprep.subr.bf16.mxu0 0
  %909 = vmatpush1.bf16.msra.mxu0 %v840
  %910 = vmatprep.subr.bf16.mxu0 0
  %911 = vmatpush1.bf16.msra.mxu0 %v839
  %912 = vmatprep.subr.bf16.mxu0 0
  %913 = vmatpush2.bf16.msra.mxu0 0
  %914 = vmatprep.subr.bf16.mxu0 0
  %915 = vmatpush2.bf16.msra.mxu0 0
  %916 = vmatprep.subr.bf16.mxu0 0
  %917 = vmatpush2.bf16.msra.mxu0 0
  %918 = vmatprep.subr.bf16.mxu0 0
  %919 = vmatpush2.bf16.msra.mxu0 0
  %920 = vmatprep.subr.bf16.mxu0 0
  %921 = vmatpush2.bf16.msra.mxu0 0
  %922 = vmatprep.subr.bf16.mxu0 0
  %923 = vmatpush2.bf16.msra.mxu0 0
  %924 = vmatprep.subr.bf16.mxu0 0
  %925 = vmatpush2.bf16.msra.mxu0 0
  %926 = vmatprep.subr.bf16.mxu0 0
  %927 = vmatpush2.bf16.msra.mxu0 0
  %928 = vmatprep.mubr.bf16.mxu0 0
  %929 = vmatmul.mubr.bf16.gmra.mxu0 %v849
  %v930 = vpop.f32.mrf.mxu0
  %v931 = vadd.f32 %v821, %v930
  %v932 = vpop.f32.mrf.mxu0
  %v933 = vpop.f32.mrf.mxu0
  %v934 = vadd.f32 %v821, %v933
  %v935 = vpop.f32.mrf.mxu0
  %936 = vmatprep.mubr.bf16.mxu0 0
  %937 = vmatmul.mubr.bf16.gmra.mxu0 %v852
  %v938 = vpop.f32.mrf.mxu0
  %v939 = vadd.f32 %v821, %v938
  %v940 = vpop.f32.mrf.mxu0
  %v941 = vpop.f32.mrf.mxu0
  %v942 = vadd.f32 %v821, %v941
  %v943 = vpop.f32.mrf.mxu0
  %944 = vmatprep.mubr.bf16.mxu0 0
  %945 = vmatmul.mubr.bf16.gmra.mxu0 %v855
  %v946 = vpop.f32.mrf.mxu0
  %v947 = vadd.f32 %v821, %v946
  %v948 = vpop.f32.mrf.mxu0
  %v949 = vpop.f32.mrf.mxu0
  %v950 = vadd.f32 %v821, %v949
  %v951 = vpop.f32.mrf.mxu0
  %952 = vmatprep.mubr.bf16.mxu0 0
  %953 = vmatmul.mubr.bf16.gmra.mxu0 %v858
  %v954 = vpop.f32.mrf.mxu0
  %v955 = vadd.f32 %v821, %v954
  %v956 = vpop.f32.mrf.mxu0
  %v957 = vpop.f32.mrf.mxu0
  %v958 = vadd.f32 %v821, %v957
  %v959 = vpop.f32.mrf.mxu0
  %960 = vmatprep.mubr.bf16.mxu0 0
  %961 = vmatmul.mubr.bf16.gmra.mxu0 %v861
  %v962 = vpop.f32.mrf.mxu0
  %v963 = vadd.f32 %v821, %v962
  %v964 = vpop.f32.mrf.mxu0
  %v965 = vpop.f32.mrf.mxu0
  %v966 = vadd.f32 %v821, %v965
  %v967 = vpop.f32.mrf.mxu0
  %968 = vmatprep.mubr.bf16.mxu0 0
  %969 = vmatmul.mubr.bf16.gmra.mxu0 %v864
  %v970 = vpop.f32.mrf.mxu0
  %v971 = vadd.f32 %v821, %v970
  %v972 = vpop.f32.mrf.mxu0
  %v973 = vpop.f32.mrf.mxu0
  %v974 = vadd.f32 %v821, %v973
  %v975 = vpop.f32.mrf.mxu0
  %976 = vmatprep.mubr.bf16.mxu0 0
  %977 = vmatmul.mubr.bf16.gmra.mxu0 %v867
  %v978 = vpop.f32.mrf.mxu0
  %v979 = vadd.f32 %v821, %v978
  %v980 = vpop.f32.mrf.mxu0
  %v981 = vpop.f32.mrf.mxu0
  %v982 = vadd.f32 %v821, %v981
  %v983 = vpop.f32.mrf.mxu0
  %984 = vmatprep.mubr.bf16.mxu0 0
  %985 = vmatmul.mubr.bf16.gmra.mxu0 %v870
  %v986 = vpop.f32.mrf.mxu0
  %v987 = vadd.f32 %v821, %v986
  %v988 = vpop.f32.mrf.mxu0
  %v989 = vpop.f32.mrf.mxu0
  %v990 = vadd.f32 %v821, %v989
  %v991 = vpop.f32.mrf.mxu0
  %992 = vmatprep.mubr.bf16.mxu0 0
  %993 = vmatmul.mubr.bf16.gmra.mxu0 %v873
  %v994 = vpop.f32.mrf.mxu0
  %v995 = vadd.f32 %v821, %v994
  %v996 = vpop.f32.mrf.mxu0
  %v997 = vpop.f32.mrf.mxu0
  %v998 = vadd.f32 %v821, %v997
  %v999 = vpop.f32.mrf.mxu0
  %1000 = vmatprep.mubr.bf16.mxu0 0
  %1001 = vmatmul.mubr.bf16.gmra.mxu0 %v876
  %v1002 = vpop.f32.mrf.mxu0
  %v1003 = vadd.f32 %v821, %v1002
  %v1004 = vpop.f32.mrf.mxu0
  %v1005 = vpop.f32.mrf.mxu0
  %v1006 = vadd.f32 %v821, %v1005
  %v1007 = vpop.f32.mrf.mxu0
  %1008 = vmatprep.mubr.bf16.mxu0 0
  %1009 = vmatmul.mubr.bf16.gmra.mxu0 %v879
  %v1010 = vpop.f32.mrf.mxu0
  %v1011 = vadd.f32 %v821, %v1010
  %v1012 = vpop.f32.mrf.mxu0
  %v1013 = vpop.f32.mrf.mxu0
  %v1014 = vadd.f32 %v821, %v1013
  %v1015 = vpop.f32.mrf.mxu0
  %1016 = vmatprep.mubr.bf16.mxu0 0
  %1017 = vmatmul.mubr.bf16.gmra.mxu0 %v882
  %v1018 = vpop.f32.mrf.mxu0
  %v1019 = vadd.f32 %v821, %v1018
  %v1020 = vpop.f32.mrf.mxu0
  %v1021 = vpop.f32.mrf.mxu0
  %v1022 = vadd.f32 %v821, %v1021
  %v1023 = vpop.f32.mrf.mxu0
  %1024 = vmatprep.mubr.bf16.mxu0 0
  %1025 = vmatmul.mubr.bf16.gmra.mxu0 %v885
  %v1026 = vpop.f32.mrf.mxu0
  %v1027 = vadd.f32 %v821, %v1026
  %v1028 = vpop.f32.mrf.mxu0
  %v1029 = vpop.f32.mrf.mxu0
  %v1030 = vadd.f32 %v821, %v1029
  %v1031 = vpop.f32.mrf.mxu0
  %1032 = vmatprep.mubr.bf16.mxu0 0
  %1033 = vmatmul.mubr.bf16.gmra.mxu0 %v888
  %v1034 = vpop.f32.mrf.mxu0
  %v1035 = vadd.f32 %v821, %v1034
  %v1036 = vpop.f32.mrf.mxu0
  %v1037 = vpop.f32.mrf.mxu0
  %v1038 = vadd.f32 %v821, %v1037
  %v1039 = vpop.f32.mrf.mxu0
  %1040 = vmatprep.mubr.bf16.mxu0 0
  %1041 = vmatmul.mubr.bf16.gmra.mxu0 %v891
  %v1042 = vpop.f32.mrf.mxu0
  %v1043 = vadd.f32 %v821, %v1042
  %v1044 = vpop.f32.mrf.mxu0
  %v1045 = vpop.f32.mrf.mxu0
  %v1046 = vadd.f32 %v821, %v1045
  %v1047 = vpop.f32.mrf.mxu0
  %1048 = vmatprep.mubr.bf16.mxu0 0
  %1049 = vmatmul.mubr.bf16.gmra.mxu0 %v894
  %v1050 = vpop.f32.mrf.mxu0
  %v1051 = vadd.f32 %v821, %v1050
  %v1052 = vpop.f32.mrf.mxu0
  %v1053 = vpop.f32.mrf.mxu0
  %v1054 = vadd.f32 %v821, %v1053
  %v1055 = vpop.f32.mrf.mxu0
  %1056 = vdwg.mxu0
  %v1057 = vld [vmem:[%s0] sm:$0xf]
  %v1058 = vld [vmem:[%s0 + $0x4] sm:$0xf]
  %v1059 = vld [vmem:[%s0 + $0x8] sm:$0xf]
  %v1060 = vld [vmem:[%s0 + $0xc] sm:$0xf]
  %v1061 = vunpack.c.l.bf16 %v1057
  %v1062 = vunpack.c.l.bf16 %v1058
  %v1063 = vunpack.c.l.bf16 %v1059
  %v1064 = vunpack.c.l.bf16 %v1060
  %v1065 = vld [vmem:[%s1] sm:$0xf]
  %v1066 = vld [vmem:[%s1 + $0x4] sm:$0xf]
  %v1067 = vld [vmem:[%s1 + $0x8] sm:$0xf]
  %v1068 = vld [vmem:[%s1 + $0xc] sm:$0xf]
  %v1069 = vld [vmem:[%s1 + $0x10] sm:$0xf]
  %v1070 = vld [vmem:[%s1 + $0x14] sm:$0xf]
  %v1071 = vld [vmem:[%s1 + $0x18] sm:$0xf]
  %v1072 = vld [vmem:[%s1 + $0x1c] sm:$0xf]
  %v1073 = vld [vmem:[%s1 + $0x20] sm:$0xf]
  %v1074 = vld [vmem:[%s1 + $0x24] sm:$0xf]
  %v1075 = vld [vmem:[%s1 + $0x28] sm:$0xf]
  %v1076 = vld [vmem:[%s1 + $0x2c] sm:$0xf]
  %v1077 = vld [vmem:[%s1 + $0x30] sm:$0xf]
  %v1078 = vld [vmem:[%s1 + $0x34] sm:$0xf]
  %v1079 = vld [vmem:[%s1 + $0x38] sm:$0xf]
  %v1080 = vld [vmem:[%s1 + $0x3c] sm:$0xf]
  %v1081 = vld [vmem:[%s1 + $0x40] sm:$0xf]
  %v1082 = vld [vmem:[%s1 + $0x44] sm:$0xf]
  %v1083 = vld [vmem:[%s1 + $0x48] sm:$0xf]
  %v1084 = vld [vmem:[%s1 + $0x4c] sm:$0xf]
  %v1085 = vld [vmem:[%s1 + $0x50] sm:$0xf]
  %v1086 = vld [vmem:[%s1 + $0x54] sm:$0xf]
  %v1087 = vld [vmem:[%s1 + $0x58] sm:$0xf]
  %v1088 = vld [vmem:[%s1 + $0x5c] sm:$0xf]
  %v1089 = vld [vmem:[%s1 + $0x60] sm:$0xf]
  %v1090 = vld [vmem:[%s1 + $0x64] sm:$0xf]
  %v1091 = vld [vmem:[%s1 + $0x68] sm:$0xf]
  %v1092 = vld [vmem:[%s1 + $0x6c] sm:$0xf]
  %v1093 = vld [vmem:[%s1 + $0x70] sm:$0xf]
  %v1094 = vld [vmem:[%s1 + $0x74] sm:$0xf]
  %v1095 = vld [vmem:[%s1 + $0x78] sm:$0xf]
  %v1096 = vld [vmem:[%s1 + $0x7c] sm:$0xf]
  %v1097 = vunpack.c.l.bf16 %v1065
  %v1098 = vunpack.c.l.bf16 %v1066
  %v1099 = vunpack.c.l.bf16 %v1067
  %v1100 = vunpack.c.l.bf16 %v1068
  %v1101 = vunpack.c.l.bf16 %v1069
  %v1102 = vunpack.c.l.bf16 %v1070
  %v1103 = vunpack.c.l.bf16 %v1071
  %v1104 = vunpack.c.l.bf16 %v1072
  %v1105 = vunpack.c.l.bf16 %v1073
  %v1106 = vunpack.c.l.bf16 %v1074
  %v1107 = vunpack.c.l.bf16 %v1075
  %v1108 = vunpack.c.l.bf16 %v1076
  %v1109 = vunpack.c.l.bf16 %v1077
  %v1110 = vunpack.c.l.bf16 %v1078
  %v1111 = vunpack.c.l.bf16 %v1079
  %v1112 = vunpack.c.l.bf16 %v1080
  %v1113 = vunpack.c.l.bf16 %v1081
  %v1114 = vunpack.c.l.bf16 %v1082
  %v1115 = vunpack.c.l.bf16 %v1083
  %v1116 = vunpack.c.l.bf16 %v1084
  %v1117 = vunpack.c.l.bf16 %v1085
  %v1118 = vunpack.c.l.bf16 %v1086
  %v1119 = vunpack.c.l.bf16 %v1087
  %v1120 = vunpack.c.l.bf16 %v1088
  %v1121 = vunpack.c.l.bf16 %v1089
  %v1122 = vunpack.c.l.bf16 %v1090
  %v1123 = vunpack.c.l.bf16 %v1091
  %v1124 = vunpack.c.l.bf16 %v1092
  %v1125 = vunpack.c.l.bf16 %v1093
  %v1126 = vunpack.c.l.bf16 %v1094
  %v1127 = vunpack.c.l.bf16 %v1095
  %v1128 = vunpack.c.l.bf16 %v1096
  %v1129 = vld [vmem:[%s2] sm:$0xf]
  %v1130 = vld [vmem:[%s2 + $0x4] sm:$0xf]
  %v1131 = vld [vmem:[%s2 + $0x8] sm:$0xf]
  %v1132 = vld [vmem:[%s2 + $0xc] sm:$0xf]
  %v1133 = vld [vmem:[%s2 + $0x10] sm:$0xf]
  %v1134 = vld [vmem:[%s2 + $0x14] sm:$0xf]
  %v1135 = vld [vmem:[%s2 + $0x18] sm:$0xf]
  %v1136 = vld [vmem:[%s2 + $0x1c] sm:$0xf]
  %v1137 = vld [vmem:[%s2 + $0x20] sm:$0xf]
  %v1138 = vld [vmem:[%s2 + $0x24] sm:$0xf]
  %v1139 = vld [vmem:[%s2 + $0x28] sm:$0xf]
  %v1140 = vld [vmem:[%s2 + $0x2c] sm:$0xf]
  %v1141 = vld [vmem:[%s2 + $0x30] sm:$0xf]
  %v1142 = vld [vmem:[%s2 + $0x34] sm:$0xf]
  %v1143 = vld [vmem:[%s2 + $0x38] sm:$0xf]
  %v1144 = vld [vmem:[%s2 + $0x3c] sm:$0xf]
  %v1145 = vld [vmem:[%s2 + $0x40] sm:$0xf]
  %v1146 = vld [vmem:[%s2 + $0x44] sm:$0xf]
  %v1147 = vld [vmem:[%s2 + $0x48] sm:$0xf]
  %v1148 = vld [vmem:[%s2 + $0x4c] sm:$0xf]
  %v1149 = vld [vmem:[%s2 + $0x50] sm:$0xf]
  %v1150 = vld [vmem:[%s2 + $0x54] sm:$0xf]
  %v1151 = vld [vmem:[%s2 + $0x58] sm:$0xf]
  %v1152 = vld [vmem:[%s2 + $0x5c] sm:$0xf]
  %v1153 = vld [vmem:[%s2 + $0x60] sm:$0xf]
  %v1154 = vld [vmem:[%s2 + $0x64] sm:$0xf]
  %v1155 = vld [vmem:[%s2 + $0x68] sm:$0xf]
  %v1156 = vld [vmem:[%s2 + $0x6c] sm:$0xf]
  %v1157 = vld [vmem:[%s2 + $0x70] sm:$0xf]
  %v1158 = vld [vmem:[%s2 + $0x74] sm:$0xf]
  %v1159 = vld [vmem:[%s2 + $0x78] sm:$0xf]
  %v1160 = vld [vmem:[%s2 + $0x7c] sm:$0xf]
  %v1161 = vunpack.c.l.bf16 %v1129
  %v1162 = vunpack.c.l.bf16 %v1130
  %v1163 = vunpack.c.l.bf16 %v1131
  %v1164 = vunpack.c.l.bf16 %v1132
  %v1165 = vunpack.c.l.bf16 %v1133
  %v1166 = vunpack.c.l.bf16 %v1134
  %v1167 = vunpack.c.l.bf16 %v1135
  %v1168 = vunpack.c.l.bf16 %v1136
  %v1169 = vunpack.c.l.bf16 %v1137
  %v1170 = vunpack.c.l.bf16 %v1138
  %v1171 = vunpack.c.l.bf16 %v1139
  %v1172 = vunpack.c.l.bf16 %v1140
  %v1173 = vunpack.c.l.bf16 %v1141
  %v1174 = vunpack.c.l.bf16 %v1142
  %v1175 = vunpack.c.l.bf16 %v1143
  %v1176 = vunpack.c.l.bf16 %v1144
  %v1177 = vunpack.c.l.bf16 %v1145
  %v1178 = vunpack.c.l.bf16 %v1146
  %v1179 = vunpack.c.l.bf16 %v1147
  %v1180 = vunpack.c.l.bf16 %v1148
  %v1181 = vunpack.c.l.bf16 %v1149
  %v1182 = vunpack.c.l.bf16 %v1150
  %v1183 = vunpack.c.l.bf16 %v1151
  %v1184 = vunpack.c.l.bf16 %v1152
  %v1185 = vunpack.c.l.bf16 %v1153
  %v1186 = vunpack.c.l.bf16 %v1154
  %v1187 = vunpack.c.l.bf16 %v1155
  %v1188 = vunpack.c.l.bf16 %v1156
  %v1189 = vunpack.c.l.bf16 %v1157
  %v1190 = vunpack.c.l.bf16 %v1158
  %v1191 = vunpack.c.l.bf16 %v1159
  %v1192 = vunpack.c.l.bf16 %v1160
  %v1197 = vcombine.high %v1061, %v1061
  %v1199 = vunpack.c.l.s4 1966171168
  %v1200 = vunpack.c.0.s8 %v1199
  %v1201 = vlaneseq
  %v1202 = vshrl.u32 %v1201, 7
  %v1203 = vsub.s32 %v1200, %v1202
  %v1204 = vrot.slane %v1061, %v1203
  %v1206 = vunpack.c.l.s4 1966171168
  %v1207 = vunpack.c.0.s8 %v1206
  %v1208 = vlaneseq
  %v1209 = vshrl.u32 %v1208, 7
  %v1210 = vsub.s32 %v1207, %v1209
  %v1211 = vrot.slane %v1197, %v1210
  %v1212 = vcombine.high %v1204, %v1204
  %v1213 = vcombine.high %v1211, %v1211
  %v1215 = vunpack.c.l.s4 1966171168
  %v1216 = vunpack.c.0.s8 %v1215
  %v1217 = vlaneseq
  %v1218 = vshrl.u32 %v1217, 7
  %v1219 = vsub.s32 %v1216, %v1218
  %v1220 = vrot.slane %v1204, %v1219
  %v1222 = vunpack.c.l.s4 1966171168
  %v1223 = vunpack.c.0.s8 %v1222
  %v1224 = vlaneseq
  %v1225 = vshrl.u32 %v1224, 7
  %v1226 = vsub.s32 %v1223, %v1225
  %v1227 = vrot.slane %v1211, %v1226
  %v1229 = vunpack.c.l.s4 1966171168
  %v1230 = vunpack.c.0.s8 %v1229
  %v1231 = vlaneseq
  %v1232 = vshrl.u32 %v1231, 7
  %v1233 = vsub.s32 %v1230, %v1232
  %v1234 = vrot.slane %v1212, %v1233
  %v1236 = vunpack.c.l.s4 1966171168
  %v1237 = vunpack.c.0.s8 %v1236
  %v1238 = vlaneseq
  %v1239 = vshrl.u32 %v1238, 7
  %v1240 = vsub.s32 %v1237, %v1239
  %v1241 = vrot.slane %v1213, %v1240
  %v1242 = vcombine.high %v1220, %v1220
  %v1243 = vcombine.high %v1227, %v1227
  %v1244 = vcombine.high %v1234, %v1234
  %v1245 = vcombine.high %v1241, %v1241
  %v1246 = vcombine.high %v1062, %v1062
  %v1248 = vunpack.c.l.s4 1966171168
  %v1249 = vunpack.c.0.s8 %v1248
  %v1250 = vlaneseq
  %v1251 = vshrl.u32 %v1250, 7
  %v1252 = vsub.s32 %v1249, %v1251
  %v1253 = vrot.slane %v1062, %v1252
  %v1255 = vunpack.c.l.s4 1966171168
  %v1256 = vunpack.c.0.s8 %v1255
  %v1257 = vlaneseq
  %v1258 = vshrl.u32 %v1257, 7
  %v1259 = vsub.s32 %v1256, %v1258
  %v1260 = vrot.slane %v1246, %v1259
  %v1261 = vcombine.high %v1253, %v1253
  %v1262 = vcombine.high %v1260, %v1260
  %v1264 = vunpack.c.l.s4 1966171168
  %v1265 = vunpack.c.0.s8 %v1264
  %v1266 = vlaneseq
  %v1267 = vshrl.u32 %v1266, 7
  %v1268 = vsub.s32 %v1265, %v1267
  %v1269 = vrot.slane %v1253, %v1268
  %v1271 = vunpack.c.l.s4 1966171168
  %v1272 = vunpack.c.0.s8 %v1271
  %v1273 = vlaneseq
  %v1274 = vshrl.u32 %v1273, 7
  %v1275 = vsub.s32 %v1272, %v1274
  %v1276 = vrot.slane %v1260, %v1275
  %v1278 = vunpack.c.l.s4 1966171168
  %v1279 = vunpack.c.0.s8 %v1278
  %v1280 = vlaneseq
  %v1281 = vshrl.u32 %v1280, 7
  %v1282 = vsub.s32 %v1279, %v1281
  %v1283 = vrot.slane %v1261, %v1282
  %v1285 = vunpack.c.l.s4 1966171168
  %v1286 = vunpack.c.0.s8 %v1285
  %v1287 = vlaneseq
  %v1288 = vshrl.u32 %v1287, 7
  %v1289 = vsub.s32 %v1286, %v1288
  %v1290 = vrot.slane %v1262, %v1289
  %v1291 = vcombine.high %v1269, %v1269
  %v1292 = vcombine.high %v1276, %v1276
  %v1293 = vcombine.high %v1283, %v1283
  %v1294 = vcombine.high %v1290, %v1290
  %v1295 = vcombine.high %v1063, %v1063
  %v1297 = vunpack.c.l.s4 1966171168
  %v1298 = vunpack.c.0.s8 %v1297
  %v1299 = vlaneseq
  %v1300 = vshrl.u32 %v1299, 7
  %v1301 = vsub.s32 %v1298, %v1300
  %v1302 = vrot.slane %v1063, %v1301
  %v1304 = vunpack.c.l.s4 1966171168
  %v1305 = vunpack.c.0.s8 %v1304
  %v1306 = vlaneseq
  %v1307 = vshrl.u32 %v1306, 7
  %v1308 = vsub.s32 %v1305, %v1307
  %v1309 = vrot.slane %v1295, %v1308
  %v1310 = vcombine.high %v1302, %v1302
  %v1311 = vcombine.high %v1309, %v1309
  %v1313 = vunpack.c.l.s4 1966171168
  %v1314 = vunpack.c.0.s8 %v1313
  %v1315 = vlaneseq
  %v1316 = vshrl.u32 %v1315, 7
  %v1317 = vsub.s32 %v1314, %v1316
  %v1318 = vrot.slane %v1302, %v1317
  %v1320 = vunpack.c.l.s4 1966171168
  %v1321 = vunpack.c.0.s8 %v1320
  %v1322 = vlaneseq
  %v1323 = vshrl.u32 %v1322, 7
  %v1324 = vsub.s32 %v1321, %v1323
  %v1325 = vrot.slane %v1309, %v1324
  %v1327 = vunpack.c.l.s4 1966171168
  %v1328 = vunpack.c.0.s8 %v1327
  %v1329 = vlaneseq
  %v1330 = vshrl.u32 %v1329, 7
  %v1331 = vsub.s32 %v1328, %v1330
  %v1332 = vrot.slane %v1310, %v1331
  %v1334 = vunpack.c.l.s4 1966171168
  %v1335 = vunpack.c.0.s8 %v1334
  %v1336 = vlaneseq
  %v1337 = vshrl.u32 %v1336, 7
  %v1338 = vsub.s32 %v1335, %v1337
  %v1339 = vrot.slane %v1311, %v1338
  %v1340 = vcombine.high %v1318, %v1318
  %v1341 = vcombine.high %v1325, %v1325
  %v1342 = vcombine.high %v1332, %v1332
  %v1343 = vcombine.high %v1339, %v1339
  %v1344 = vcombine.high %v1064, %v1064
  %v1346 = vunpack.c.l.s4 1966171168
  %v1347 = vunpack.c.0.s8 %v1346
  %v1348 = vlaneseq
  %v1349 = vshrl.u32 %v1348, 7
  %v1350 = vsub.s32 %v1347, %v1349
  %v1351 = vrot.slane %v1064, %v1350
  %v1353 = vunpack.c.l.s4 1966171168
  %v1354 = vunpack.c.0.s8 %v1353
  %v1355 = vlaneseq
  %v1356 = vshrl.u32 %v1355, 7
  %v1357 = vsub.s32 %v1354, %v1356
  %v1358 = vrot.slane %v1344, %v1357
  %v1359 = vcombine.high %v1351, %v1351
  %v1360 = vcombine.high %v1358, %v1358
  %v1362 = vunpack.c.l.s4 1966171168
  %v1363 = vunpack.c.0.s8 %v1362
  %v1364 = vlaneseq
  %v1365 = vshrl.u32 %v1364, 7
  %v1366 = vsub.s32 %v1363, %v1365
  %v1367 = vrot.slane %v1351, %v1366
  %v1369 = vunpack.c.l.s4 1966171168
  %v1370 = vunpack.c.0.s8 %v1369
  %v1371 = vlaneseq
  %v1372 = vshrl.u32 %v1371, 7
  %v1373 = vsub.s32 %v1370, %v1372
  %v1374 = vrot.slane %v1358, %v1373
  %v1376 = vunpack.c.l.s4 1966171168
  %v1377 = vunpack.c.0.s8 %v1376
  %v1378 = vlaneseq
  %v1379 = vshrl.u32 %v1378, 7
  %v1380 = vsub.s32 %v1377, %v1379
  %v1381 = vrot.slane %v1359, %v1380
  %v1383 = vunpack.c.l.s4 1966171168
  %v1384 = vunpack.c.0.s8 %v1383
  %v1385 = vlaneseq
  %v1386 = vshrl.u32 %v1385, 7
  %v1387 = vsub.s32 %v1384, %v1386
  %v1388 = vrot.slane %v1360, %v1387
  %v1389 = vcombine.high %v1367, %v1367
  %v1390 = vcombine.high %v1374, %v1374
  %v1391 = vcombine.high %v1381, %v1381
  %v1392 = vcombine.high %v1388, %v1388
  %v1393 = vlaneseq
  %v1394 = vshrl.u32 %v1393, 7
  %v1395 = vsub.s32 0, %v1394
  %v1396 = vrot.slane %v1220, %v1395
  %v1397 = vlaneseq
  %v1398 = vshrl.u32 %v1397, 7
  %v1399 = vsub.s32 0, %v1398
  %v1400 = vrot.slane %v1234, %v1399
  %v1401 = vlaneseq
  %v1402 = vshrl.u32 %v1401, 7
  %v1403 = vsub.s32 0, %v1402
  %v1404 = vrot.slane %v1242, %v1403
  %v1405 = vlaneseq
  %v1406 = vshrl.u32 %v1405, 7
  %v1407 = vsub.s32 0, %v1406
  %v1408 = vrot.slane %v1244, %v1407
  %v1409 = vlaneseq
  %v1410 = vshrl.u32 %v1409, 7
  %v1411 = vsub.s32 0, %v1410
  %v1412 = vrot.slane %v1227, %v1411
  %v1413 = vlaneseq
  %v1414 = vshrl.u32 %v1413, 7
  %v1415 = vsub.s32 0, %v1414
  %v1416 = vrot.slane %v1241, %v1415
  %v1417 = vlaneseq
  %v1418 = vshrl.u32 %v1417, 7
  %v1419 = vsub.s32 0, %v1418
  %v1420 = vrot.slane %v1243, %v1419
  %v1421 = vlaneseq
  %v1422 = vshrl.u32 %v1421, 7
  %v1423 = vsub.s32 0, %v1422
  %v1424 = vrot.slane %v1245, %v1423
  %v1425 = vlaneseq
  %v1426 = vshrl.u32 %v1425, 7
  %v1427 = vsub.s32 0, %v1426
  %v1428 = vrot.slane %v1269, %v1427
  %v1429 = vlaneseq
  %v1430 = vshrl.u32 %v1429, 7
  %v1431 = vsub.s32 0, %v1430
  %v1432 = vrot.slane %v1283, %v1431
  %v1433 = vlaneseq
  %v1434 = vshrl.u32 %v1433, 7
  %v1435 = vsub.s32 0, %v1434
  %v1436 = vrot.slane %v1291, %v1435
  %v1437 = vlaneseq
  %v1438 = vshrl.u32 %v1437, 7
  %v1439 = vsub.s32 0, %v1438
  %v1440 = vrot.slane %v1293, %v1439
  %v1441 = vlaneseq
  %v1442 = vshrl.u32 %v1441, 7
  %v1443 = vsub.s32 0, %v1442
  %v1444 = vrot.slane %v1276, %v1443
  %v1445 = vlaneseq
  %v1446 = vshrl.u32 %v1445, 7
  %v1447 = vsub.s32 0, %v1446
  %v1448 = vrot.slane %v1290, %v1447
  %v1449 = vlaneseq
  %v1450 = vshrl.u32 %v1449, 7
  %v1451 = vsub.s32 0, %v1450
  %v1452 = vrot.slane %v1292, %v1451
  %v1453 = vlaneseq
  %v1454 = vshrl.u32 %v1453, 7
  %v1455 = vsub.s32 0, %v1454
  %v1456 = vrot.slane %v1294, %v1455
  %v1457 = vlaneseq
  %v1458 = vshrl.u32 %v1457, 7
  %v1459 = vsub.s32 0, %v1458
  %v1460 = vrot.slane %v1318, %v1459
  %v1461 = vlaneseq
  %v1462 = vshrl.u32 %v1461, 7
  %v1463 = vsub.s32 0, %v1462
  %v1464 = vrot.slane %v1332, %v1463
  %v1465 = vlaneseq
  %v1466 = vshrl.u32 %v1465, 7
  %v1467 = vsub.s32 0, %v1466
  %v1468 = vrot.slane %v1340, %v1467
  %v1469 = vlaneseq
  %v1470 = vshrl.u32 %v1469, 7
  %v1471 = vsub.s32 0, %v1470
  %v1472 = vrot.slane %v1342, %v1471
  %v1473 = vlaneseq
  %v1474 = vshrl.u32 %v1473, 7
  %v1475 = vsub.s32 0, %v1474
  %v1476 = vrot.slane %v1325, %v1475
  %v1477 = vlaneseq
  %v1478 = vshrl.u32 %v1477, 7
  %v1479 = vsub.s32 0, %v1478
  %v1480 = vrot.slane %v1339, %v1479
  %v1481 = vlaneseq
  %v1482 = vshrl.u32 %v1481, 7
  %v1483 = vsub.s32 0, %v1482
  %v1484 = vrot.slane %v1341, %v1483
  %v1485 = vlaneseq
  %v1486 = vshrl.u32 %v1485, 7
  %v1487 = vsub.s32 0, %v1486
  %v1488 = vrot.slane %v1343, %v1487
  %v1489 = vlaneseq
  %v1490 = vshrl.u32 %v1489, 7
  %v1491 = vsub.s32 0, %v1490
  %v1492 = vrot.slane %v1367, %v1491
  %v1493 = vlaneseq
  %v1494 = vshrl.u32 %v1493, 7
  %v1495 = vsub.s32 0, %v1494
  %v1496 = vrot.slane %v1381, %v1495
  %v1497 = vlaneseq
  %v1498 = vshrl.u32 %v1497, 7
  %v1499 = vsub.s32 0, %v1498
  %v1500 = vrot.slane %v1389, %v1499
  %v1501 = vlaneseq
  %v1502 = vshrl.u32 %v1501, 7
  %v1503 = vsub.s32 0, %v1502
  %v1504 = vrot.slane %v1391, %v1503
  %v1505 = vlaneseq
  %v1506 = vshrl.u32 %v1505, 7
  %v1507 = vsub.s32 0, %v1506
  %v1508 = vrot.slane %v1374, %v1507
  %v1509 = vlaneseq
  %v1510 = vshrl.u32 %v1509, 7
  %v1511 = vsub.s32 0, %v1510
  %v1512 = vrot.slane %v1388, %v1511
  %v1513 = vlaneseq
  %v1514 = vshrl.u32 %v1513, 7
  %v1515 = vsub.s32 0, %v1514
  %v1516 = vrot.slane %v1390, %v1515
  %v1517 = vlaneseq
  %v1518 = vshrl.u32 %v1517, 7
  %v1519 = vsub.s32 0, %v1518
  %v1520 = vrot.slane %v1392, %v1519
  %v1553 = vsub.f32 %v1396, %v1097
  %v1554 = vsub.f32 %v1400, %v1098
  %v1555 = vsub.f32 %v1404, %v1099
  %v1556 = vsub.f32 %v1408, %v1100
  %v1557 = vsub.f32 %v1412, %v1101
  %v1558 = vsub.f32 %v1416, %v1102
  %v1559 = vsub.f32 %v1420, %v1103
  %v1560 = vsub.f32 %v1424, %v1104
  %v1561 = vsub.f32 %v1428, %v1105
  %v1562 = vsub.f32 %v1432, %v1106
  %v1563 = vsub.f32 %v1436, %v1107
  %v1564 = vsub.f32 %v1440, %v1108
  %v1565 = vsub.f32 %v1444, %v1109
  %v1566 = vsub.f32 %v1448, %v1110
  %v1567 = vsub.f32 %v1452, %v1111
  %v1568 = vsub.f32 %v1456, %v1112
  %v1569 = vsub.f32 %v1460, %v1113
  %v1570 = vsub.f32 %v1464, %v1114
  %v1571 = vsub.f32 %v1468, %v1115
  %v1572 = vsub.f32 %v1472, %v1116
  %v1573 = vsub.f32 %v1476, %v1117
  %v1574 = vsub.f32 %v1480, %v1118
  %v1575 = vsub.f32 %v1484, %v1119
  %v1576 = vsub.f32 %v1488, %v1120
  %v1577 = vsub.f32 %v1492, %v1121
  %v1578 = vsub.f32 %v1496, %v1122
  %v1579 = vsub.f32 %v1500, %v1123
  %v1580 = vsub.f32 %v1504, %v1124
  %v1581 = vsub.f32 %v1508, %v1125
  %v1582 = vsub.f32 %v1512, %v1126
  %v1583 = vsub.f32 %v1516, %v1127
  %v1584 = vsub.f32 %v1520, %v1128
  %v1585 = vadd.f32 %v1553, %v931
  %v1586 = vadd.f32 %v1554, %v934
  %v1587 = vadd.f32 %v1555, %v939
  %v1588 = vadd.f32 %v1556, %v942
  %v1589 = vadd.f32 %v1557, %v947
  %v1590 = vadd.f32 %v1558, %v950
  %v1591 = vadd.f32 %v1559, %v955
  %v1592 = vadd.f32 %v1560, %v958
  %v1593 = vadd.f32 %v1561, %v963
  %v1594 = vadd.f32 %v1562, %v966
  %v1595 = vadd.f32 %v1563, %v971
  %v1596 = vadd.f32 %v1564, %v974
  %v1597 = vadd.f32 %v1565, %v979
  %v1598 = vadd.f32 %v1566, %v982
  %v1599 = vadd.f32 %v1567, %v987
  %v1600 = vadd.f32 %v1568, %v990
  %v1601 = vadd.f32 %v1569, %v995
  %v1602 = vadd.f32 %v1570, %v998
  %v1603 = vadd.f32 %v1571, %v1003
  %v1604 = vadd.f32 %v1572, %v1006
  %v1605 = vadd.f32 %v1573, %v1011
  %v1606 = vadd.f32 %v1574, %v1014
  %v1607 = vadd.f32 %v1575, %v1019
  %v1608 = vadd.f32 %v1576, %v1022
  %v1609 = vadd.f32 %v1577, %v1027
  %v1610 = vadd.f32 %v1578, %v1030
  %v1611 = vadd.f32 %v1579, %v1035
  %v1612 = vadd.f32 %v1580, %v1038
  %v1613 = vadd.f32 %v1581, %v1043
  %v1614 = vadd.f32 %v1582, %v1046
  %v1615 = vadd.f32 %v1583, %v1051
  %v1616 = vadd.f32 %v1584, %v1054
  %v1617 = vadd.f32 %v1161, %v931
  %v1618 = vadd.f32 %v1162, %v934
  %v1619 = vadd.f32 %v1163, %v939
  %v1620 = vadd.f32 %v1164, %v942
  %v1621 = vadd.f32 %v1165, %v947
  %v1622 = vadd.f32 %v1166, %v950
  %v1623 = vadd.f32 %v1167, %v955
  %v1624 = vadd.f32 %v1168, %v958
  %v1625 = vadd.f32 %v1169, %v963
  %v1626 = vadd.f32 %v1170, %v966
  %v1627 = vadd.f32 %v1171, %v971
  %v1628 = vadd.f32 %v1172, %v974
  %v1629 = vadd.f32 %v1173, %v979
  %v1630 = vadd.f32 %v1174, %v982
  %v1631 = vadd.f32 %v1175, %v987
  %v1632 = vadd.f32 %v1176, %v990
  %v1633 = vadd.f32 %v1177, %v995
  %v1634 = vadd.f32 %v1178, %v998
  %v1635 = vadd.f32 %v1179, %v1003
  %v1636 = vadd.f32 %v1180, %v1006
  %v1637 = vadd.f32 %v1181, %v1011
  %v1638 = vadd.f32 %v1182, %v1014
  %v1639 = vadd.f32 %v1183, %v1019
  %v1640 = vadd.f32 %v1184, %v1022
  %v1641 = vadd.f32 %v1185, %v1027
  %v1642 = vadd.f32 %v1186, %v1030
  %v1643 = vadd.f32 %v1187, %v1035
  %v1644 = vadd.f32 %v1188, %v1038
  %v1645 = vadd.f32 %v1189, %v1043
  %v1646 = vadd.f32 %v1190, %v1046
  %v1647 = vadd.f32 %v1191, %v1051
  %v1648 = vadd.f32 %v1192, %v1054
  %v1649 = vld [vmem:[%s9] sm:$0xf]
  %v1650 = vld [vmem:[%s9 + $0x4] sm:$0xf]
  %v1651 = vpack.c.bf16 %v1586, %v1585
  %v1652 = vpack.c.bf16 %v1588, %v1587
  %v1653 = vpack.c.bf16 %v1590, %v1589
  %v1654 = vpack.c.bf16 %v1592, %v1591
  %v1655 = vpack.c.bf16 %v1594, %v1593
  %v1656 = vpack.c.bf16 %v1596, %v1595
  %v1657 = vpack.c.bf16 %v1598, %v1597
  %v1658 = vpack.c.bf16 %v1600, %v1599
  %v1659 = vpack.c.bf16 %v1602, %v1601
  %v1660 = vpack.c.bf16 %v1604, %v1603
  %v1661 = vpack.c.bf16 %v1606, %v1605
  %v1662 = vpack.c.bf16 %v1608, %v1607
  %v1663 = vpack.c.bf16 %v1610, %v1609
  %v1664 = vpack.c.bf16 %v1612, %v1611
  %v1665 = vpack.c.bf16 %v1614, %v1613
  %v1666 = vpack.c.bf16 %v1616, %v1615
  %v1667 = vld [vmem:[%s10] sm:$0x1]
  %v1669 = vlaneseq
  %v1670 = vshrl.u32 %v1669, 7
  %v1671 = vsub.s32 0, %v1670
  %v1672 = vrot.slane %v1667, %v1671
  %v1676 = vunpack.c.l.b16 %v1649
  %v1677 = vunpack.c.l.b16 %v1650
  %v1678 = vpack.c.b16 %v1677, %v1676
  %vm1680 = vcmask 130048
  %v1682 = vsel %vm1680, %v1651, 0
  %v1685 = vsel %vm1680, %v1652, 0
  %v1688 = vsel %vm1680, %v1653, 0
  %v1691 = vsel %vm1680, %v1654, 0
  %v1694 = vsel %vm1680, %v1655, 0
  %v1697 = vsel %vm1680, %v1656, 0
  %v1700 = vsel %vm1680, %v1657, 0
  %v1703 = vsel %vm1680, %v1658, 0
  %v1706 = vsel %vm1680, %v1659, 0
  %v1709 = vsel %vm1680, %v1660, 0
  %v1712 = vsel %vm1680, %v1661, 0
  %v1715 = vsel %vm1680, %v1662, 0
  %v1718 = vsel %vm1680, %v1663, 0
  %v1721 = vsel %vm1680, %v1664, 0
  %v1724 = vsel %vm1680, %v1665, 0
  %v1727 = vsel %vm1680, %v1666, 0
  %1729 = vmatprep.subr.bf16.mxu0 0
  %1730 = vmatpush1.bf16.msra.mxu0 0
  %1731 = vmatprep.subr.bf16.mxu0 0
  %1732 = vmatpush1.bf16.msra.mxu0 0
  %1733 = vmatprep.subr.bf16.mxu0 0
  %1734 = vmatpush1.bf16.msra.mxu0 0
  %1735 = vmatprep.subr.bf16.mxu0 0
  %1736 = vmatpush1.bf16.msra.mxu0 0
  %1737 = vmatprep.subr.bf16.mxu0 0
  %1738 = vmatpush1.bf16.msra.mxu0 0
  %1739 = vmatprep.subr.bf16.mxu0 0
  %1740 = vmatpush1.bf16.msra.mxu0 0
  %1741 = vmatprep.subr.bf16.mxu0 0
  %1742 = vmatpush1.bf16.msra.mxu0 0
  %1743 = vmatprep.subr.bf16.mxu0 0
  %1744 = vmatpush1.bf16.msra.mxu0 %v1678
  %1745 = vmatprep.subr.bf16.mxu0 0
  %1746 = vmatpush2.bf16.msra.mxu0 0
  %1747 = vmatprep.subr.bf16.mxu0 0
  %1748 = vmatpush2.bf16.msra.mxu0 0
  %1749 = vmatprep.subr.bf16.mxu0 0
  %1750 = vmatpush2.bf16.msra.mxu0 0
  %1751 = vmatprep.subr.bf16.mxu0 0
  %1752 = vmatpush2.bf16.msra.mxu0 0
  %1753 = vmatprep.subr.bf16.mxu0 0
  %1754 = vmatpush2.bf16.msra.mxu0 0
  %1755 = vmatprep.subr.bf16.mxu0 0
  %1756 = vmatpush2.bf16.msra.mxu0 0
  %1757 = vmatprep.subr.bf16.mxu0 0
  %1758 = vmatpush2.bf16.msra.mxu0 0
  %1759 = vmatprep.subr.bf16.mxu0 0
  %1760 = vmatpush2.bf16.msra.mxu0 0
  %1761 = vmatprep.mubr.bf16.mxu0 0
  %1762 = vmatmul.mubr.bf16.gmra.mxu0 %v1682
  %v1763 = vpop.f32.mrf.mxu0
  %v1764 = vadd.f32 %v1672, %v1763
  %v1765 = vpop.f32.mrf.mxu0
  %v1766 = vpop.f32.mrf.mxu0
  %v1767 = vadd.f32 %v1672, %v1766
  %v1768 = vpop.f32.mrf.mxu0
  %1769 = vmatprep.mubr.bf16.mxu0 0
  %1770 = vmatmul.mubr.bf16.gmra.mxu0 %v1685
  %v1771 = vpop.f32.mrf.mxu0
  %v1772 = vadd.f32 %v1672, %v1771
  %v1773 = vpop.f32.mrf.mxu0
  %v1774 = vpop.f32.mrf.mxu0
  %v1775 = vadd.f32 %v1672, %v1774
  %v1776 = vpop.f32.mrf.mxu0
  %1777 = vmatprep.mubr.bf16.mxu0 0
  %1778 = vmatmul.mubr.bf16.gmra.mxu0 %v1688
  %v1779 = vpop.f32.mrf.mxu0
  %v1780 = vadd.f32 %v1672, %v1779
  %v1781 = vpop.f32.mrf.mxu0
  %v1782 = vpop.f32.mrf.mxu0
  %v1783 = vadd.f32 %v1672, %v1782
  %v1784 = vpop.f32.mrf.mxu0
  %1785 = vmatprep.mubr.bf16.mxu0 0
  %1786 = vmatmul.mubr.bf16.gmra.mxu0 %v1691
  %v1787 = vpop.f32.mrf.mxu0
  %v1788 = vadd.f32 %v1672, %v1787
  %v1789 = vpop.f32.mrf.mxu0
  %v1790 = vpop.f32.mrf.mxu0
  %v1791 = vadd.f32 %v1672, %v1790
  %v1792 = vpop.f32.mrf.mxu0
  %1793 = vmatprep.mubr.bf16.mxu0 0
  %1794 = vmatmul.mubr.bf16.gmra.mxu0 %v1694
  %v1795 = vpop.f32.mrf.mxu0
  %v1796 = vadd.f32 %v1672, %v1795
  %v1797 = vpop.f32.mrf.mxu0
  %v1798 = vpop.f32.mrf.mxu0
  %v1799 = vadd.f32 %v1672, %v1798
  %v1800 = vpop.f32.mrf.mxu0
  %1801 = vmatprep.mubr.bf16.mxu0 0
  %1802 = vmatmul.mubr.bf16.gmra.mxu0 %v1697
  %v1803 = vpop.f32.mrf.mxu0
  %v1804 = vadd.f32 %v1672, %v1803
  %v1805 = vpop.f32.mrf.mxu0
  %v1806 = vpop.f32.mrf.mxu0
  %v1807 = vadd.f32 %v1672, %v1806
  %v1808 = vpop.f32.mrf.mxu0
  %1809 = vmatprep.mubr.bf16.mxu0 0
  %1810 = vmatmul.mubr.bf16.gmra.mxu0 %v1700
  %v1811 = vpop.f32.mrf.mxu0
  %v1812 = vadd.f32 %v1672, %v1811
  %v1813 = vpop.f32.mrf.mxu0
  %v1814 = vpop.f32.mrf.mxu0
  %v1815 = vadd.f32 %v1672, %v1814
  %v1816 = vpop.f32.mrf.mxu0
  %1817 = vmatprep.mubr.bf16.mxu0 0
  %1818 = vmatmul.mubr.bf16.gmra.mxu0 %v1703
  %v1819 = vpop.f32.mrf.mxu0
  %v1820 = vadd.f32 %v1672, %v1819
  %v1821 = vpop.f32.mrf.mxu0
  %v1822 = vpop.f32.mrf.mxu0
  %v1823 = vadd.f32 %v1672, %v1822
  %v1824 = vpop.f32.mrf.mxu0
  %1825 = vmatprep.mubr.bf16.mxu0 0
  %1826 = vmatmul.mubr.bf16.gmra.mxu0 %v1706
  %v1827 = vpop.f32.mrf.mxu0
  %v1828 = vadd.f32 %v1672, %v1827
  %v1829 = vpop.f32.mrf.mxu0
  %v1830 = vpop.f32.mrf.mxu0
  %v1831 = vadd.f32 %v1672, %v1830
  %v1832 = vpop.f32.mrf.mxu0
  %1833 = vmatprep.mubr.bf16.mxu0 0
  %1834 = vmatmul.mubr.bf16.gmra.mxu0 %v1709
  %v1835 = vpop.f32.mrf.mxu0
  %v1836 = vadd.f32 %v1672, %v1835
  %v1837 = vpop.f32.mrf.mxu0
  %v1838 = vpop.f32.mrf.mxu0
  %v1839 = vadd.f32 %v1672, %v1838
  %v1840 = vpop.f32.mrf.mxu0
  %1841 = vmatprep.mubr.bf16.mxu0 0
  %1842 = vmatmul.mubr.bf16.gmra.mxu0 %v1712
  %v1843 = vpop.f32.mrf.mxu0
  %v1844 = vadd.f32 %v1672, %v1843
  %v1845 = vpop.f32.mrf.mxu0
  %v1846 = vpop.f32.mrf.mxu0
  %v1847 = vadd.f32 %v1672, %v1846
  %v1848 = vpop.f32.mrf.mxu0
  %1849 = vmatprep.mubr.bf16.mxu0 0
  %1850 = vmatmul.mubr.bf16.gmra.mxu0 %v1715
  %v1851 = vpop.f32.mrf.mxu0
  %v1852 = vadd.f32 %v1672, %v1851
  %v1853 = vpop.f32.mrf.mxu0
  %v1854 = vpop.f32.mrf.mxu0
  %v1855 = vadd.f32 %v1672, %v1854
  %v1856 = vpop.f32.mrf.mxu0
  %1857 = vmatprep.mubr.bf16.mxu0 0
  %1858 = vmatmul.mubr.bf16.gmra.mxu0 %v1718
  %v1859 = vpop.f32.mrf.mxu0
  %v1860 = vadd.f32 %v1672, %v1859
  %v1861 = vpop.f32.mrf.mxu0
  %v1862 = vpop.f32.mrf.mxu0
  %v1863 = vadd.f32 %v1672, %v1862
  %v1864 = vpop.f32.mrf.mxu0
  %1865 = vmatprep.mubr.bf16.mxu0 0
  %1866 = vmatmul.mubr.bf16.gmra.mxu0 %v1721
  %v1867 = vpop.f32.mrf.mxu0
  %v1868 = vadd.f32 %v1672, %v1867
  %v1869 = vpop.f32.mrf.mxu0
  %v1870 = vpop.f32.mrf.mxu0
  %v1871 = vadd.f32 %v1672, %v1870
  %v1872 = vpop.f32.mrf.mxu0
  %1873 = vmatprep.mubr.bf16.mxu0 0
  %1874 = vmatmul.mubr.bf16.gmra.mxu0 %v1724
  %v1875 = vpop.f32.mrf.mxu0
  %v1876 = vadd.f32 %v1672, %v1875
  %v1877 = vpop.f32.mrf.mxu0
  %v1878 = vpop.f32.mrf.mxu0
  %v1879 = vadd.f32 %v1672, %v1878
  %v1880 = vpop.f32.mrf.mxu0
  %1881 = vmatprep.mubr.bf16.mxu0 0
  %1882 = vmatmul.mubr.bf16.gmra.mxu0 %v1727
  %v1883 = vpop.f32.mrf.mxu0
  %v1884 = vadd.f32 %v1672, %v1883
  %v1885 = vpop.f32.mrf.mxu0
  %v1886 = vpop.f32.mrf.mxu0
  %v1887 = vadd.f32 %v1672, %v1886
  %v1888 = vpop.f32.mrf.mxu0
  %1889 = vdwg.mxu0
  %v1890 = vmax.f32 %v1764, 0.0
  %v1891 = vmax.f32 %v1767, 0.0
  %v1892 = vmax.f32 %v1772, 0.0
  %v1893 = vmax.f32 %v1775, 0.0
  %v1894 = vmax.f32 %v1780, 0.0
  %v1895 = vmax.f32 %v1783, 0.0
  %v1896 = vmax.f32 %v1788, 0.0
  %v1897 = vmax.f32 %v1791, 0.0
  %v1898 = vmax.f32 %v1796, 0.0
  %v1899 = vmax.f32 %v1799, 0.0
  %v1900 = vmax.f32 %v1804, 0.0
  %v1901 = vmax.f32 %v1807, 0.0
  %v1902 = vmax.f32 %v1812, 0.0
  %v1903 = vmax.f32 %v1815, 0.0
  %v1904 = vmax.f32 %v1820, 0.0
  %v1905 = vmax.f32 %v1823, 0.0
  %v1906 = vmax.f32 %v1828, 0.0
  %v1907 = vmax.f32 %v1831, 0.0
  %v1908 = vmax.f32 %v1836, 0.0
  %v1909 = vmax.f32 %v1839, 0.0
  %v1910 = vmax.f32 %v1844, 0.0
  %v1911 = vmax.f32 %v1847, 0.0
  %v1912 = vmax.f32 %v1852, 0.0
  %v1913 = vmax.f32 %v1855, 0.0
  %v1914 = vmax.f32 %v1860, 0.0
  %v1915 = vmax.f32 %v1863, 0.0
  %v1916 = vmax.f32 %v1868, 0.0
  %v1917 = vmax.f32 %v1871, 0.0
  %v1918 = vmax.f32 %v1876, 0.0
  %v1919 = vmax.f32 %v1879, 0.0
  %v1920 = vmax.f32 %v1884, 0.0
  %v1921 = vmax.f32 %v1887, 0.0
  %v1922 = vld [vmem:[%s11] sm:$0xf]
  %v1923 = vld [vmem:[%s11 + $0x4] sm:$0xf]
  %v1924 = vld [vmem:[%s11 + $0x8] sm:$0xf]
  %v1925 = vld [vmem:[%s11 + $0xc] sm:$0xf]
  %v1926 = vld [vmem:[%s11 + $0x10] sm:$0xf]
  %v1927 = vld [vmem:[%s11 + $0x14] sm:$0xf]
  %v1928 = vld [vmem:[%s11 + $0x18] sm:$0xf]
  %v1929 = vld [vmem:[%s11 + $0x1c] sm:$0xf]
  %v1930 = vpack.c.bf16 %v1891, %v1890
  %v1931 = vpack.c.bf16 %v1893, %v1892
  %v1932 = vpack.c.bf16 %v1895, %v1894
  %v1933 = vpack.c.bf16 %v1897, %v1896
  %v1934 = vpack.c.bf16 %v1899, %v1898
  %v1935 = vpack.c.bf16 %v1901, %v1900
  %v1936 = vpack.c.bf16 %v1903, %v1902
  %v1937 = vpack.c.bf16 %v1905, %v1904
  %v1938 = vpack.c.bf16 %v1907, %v1906
  %v1939 = vpack.c.bf16 %v1909, %v1908
  %v1940 = vpack.c.bf16 %v1911, %v1910
  %v1941 = vpack.c.bf16 %v1913, %v1912
  %v1942 = vpack.c.bf16 %v1915, %v1914
  %v1943 = vpack.c.bf16 %v1917, %v1916
  %v1944 = vpack.c.bf16 %v1919, %v1918
  %v1945 = vpack.c.bf16 %v1921, %v1920
  %v1946 = vld [vmem:[%s12] sm:$0x1]
  %v1948 = vlaneseq
  %v1949 = vshrl.u32 %v1948, 7
  %v1950 = vsub.s32 0, %v1949
  %v1951 = vrot.slane %v1946, %v1950
  %v1961 = vunpack.c.l.b16 %v1922
  %v1962 = vunpack.c.l.b16 %v1923
  %v1963 = vunpack.c.l.b16 %v1924
  %v1964 = vunpack.c.l.b16 %v1925
  %v1965 = vunpack.c.l.b16 %v1926
  %v1966 = vunpack.c.l.b16 %v1927
  %v1967 = vunpack.c.l.b16 %v1928
  %v1968 = vunpack.c.l.b16 %v1929
  %v1969 = vpack.c.b16 %v1962, %v1961
  %v1970 = vpack.c.b16 %v1964, %v1963
  %v1971 = vpack.c.b16 %v1966, %v1965
  %v1972 = vpack.c.b16 %v1968, %v1967
  %v1978 = vsel %vm847, %v1930, 0
  %v1981 = vsel %vm847, %v1931, 0
  %v1984 = vsel %vm847, %v1932, 0
  %v1987 = vsel %vm847, %v1933, 0
  %v1990 = vsel %vm847, %v1934, 0
  %v1993 = vsel %vm847, %v1935, 0
  %v1996 = vsel %vm847, %v1936, 0
  %v1999 = vsel %vm847, %v1937, 0
  %v2002 = vsel %vm847, %v1938, 0
  %v2005 = vsel %vm847, %v1939, 0
  %v2008 = vsel %vm847, %v1940, 0
  %v2011 = vsel %vm847, %v1941, 0
  %v2014 = vsel %vm847, %v1942, 0
  %v2017 = vsel %vm847, %v1943, 0
  %v2020 = vsel %vm847, %v1944, 0
  %v2023 = vsel %vm847, %v1945, 0
  %2025 = vmatprep.subr.bf16.mxu0 0
  %2026 = vmatpush1.bf16.msra.mxu0 0
  %2027 = vmatprep.subr.bf16.mxu0 0
  %2028 = vmatpush1.bf16.msra.mxu0 0
  %2029 = vmatprep.subr.bf16.mxu0 0
  %2030 = vmatpush1.bf16.msra.mxu0 0
  %2031 = vmatprep.subr.bf16.mxu0 0
  %2032 = vmatpush1.bf16.msra.mxu0 0
  %2033 = vmatprep.subr.bf16.mxu0 0
  %2034 = vmatpush1.bf16.msra.mxu0 %v1972
  %2035 = vmatprep.subr.bf16.mxu0 0
  %2036 = vmatpush1.bf16.msra.mxu0 %v1971
  %2037 = vmatprep.subr.bf16.mxu0 0
  %2038 = vmatpush1.bf16.msra.mxu0 %v1970
  %2039 = vmatprep.subr.bf16.mxu0 0
  %2040 = vmatpush1.bf16.msra.mxu0 %v1969
  %2041 = vmatprep.subr.bf16.mxu0 0
  %2042 = vmatpush2.bf16.msra.mxu0 0
  %2043 = vmatprep.subr.bf16.mxu0 0
  %2044 = vmatpush2.bf16.msra.mxu0 0
  %2045 = vmatprep.subr.bf16.mxu0 0
  %2046 = vmatpush2.bf16.msra.mxu0 0
  %2047 = vmatprep.subr.bf16.mxu0 0
  %2048 = vmatpush2.bf16.msra.mxu0 0
  %2049 = vmatprep.subr.bf16.mxu0 0
  %2050 = vmatpush2.bf16.msra.mxu0 0
  %2051 = vmatprep.subr.bf16.mxu0 0
  %2052 = vmatpush2.bf16.msra.mxu0 0
  %2053 = vmatprep.subr.bf16.mxu0 0
  %2054 = vmatpush2.bf16.msra.mxu0 0
  %2055 = vmatprep.subr.bf16.mxu0 0
  %2056 = vmatpush2.bf16.msra.mxu0 0
  %2057 = vmatprep.mubr.bf16.mxu0 0
  %2058 = vmatmul.mubr.bf16.gmra.mxu0 %v1978
  %v2059 = vpop.f32.mrf.mxu0
  %v2060 = vadd.f32 %v1951, %v2059
  %v2061 = vpop.f32.mrf.mxu0
  %v2062 = vpop.f32.mrf.mxu0
  %v2063 = vadd.f32 %v1951, %v2062
  %v2064 = vpop.f32.mrf.mxu0
  %2065 = vmatprep.mubr.bf16.mxu0 0
  %2066 = vmatmul.mubr.bf16.gmra.mxu0 %v1981
  %v2067 = vpop.f32.mrf.mxu0
  %v2068 = vadd.f32 %v1951, %v2067
  %v2069 = vpop.f32.mrf.mxu0
  %v2070 = vpop.f32.mrf.mxu0
  %v2071 = vadd.f32 %v1951, %v2070
  %v2072 = vpop.f32.mrf.mxu0
  %2073 = vmatprep.mubr.bf16.mxu0 0
  %2074 = vmatmul.mubr.bf16.gmra.mxu0 %v1984
  %v2075 = vpop.f32.mrf.mxu0
  %v2076 = vadd.f32 %v1951, %v2075
  %v2077 = vpop.f32.mrf.mxu0
  %v2078 = vpop.f32.mrf.mxu0
  %v2079 = vadd.f32 %v1951, %v2078
  %v2080 = vpop.f32.mrf.mxu0
  %2081 = vmatprep.mubr.bf16.mxu0 0
  %2082 = vmatmul.mubr.bf16.gmra.mxu0 %v1987
  %v2083 = vpop.f32.mrf.mxu0
  %v2084 = vadd.f32 %v1951, %v2083
  %v2085 = vpop.f32.mrf.mxu0
  %v2086 = vpop.f32.mrf.mxu0
  %v2087 = vadd.f32 %v1951, %v2086
  %v2088 = vpop.f32.mrf.mxu0
  %2089 = vmatprep.mubr.bf16.mxu0 0
  %2090 = vmatmul.mubr.bf16.gmra.mxu0 %v1990
  %v2091 = vpop.f32.mrf.mxu0
  %v2092 = vadd.f32 %v1951, %v2091
  %v2093 = vpop.f32.mrf.mxu0
  %v2094 = vpop.f32.mrf.mxu0
  %v2095 = vadd.f32 %v1951, %v2094
  %v2096 = vpop.f32.mrf.mxu0
  %2097 = vmatprep.mubr.bf16.mxu0 0
  %2098 = vmatmul.mubr.bf16.gmra.mxu0 %v1993
  %v2099 = vpop.f32.mrf.mxu0
  %v2100 = vadd.f32 %v1951, %v2099
  %v2101 = vpop.f32.mrf.mxu0
  %v2102 = vpop.f32.mrf.mxu0
  %v2103 = vadd.f32 %v1951, %v2102
  %v2104 = vpop.f32.mrf.mxu0
  %2105 = vmatprep.mubr.bf16.mxu0 0
  %2106 = vmatmul.mubr.bf16.gmra.mxu0 %v1996
  %v2107 = vpop.f32.mrf.mxu0
  %v2108 = vadd.f32 %v1951, %v2107
  %v2109 = vpop.f32.mrf.mxu0
  %v2110 = vpop.f32.mrf.mxu0
  %v2111 = vadd.f32 %v1951, %v2110
  %v2112 = vpop.f32.mrf.mxu0
  %2113 = vmatprep.mubr.bf16.mxu0 0
  %2114 = vmatmul.mubr.bf16.gmra.mxu0 %v1999
  %v2115 = vpop.f32.mrf.mxu0
  %v2116 = vadd.f32 %v1951, %v2115
  %v2117 = vpop.f32.mrf.mxu0
  %v2118 = vpop.f32.mrf.mxu0
  %v2119 = vadd.f32 %v1951, %v2118
  %v2120 = vpop.f32.mrf.mxu0
  %2121 = vmatprep.mubr.bf16.mxu0 0
  %2122 = vmatmul.mubr.bf16.gmra.mxu0 %v2002
  %v2123 = vpop.f32.mrf.mxu0
  %v2124 = vadd.f32 %v1951, %v2123
  %v2125 = vpop.f32.mrf.mxu0
  %v2126 = vpop.f32.mrf.mxu0
  %v2127 = vadd.f32 %v1951, %v2126
  %v2128 = vpop.f32.mrf.mxu0
  %2129 = vmatprep.mubr.bf16.mxu0 0
  %2130 = vmatmul.mubr.bf16.gmra.mxu0 %v2005
  %v2131 = vpop.f32.mrf.mxu0
  %v2132 = vadd.f32 %v1951, %v2131
  %v2133 = vpop.f32.mrf.mxu0
  %v2134 = vpop.f32.mrf.mxu0
  %v2135 = vadd.f32 %v1951, %v2134
  %v2136 = vpop.f32.mrf.mxu0
  %2137 = vmatprep.mubr.bf16.mxu0 0
  %2138 = vmatmul.mubr.bf16.gmra.mxu0 %v2008
  %v2139 = vpop.f32.mrf.mxu0
  %v2140 = vadd.f32 %v1951, %v2139
  %v2141 = vpop.f32.mrf.mxu0
  %v2142 = vpop.f32.mrf.mxu0
  %v2143 = vadd.f32 %v1951, %v2142
  %v2144 = vpop.f32.mrf.mxu0
  %2145 = vmatprep.mubr.bf16.mxu0 0
  %2146 = vmatmul.mubr.bf16.gmra.mxu0 %v2011
  %v2147 = vpop.f32.mrf.mxu0
  %v2148 = vadd.f32 %v1951, %v2147
  %v2149 = vpop.f32.mrf.mxu0
  %v2150 = vpop.f32.mrf.mxu0
  %v2151 = vadd.f32 %v1951, %v2150
  %v2152 = vpop.f32.mrf.mxu0
  %2153 = vmatprep.mubr.bf16.mxu0 0
  %2154 = vmatmul.mubr.bf16.gmra.mxu0 %v2014
  %v2155 = vpop.f32.mrf.mxu0
  %v2156 = vadd.f32 %v1951, %v2155
  %v2157 = vpop.f32.mrf.mxu0
  %v2158 = vpop.f32.mrf.mxu0
  %v2159 = vadd.f32 %v1951, %v2158
  %v2160 = vpop.f32.mrf.mxu0
  %2161 = vmatprep.mubr.bf16.mxu0 0
  %2162 = vmatmul.mubr.bf16.gmra.mxu0 %v2017
  %v2163 = vpop.f32.mrf.mxu0
  %v2164 = vadd.f32 %v1951, %v2163
  %v2165 = vpop.f32.mrf.mxu0
  %v2166 = vpop.f32.mrf.mxu0
  %v2167 = vadd.f32 %v1951, %v2166
  %v2168 = vpop.f32.mrf.mxu0
  %2169 = vmatprep.mubr.bf16.mxu0 0
  %2170 = vmatmul.mubr.bf16.gmra.mxu0 %v2020
  %v2171 = vpop.f32.mrf.mxu0
  %v2172 = vadd.f32 %v1951, %v2171
  %v2173 = vpop.f32.mrf.mxu0
  %v2174 = vpop.f32.mrf.mxu0
  %v2175 = vadd.f32 %v1951, %v2174
  %v2176 = vpop.f32.mrf.mxu0
  %2177 = vmatprep.mubr.bf16.mxu0 0
  %2178 = vmatmul.mubr.bf16.gmra.mxu0 %v2023
  %v2179 = vpop.f32.mrf.mxu0
  %v2180 = vadd.f32 %v1951, %v2179
  %v2181 = vpop.f32.mrf.mxu0
  %v2182 = vpop.f32.mrf.mxu0
  %v2183 = vadd.f32 %v1951, %v2182
  %v2184 = vpop.f32.mrf.mxu0
  %2185 = vdwg.mxu0
  %2218 = vrot.lane.b32.xlu0 %v1617, 16
  %v2219 = vpop.permute.xlu0 %2218
  %2220 = vrot.lane.b32.xlu0 %v1618, 16
  %v2221 = vpop.permute.xlu0 %2220
  %2222 = vrot.lane.b32.xlu0 %v1619, 16
  %v2223 = vpop.permute.xlu0 %2222
  %2224 = vrot.lane.b32.xlu0 %v1620, 16
  %v2225 = vpop.permute.xlu0 %2224
  %2226 = vrot.lane.b32.xlu0 %v1621, 16
  %v2227 = vpop.permute.xlu0 %2226
  %2228 = vrot.lane.b32.xlu0 %v1622, 16
  %v2229 = vpop.permute.xlu0 %2228
  %2230 = vrot.lane.b32.xlu0 %v1623, 16
  %v2231 = vpop.permute.xlu0 %2230
  %2232 = vrot.lane.b32.xlu0 %v1624, 16
  %v2233 = vpop.permute.xlu0 %2232
  %2234 = vrot.lane.b32.xlu0 %v1625, 16
  %v2235 = vpop.permute.xlu0 %2234
  %2236 = vrot.lane.b32.xlu0 %v1626, 16
  %v2237 = vpop.permute.xlu0 %2236
  %2238 = vrot.lane.b32.xlu0 %v1627, 16
  %v2239 = vpop.permute.xlu0 %2238
  %2240 = vrot.lane.b32.xlu0 %v1628, 16
  %v2241 = vpop.permute.xlu0 %2240
  %2242 = vrot.lane.b32.xlu0 %v1629, 16
  %v2243 = vpop.permute.xlu0 %2242
  %2244 = vrot.lane.b32.xlu0 %v1630, 16
  %v2245 = vpop.permute.xlu0 %2244
  %2246 = vrot.lane.b32.xlu0 %v1631, 16
  %v2247 = vpop.permute.xlu0 %2246
  %2248 = vrot.lane.b32.xlu0 %v1632, 16
  %v2249 = vpop.permute.xlu0 %2248
  %2250 = vrot.lane.b32.xlu0 %v1633, 16
  %v2251 = vpop.permute.xlu0 %2250
  %2252 = vrot.lane.b32.xlu0 %v1634, 16
  %v2253 = vpop.permute.xlu0 %2252
  %2254 = vrot.lane.b32.xlu0 %v1635, 16
  %v2255 = vpop.permute.xlu0 %2254
  %2256 = vrot.lane.b32.xlu0 %v1636, 16
  %v2257 = vpop.permute.xlu0 %2256
  %2258 = vrot.lane.b32.xlu0 %v1637, 16
  %v2259 = vpop.permute.xlu0 %2258
  %2260 = vrot.lane.b32.xlu0 %v1638, 16
  %v2261 = vpop.permute.xlu0 %2260
  %2262 = vrot.lane.b32.xlu0 %v1639, 16
  %v2263 = vpop.permute.xlu0 %2262
  %2264 = vrot.lane.b32.xlu0 %v1640, 16
  %v2265 = vpop.permute.xlu0 %2264
  %2266 = vrot.lane.b32.xlu0 %v1641, 16
  %v2267 = vpop.permute.xlu0 %2266
  %2268 = vrot.lane.b32.xlu0 %v1642, 16
  %v2269 = vpop.permute.xlu0 %2268
  %2270 = vrot.lane.b32.xlu0 %v1643, 16
  %v2271 = vpop.permute.xlu0 %2270
  %2272 = vrot.lane.b32.xlu0 %v1644, 16
  %v2273 = vpop.permute.xlu0 %2272
  %2274 = vrot.lane.b32.xlu0 %v1645, 16
  %v2275 = vpop.permute.xlu0 %2274
  %2276 = vrot.lane.b32.xlu0 %v1646, 16
  %v2277 = vpop.permute.xlu0 %2276
  %2278 = vrot.lane.b32.xlu0 %v1647, 16
  %v2279 = vpop.permute.xlu0 %2278
  %2280 = vrot.lane.b32.xlu0 %v1648, 16
  %v2281 = vpop.permute.xlu0 %2280
  %v2314 = vsel %vm1680, %v1617, %v2219
  %v2315 = vsel %vm1680, %v1618, %v2221
  %v2316 = vsel %vm1680, %v1619, %v2223
  %v2317 = vsel %vm1680, %v1620, %v2225
  %v2318 = vsel %vm1680, %v1621, %v2227
  %v2319 = vsel %vm1680, %v1622, %v2229
  %v2320 = vsel %vm1680, %v1623, %v2231
  %v2321 = vsel %vm1680, %v1624, %v2233
  %v2322 = vsel %vm1680, %v1625, %v2235
  %v2323 = vsel %vm1680, %v1626, %v2237
  %v2324 = vsel %vm1680, %v1627, %v2239
  %v2325 = vsel %vm1680, %v1628, %v2241
  %v2326 = vsel %vm1680, %v1629, %v2243
  %v2327 = vsel %vm1680, %v1630, %v2245
  %v2328 = vsel %vm1680, %v1631, %v2247
  %v2329 = vsel %vm1680, %v1632, %v2249
  %v2330 = vsel %vm1680, %v1633, %v2251
  %v2331 = vsel %vm1680, %v1634, %v2253
  %v2332 = vsel %vm1680, %v1635, %v2255
  %v2333 = vsel %vm1680, %v1636, %v2257
  %v2334 = vsel %vm1680, %v1637, %v2259
  %v2335 = vsel %vm1680, %v1638, %v2261
  %v2336 = vsel %vm1680, %v1639, %v2263
  %v2337 = vsel %vm1680, %v1640, %v2265
  %v2338 = vsel %vm1680, %v1641, %v2267
  %v2339 = vsel %vm1680, %v1642, %v2269
  %v2340 = vsel %vm1680, %v1643, %v2271
  %v2341 = vsel %vm1680, %v1644, %v2273
  %v2342 = vsel %vm1680, %v1645, %v2275
  %v2343 = vsel %vm1680, %v1646, %v2277
  %v2344 = vsel %vm1680, %v1647, %v2279
  %v2345 = vsel %vm1680, %v1648, %v2281
  %v2346 = vmul.f32 %v2060, %v2314
  %v2347 = vmul.f32 %v2063, %v2315
  %v2348 = vmul.f32 %v2068, %v2316
  %v2349 = vmul.f32 %v2071, %v2317
  %v2350 = vmul.f32 %v2076, %v2318
  %v2351 = vmul.f32 %v2079, %v2319
  %v2352 = vmul.f32 %v2084, %v2320
  %v2353 = vmul.f32 %v2087, %v2321
  %v2354 = vmul.f32 %v2092, %v2322
  %v2355 = vmul.f32 %v2095, %v2323
  %v2356 = vmul.f32 %v2100, %v2324
  %v2357 = vmul.f32 %v2103, %v2325
  %v2358 = vmul.f32 %v2108, %v2326
  %v2359 = vmul.f32 %v2111, %v2327
  %v2360 = vmul.f32 %v2116, %v2328
  %v2361 = vmul.f32 %v2119, %v2329
  %v2362 = vmul.f32 %v2124, %v2330
  %v2363 = vmul.f32 %v2127, %v2331
  %v2364 = vmul.f32 %v2132, %v2332
  %v2365 = vmul.f32 %v2135, %v2333
  %v2366 = vmul.f32 %v2140, %v2334
  %v2367 = vmul.f32 %v2143, %v2335
  %v2368 = vmul.f32 %v2148, %v2336
  %v2369 = vmul.f32 %v2151, %v2337
  %v2370 = vmul.f32 %v2156, %v2338
  %v2371 = vmul.f32 %v2159, %v2339
  %v2372 = vmul.f32 %v2164, %v2340
  %v2373 = vmul.f32 %v2167, %v2341
  %v2374 = vmul.f32 %v2172, %v2342
  %v2375 = vmul.f32 %v2175, %v2343
  %v2376 = vmul.f32 %v2180, %v2344
  %v2377 = vmul.f32 %v2183, %v2345
  %vm2378 = vcmask 261120
  %v2379 = vsel %vm2378, %v2346, 0.0
  %v2380 = vrot.slane %v2379, 4
  %v2381 = vadd.f32 %v2379, %v2380
  %v2382 = vrot.slane %v2381, 2
  %v2383 = vadd.f32 %v2381, %v2382
  %v2384 = vrot.slane %v2383, 1
  %v2385 = vadd.f32 %v2383, %v2384
  %v2386 = vsel %vm2378, %v2347, 0.0
  %v2387 = vrot.slane %v2386, 4
  %v2388 = vadd.f32 %v2386, %v2387
  %v2389 = vrot.slane %v2388, 2
  %v2390 = vadd.f32 %v2388, %v2389
  %v2391 = vrot.slane %v2390, 1
  %v2392 = vadd.f32 %v2390, %v2391
  %v2393 = vsel %vm2378, %v2348, 0.0
  %v2394 = vrot.slane %v2393, 4
  %v2395 = vadd.f32 %v2393, %v2394
  %v2396 = vrot.slane %v2395, 2
  %v2397 = vadd.f32 %v2395, %v2396
  %v2398 = vrot.slane %v2397, 1
  %v2399 = vadd.f32 %v2397, %v2398
  %v2400 = vsel %vm2378, %v2349, 0.0
  %v2401 = vrot.slane %v2400, 4
  %v2402 = vadd.f32 %v2400, %v2401
  %v2403 = vrot.slane %v2402, 2
  %v2404 = vadd.f32 %v2402, %v2403
  %v2405 = vrot.slane %v2404, 1
  %v2406 = vadd.f32 %v2404, %v2405
  %v2407 = vsel %vm2378, %v2350, 0.0
  %v2408 = vrot.slane %v2407, 4
  %v2409 = vadd.f32 %v2407, %v2408
  %v2410 = vrot.slane %v2409, 2
  %v2411 = vadd.f32 %v2409, %v2410
  %v2412 = vrot.slane %v2411, 1
  %v2413 = vadd.f32 %v2411, %v2412
  %v2414 = vsel %vm2378, %v2351, 0.0
  %v2415 = vrot.slane %v2414, 4
  %v2416 = vadd.f32 %v2414, %v2415
  %v2417 = vrot.slane %v2416, 2
  %v2418 = vadd.f32 %v2416, %v2417
  %v2419 = vrot.slane %v2418, 1
  %v2420 = vadd.f32 %v2418, %v2419
  %v2421 = vsel %vm2378, %v2352, 0.0
  %v2422 = vrot.slane %v2421, 4
  %v2423 = vadd.f32 %v2421, %v2422
  %v2424 = vrot.slane %v2423, 2
  %v2425 = vadd.f32 %v2423, %v2424
  %v2426 = vrot.slane %v2425, 1
  %v2427 = vadd.f32 %v2425, %v2426
  %v2428 = vsel %vm2378, %v2353, 0.0
  %v2429 = vrot.slane %v2428, 4
  %v2430 = vadd.f32 %v2428, %v2429
  %v2431 = vrot.slane %v2430, 2
  %v2432 = vadd.f32 %v2430, %v2431
  %v2433 = vrot.slane %v2432, 1
  %v2434 = vadd.f32 %v2432, %v2433
  %v2435 = vsel %vm2378, %v2354, 0.0
  %v2436 = vrot.slane %v2435, 4
  %v2437 = vadd.f32 %v2435, %v2436
  %v2438 = vrot.slane %v2437, 2
  %v2439 = vadd.f32 %v2437, %v2438
  %v2440 = vrot.slane %v2439, 1
  %v2441 = vadd.f32 %v2439, %v2440
  %v2442 = vsel %vm2378, %v2355, 0.0
  %v2443 = vrot.slane %v2442, 4
  %v2444 = vadd.f32 %v2442, %v2443
  %v2445 = vrot.slane %v2444, 2
  %v2446 = vadd.f32 %v2444, %v2445
  %v2447 = vrot.slane %v2446, 1
  %v2448 = vadd.f32 %v2446, %v2447
  %v2449 = vsel %vm2378, %v2356, 0.0
  %v2450 = vrot.slane %v2449, 4
  %v2451 = vadd.f32 %v2449, %v2450
  %v2452 = vrot.slane %v2451, 2
  %v2453 = vadd.f32 %v2451, %v2452
  %v2454 = vrot.slane %v2453, 1
  %v2455 = vadd.f32 %v2453, %v2454
  %v2456 = vsel %vm2378, %v2357, 0.0
  %v2457 = vrot.slane %v2456, 4
  %v2458 = vadd.f32 %v2456, %v2457
  %v2459 = vrot.slane %v2458, 2
  %v2460 = vadd.f32 %v2458, %v2459
  %v2461 = vrot.slane %v2460, 1
  %v2462 = vadd.f32 %v2460, %v2461
  %v2463 = vsel %vm2378, %v2358, 0.0
  %v2464 = vrot.slane %v2463, 4
  %v2465 = vadd.f32 %v2463, %v2464
  %v2466 = vrot.slane %v2465, 2
  %v2467 = vadd.f32 %v2465, %v2466
  %v2468 = vrot.slane %v2467, 1
  %v2469 = vadd.f32 %v2467, %v2468
  %v2470 = vsel %vm2378, %v2359, 0.0
  %v2471 = vrot.slane %v2470, 4
  %v2472 = vadd.f32 %v2470, %v2471
  %v2473 = vrot.slane %v2472, 2
  %v2474 = vadd.f32 %v2472, %v2473
  %v2475 = vrot.slane %v2474, 1
  %v2476 = vadd.f32 %v2474, %v2475
  %v2477 = vsel %vm2378, %v2360, 0.0
  %v2478 = vrot.slane %v2477, 4
  %v2479 = vadd.f32 %v2477, %v2478
  %v2480 = vrot.slane %v2479, 2
  %v2481 = vadd.f32 %v2479, %v2480
  %v2482 = vrot.slane %v2481, 1
  %v2483 = vadd.f32 %v2481, %v2482
  %v2484 = vsel %vm2378, %v2361, 0.0
  %v2485 = vrot.slane %v2484, 4
  %v2486 = vadd.f32 %v2484, %v2485
  %v2487 = vrot.slane %v2486, 2
  %v2488 = vadd.f32 %v2486, %v2487
  %v2489 = vrot.slane %v2488, 1
  %v2490 = vadd.f32 %v2488, %v2489
  %v2491 = vsel %vm2378, %v2362, 0.0
  %v2492 = vrot.slane %v2491, 4
  %v2493 = vadd.f32 %v2491, %v2492
  %v2494 = vrot.slane %v2493, 2
  %v2495 = vadd.f32 %v2493, %v2494
  %v2496 = vrot.slane %v2495, 1
  %v2497 = vadd.f32 %v2495, %v2496
  %v2498 = vsel %vm2378, %v2363, 0.0
  %v2499 = vrot.slane %v2498, 4
  %v2500 = vadd.f32 %v2498, %v2499
  %v2501 = vrot.slane %v2500, 2
  %v2502 = vadd.f32 %v2500, %v2501
  %v2503 = vrot.slane %v2502, 1
  %v2504 = vadd.f32 %v2502, %v2503
  %v2505 = vsel %vm2378, %v2364, 0.0
  %v2506 = vrot.slane %v2505, 4
  %v2507 = vadd.f32 %v2505, %v2506
  %v2508 = vrot.slane %v2507, 2
  %v2509 = vadd.f32 %v2507, %v2508
  %v2510 = vrot.slane %v2509, 1
  %v2511 = vadd.f32 %v2509, %v2510
  %v2512 = vsel %vm2378, %v2365, 0.0
  %v2513 = vrot.slane %v2512, 4
  %v2514 = vadd.f32 %v2512, %v2513
  %v2515 = vrot.slane %v2514, 2
  %v2516 = vadd.f32 %v2514, %v2515
  %v2517 = vrot.slane %v2516, 1
  %v2518 = vadd.f32 %v2516, %v2517
  %v2519 = vsel %vm2378, %v2366, 0.0
  %v2520 = vrot.slane %v2519, 4
  %v2521 = vadd.f32 %v2519, %v2520
  %v2522 = vrot.slane %v2521, 2
  %v2523 = vadd.f32 %v2521, %v2522
  %v2524 = vrot.slane %v2523, 1
  %v2525 = vadd.f32 %v2523, %v2524
  %v2526 = vsel %vm2378, %v2367, 0.0
  %v2527 = vrot.slane %v2526, 4
  %v2528 = vadd.f32 %v2526, %v2527
  %v2529 = vrot.slane %v2528, 2
  %v2530 = vadd.f32 %v2528, %v2529
  %v2531 = vrot.slane %v2530, 1
  %v2532 = vadd.f32 %v2530, %v2531
  %v2533 = vsel %vm2378, %v2368, 0.0
  %v2534 = vrot.slane %v2533, 4
  %v2535 = vadd.f32 %v2533, %v2534
  %v2536 = vrot.slane %v2535, 2
  %v2537 = vadd.f32 %v2535, %v2536
  %v2538 = vrot.slane %v2537, 1
  %v2539 = vadd.f32 %v2537, %v2538
  %v2540 = vsel %vm2378, %v2369, 0.0
  %v2541 = vrot.slane %v2540, 4
  %v2542 = vadd.f32 %v2540, %v2541
  %v2543 = vrot.slane %v2542, 2
  %v2544 = vadd.f32 %v2542, %v2543
  %v2545 = vrot.slane %v2544, 1
  %v2546 = vadd.f32 %v2544, %v2545
  %v2547 = vsel %vm2378, %v2370, 0.0
  %v2548 = vrot.slane %v2547, 4
  %v2549 = vadd.f32 %v2547, %v2548
  %v2550 = vrot.slane %v2549, 2
  %v2551 = vadd.f32 %v2549, %v2550
  %v2552 = vrot.slane %v2551, 1
  %v2553 = vadd.f32 %v2551, %v2552
  %v2554 = vsel %vm2378, %v2371, 0.0
  %v2555 = vrot.slane %v2554, 4
  %v2556 = vadd.f32 %v2554, %v2555
  %v2557 = vrot.slane %v2556, 2
  %v2558 = vadd.f32 %v2556, %v2557
  %v2559 = vrot.slane %v2558, 1
  %v2560 = vadd.f32 %v2558, %v2559
  %v2561 = vsel %vm2378, %v2372, 0.0
  %v2562 = vrot.slane %v2561, 4
  %v2563 = vadd.f32 %v2561, %v2562
  %v2564 = vrot.slane %v2563, 2
  %v2565 = vadd.f32 %v2563, %v2564
  %v2566 = vrot.slane %v2565, 1
  %v2567 = vadd.f32 %v2565, %v2566
  %v2568 = vsel %vm2378, %v2373, 0.0
  %v2569 = vrot.slane %v2568, 4
  %v2570 = vadd.f32 %v2568, %v2569
  %v2571 = vrot.slane %v2570, 2
  %v2572 = vadd.f32 %v2570, %v2571
  %v2573 = vrot.slane %v2572, 1
  %v2574 = vadd.f32 %v2572, %v2573
  %v2575 = vsel %vm2378, %v2374, 0.0
  %v2576 = vrot.slane %v2575, 4
  %v2577 = vadd.f32 %v2575, %v2576
  %v2578 = vrot.slane %v2577, 2
  %v2579 = vadd.f32 %v2577, %v2578
  %v2580 = vrot.slane %v2579, 1
  %v2581 = vadd.f32 %v2579, %v2580
  %v2582 = vsel %vm2378, %v2375, 0.0
  %v2583 = vrot.slane %v2582, 4
  %v2584 = vadd.f32 %v2582, %v2583
  %v2585 = vrot.slane %v2584, 2
  %v2586 = vadd.f32 %v2584, %v2585
  %v2587 = vrot.slane %v2586, 1
  %v2588 = vadd.f32 %v2586, %v2587
  %v2589 = vsel %vm2378, %v2376, 0.0
  %v2590 = vrot.slane %v2589, 4
  %v2591 = vadd.f32 %v2589, %v2590
  %v2592 = vrot.slane %v2591, 2
  %v2593 = vadd.f32 %v2591, %v2592
  %v2594 = vrot.slane %v2593, 1
  %v2595 = vadd.f32 %v2593, %v2594
  %v2596 = vsel %vm2378, %v2377, 0.0
  %v2597 = vrot.slane %v2596, 4
  %v2598 = vadd.f32 %v2596, %v2597
  %v2599 = vrot.slane %v2598, 2
  %v2600 = vadd.f32 %v2598, %v2599
  %v2601 = vrot.slane %v2600, 1
  %v2602 = vadd.f32 %v2600, %v2601
  %v2603 = vld [vmem:[%s4] sm:$0xf]
  %v2604 = vld [vmem:[%s4 + $0x4] sm:$0xf]
  %v2605 = vld [vmem:[%s4 + $0x8] sm:$0xf]
  %v2606 = vld [vmem:[%s4 + $0xc] sm:$0xf]
  %v2607 = vunpack.c.l.bf16 %v2603
  %v2608 = vunpack.c.l.bf16 %v2604
  %v2609 = vunpack.c.l.bf16 %v2605
  %v2610 = vunpack.c.l.bf16 %v2606
  %2615 = vrot.lane.b32.xlu0 %v2607, 32
  %v2616 = vpop.permute.xlu0 %2615
  %2617 = vrot.lane.b32.xlu0 %v2608, 32
  %v2618 = vpop.permute.xlu0 %2617
  %2619 = vrot.lane.b32.xlu0 %v2609, 32
  %v2620 = vpop.permute.xlu0 %2619
  %2621 = vrot.lane.b32.xlu0 %v2610, 32
  %v2622 = vpop.permute.xlu0 %2621
  %v2627 = vsel %vm2378, %v2607, %v2616
  %v2628 = vsel %vm2378, %v2608, %v2618
  %v2629 = vsel %vm2378, %v2609, %v2620
  %v2630 = vsel %vm2378, %v2610, %v2622
  %v2631 = vld [vmem:[%s13] sm:$0xf]
  %v2632 = vld [vmem:[%s13 + $0x4] sm:$0xf]
  %v2633 = vld [vmem:[%s13 + $0x8] sm:$0xf]
  %v2634 = vld [vmem:[%s13 + $0xc] sm:$0xf]
  %v2635 = vpack.c.bf16 %v2385, %v2385
  %v2636 = vpack.c.bf16 %v2392, %v2392
  %v2637 = vpack.c.bf16 %v2399, %v2399
  %v2638 = vpack.c.bf16 %v2406, %v2406
  %v2639 = vpack.c.bf16 %v2413, %v2413
  %v2640 = vpack.c.bf16 %v2420, %v2420
  %v2641 = vpack.c.bf16 %v2427, %v2427
  %v2642 = vpack.c.bf16 %v2434, %v2434
  %v2643 = vpack.c.bf16 %v2441, %v2441
  %v2644 = vpack.c.bf16 %v2448, %v2448
  %v2645 = vpack.c.bf16 %v2455, %v2455
  %v2646 = vpack.c.bf16 %v2462, %v2462
  %v2647 = vpack.c.bf16 %v2469, %v2469
  %v2648 = vpack.c.bf16 %v2476, %v2476
  %v2649 = vpack.c.bf16 %v2483, %v2483
  %v2650 = vpack.c.bf16 %v2490, %v2490
  %v2651 = vpack.c.bf16 %v2497, %v2497
  %v2652 = vpack.c.bf16 %v2504, %v2504
  %v2653 = vpack.c.bf16 %v2511, %v2511
  %v2654 = vpack.c.bf16 %v2518, %v2518
  %v2655 = vpack.c.bf16 %v2525, %v2525
  %v2656 = vpack.c.bf16 %v2532, %v2532
  %v2657 = vpack.c.bf16 %v2539, %v2539
  %v2658 = vpack.c.bf16 %v2546, %v2546
  %v2659 = vpack.c.bf16 %v2553, %v2553
  %v2660 = vpack.c.bf16 %v2560, %v2560
  %v2661 = vpack.c.bf16 %v2567, %v2567
  %v2662 = vpack.c.bf16 %v2574, %v2574
  %v2663 = vpack.c.bf16 %v2581, %v2581
  %v2664 = vpack.c.bf16 %v2588, %v2588
  %v2665 = vpack.c.bf16 %v2595, %v2595
  %v2666 = vpack.c.bf16 %v2602, %v2602
  %v2667 = vld [vmem:[%s14] sm:$0x1]
  %v2669 = vlaneseq
  %v2670 = vshrl.u32 %v2669, 7
  %v2671 = vsub.s32 0, %v2670
  %v2672 = vrot.slane %v2667, %v2671
  %v2706 = vunpack.c.l.b16 %v2635
  %v2707 = vunpack.c.l.b16 %v2636
  %v2708 = vunpack.c.l.b16 %v2637
  %v2709 = vunpack.c.l.b16 %v2638
  %v2710 = vunpack.c.l.b16 %v2639
  %v2711 = vunpack.c.l.b16 %v2640
  %v2712 = vunpack.c.l.b16 %v2641
  %v2713 = vunpack.c.l.b16 %v2642
  %v2714 = vunpack.c.l.b16 %v2643
  %v2715 = vunpack.c.l.b16 %v2644
  %v2716 = vunpack.c.l.b16 %v2645
  %v2717 = vunpack.c.l.b16 %v2646
  %v2718 = vunpack.c.l.b16 %v2647
  %v2719 = vunpack.c.l.b16 %v2648
  %v2720 = vunpack.c.l.b16 %v2649
  %v2721 = vunpack.c.l.b16 %v2650
  %v2722 = vunpack.c.l.b16 %v2651
  %v2723 = vunpack.c.l.b16 %v2652
  %v2724 = vunpack.c.l.b16 %v2653
  %v2725 = vunpack.c.l.b16 %v2654
  %v2726 = vunpack.c.l.b16 %v2655
  %v2727 = vunpack.c.l.b16 %v2656
  %v2728 = vunpack.c.l.b16 %v2657
  %v2729 = vunpack.c.l.b16 %v2658
  %v2730 = vunpack.c.l.b16 %v2659
  %v2731 = vunpack.c.l.b16 %v2660
  %v2732 = vunpack.c.l.b16 %v2661
  %v2733 = vunpack.c.l.b16 %v2662
  %v2734 = vunpack.c.l.b16 %v2663
  %v2735 = vunpack.c.l.b16 %v2664
  %v2736 = vunpack.c.l.b16 %v2665
  %v2737 = vunpack.c.l.b16 %v2666
  %vm2738 = vcmask 1041409
  %v2739 = vsel %vm2738, %v2707, %v2706
  %vm2740 = vcmask 1042434
  %v2741 = vsel %vm2740, %v2708, %v2739
  %vm2742 = vcmask 1043459
  %v2743 = vsel %vm2742, %v2709, %v2741
  %vm2744 = vcmask 1044484
  %v2745 = vsel %vm2744, %v2710, %v2743
  %vm2746 = vcmask 1045509
  %v2747 = vsel %vm2746, %v2711, %v2745
  %vm2748 = vcmask 1046534
  %v2749 = vsel %vm2748, %v2712, %v2747
  %vm2750 = vcmask 1047559
  %v2751 = vsel %vm2750, %v2713, %v2749
  %v2752 = vsel %vm2738, %v2715, %v2714
  %v2753 = vsel %vm2740, %v2716, %v2752
  %v2754 = vsel %vm2742, %v2717, %v2753
  %v2755 = vsel %vm2744, %v2718, %v2754
  %v2756 = vsel %vm2746, %v2719, %v2755
  %v2757 = vsel %vm2748, %v2720, %v2756
  %v2758 = vsel %vm2750, %v2721, %v2757
  %v2759 = vsel %vm2738, %v2723, %v2722
  %v2760 = vsel %vm2740, %v2724, %v2759
  %v2761 = vsel %vm2742, %v2725, %v2760
  %v2762 = vsel %vm2744, %v2726, %v2761
  %v2763 = vsel %vm2746, %v2727, %v2762
  %v2764 = vsel %vm2748, %v2728, %v2763
  %v2765 = vsel %vm2750, %v2729, %v2764
  %v2766 = vsel %vm2738, %v2731, %v2730
  %v2767 = vsel %vm2740, %v2732, %v2766
  %v2768 = vsel %vm2742, %v2733, %v2767
  %v2769 = vsel %vm2744, %v2734, %v2768
  %v2770 = vsel %vm2746, %v2735, %v2769
  %v2771 = vsel %vm2748, %v2736, %v2770
  %v2772 = vsel %vm2750, %v2737, %v2771
  %v2773 = vpack.c.b16 %v2758, %v2751
  %v2774 = vpack.c.b16 %v2772, %v2765
  %v2779 = vunpack.c.l.b16 %v2631
  %v2780 = vunpack.c.l.b16 %v2632
  %v2781 = vunpack.c.l.b16 %v2633
  %v2782 = vunpack.c.l.b16 %v2634
  %v2783 = vpack.c.b16 %v2780, %v2779
  %v2784 = vpack.c.b16 %v2782, %v2781
  %v2788 = vsel %vm2378, %v2773, 0
  %v2791 = vsel %vm2378, %v2774, 0
  %2793 = vmatprep.subr.bf16.mxu0 0
  %2794 = vmatpush1.bf16.msra.mxu0 0
  %2795 = vmatprep.subr.bf16.mxu0 0
  %2796 = vmatpush1.bf16.msra.mxu0 0
  %2797 = vmatprep.subr.bf16.mxu0 0
  %2798 = vmatpush1.bf16.msra.mxu0 0
  %2799 = vmatprep.subr.bf16.mxu0 0
  %2800 = vmatpush1.bf16.msra.mxu0 0
  %2801 = vmatprep.subr.bf16.mxu0 0
  %2802 = vmatpush1.bf16.msra.mxu0 0
  %2803 = vmatprep.subr.bf16.mxu0 0
  %2804 = vmatpush1.bf16.msra.mxu0 0
  %2805 = vmatprep.subr.bf16.mxu0 0
  %2806 = vmatpush1.bf16.msra.mxu0 %v2784
  %2807 = vmatprep.subr.bf16.mxu0 0
  %2808 = vmatpush1.bf16.msra.mxu0 %v2783
  %2809 = vmatprep.subr.bf16.mxu0 0
  %2810 = vmatpush2.bf16.msra.mxu0 0
  %2811 = vmatprep.subr.bf16.mxu0 0
  %2812 = vmatpush2.bf16.msra.mxu0 0
  %2813 = vmatprep.subr.bf16.mxu0 0
  %2814 = vmatpush2.bf16.msra.mxu0 0
  %2815 = vmatprep.subr.bf16.mxu0 0
  %2816 = vmatpush2.bf16.msra.mxu0 0
  %2817 = vmatprep.subr.bf16.mxu0 0
  %2818 = vmatpush2.bf16.msra.mxu0 0
  %2819 = vmatprep.subr.bf16.mxu0 0
  %2820 = vmatpush2.bf16.msra.mxu0 0
  %2821 = vmatprep.subr.bf16.mxu0 0
  %2822 = vmatpush2.bf16.msra.mxu0 0
  %2823 = vmatprep.subr.bf16.mxu0 0
  %2824 = vmatpush2.bf16.msra.mxu0 0
  %2825 = vmatprep.mubr.bf16.mxu0 0
  %2826 = vmatmul.mubr.bf16.gmra.mxu0 %v2788
  %v2827 = vpop.f32.mrf.mxu0
  %v2828 = vadd.f32 %v2672, %v2827
  %v2829 = vpop.f32.mrf.mxu0
  %v2830 = vpop.f32.mrf.mxu0
  %v2831 = vadd.f32 %v2672, %v2830
  %v2832 = vpop.f32.mrf.mxu0
  %2833 = vmatprep.mubr.bf16.mxu0 0
  %2834 = vmatmul.mubr.bf16.gmra.mxu0 %v2791
  %v2835 = vpop.f32.mrf.mxu0
  %v2836 = vadd.f32 %v2672, %v2835
  %v2837 = vpop.f32.mrf.mxu0
  %v2838 = vpop.f32.mrf.mxu0
  %v2839 = vadd.f32 %v2672, %v2838
  %v2840 = vpop.f32.mrf.mxu0
  %2841 = vdwg.mxu0
  %v2842 = vadd.f32 %v2828, %v2627
  %v2843 = vadd.f32 %v2831, %v2628
  %v2844 = vadd.f32 %v2836, %v2629
  %v2845 = vadd.f32 %v2839, %v2630
  %v2846 = vpack.c.bf16 %v2843, %v2842
  %v2847 = vpack.c.bf16 %v2845, %v2844
  %v2850 = vunpack.c.l.b16 %v2846
  %v2851 = vunpack.c.h.b16 %v2846
  %v2852 = vunpack.c.l.b16 %v2847
  %v2853 = vunpack.c.h.b16 %v2847
  %v2854 = vpack.c.b16 %v2850, %v2850
  %v2855 = vpack.c.b16 %v2851, %v2851
  %v2856 = vpack.c.b16 %v2852, %v2852
  %v2857 = vpack.c.b16 %v2853, %v2853
  %vm2862 = vcmask 519168
  %2863 = vst.msk [vmem:[%s15] sm:$0xf] %vm2862, %v2854
  %2864 = vst.msk [vmem:[%s15 + $0x4] sm:$0xf] %vm2862, %v2855
  %2865 = vst.msk [vmem:[%s15 + $0x8] sm:$0xf] %vm2862, %v2856
  %2866 = vst.msk [vmem:[%s15 + $0xc] sm:$0xf] %vm2862, %v2857
  // Predicated region
  $region62: #{pallas_forward.4} parent=0 // pred_check
    _
  $region63: #{pallas_forward.4} parent=0 // pred_check_branch
    %2868 = sbr.rel (0) target = $region65
  $region64: #{pallas_forward.4} parent=0 // pred_region
    _
  $region65: #{pallas_forward.4} parent=0 // pred_fallthru
    _
  // Predicated region
  $region66: #{pallas_forward.4} parent=0 // pred_check
    _
  $region67: #{pallas_forward.4} parent=0 // pred_check_branch
    %2870 = sbr.rel (0) target = $region69
  $region68: #{pallas_forward.4} parent=0 // pred_region
    _
  $region69: #{pallas_forward.4} parent=0 // pred_fallthru
    _

// kernel: pallas_forward.5
$region0: #{pallas_forward.5}
  #allocation0 [shape = 'u32[]', space=smem, size = 0x4, offset = 0x4, fixed_abs, tag = 'smem constant byte address 0x4 - core index']
  #allocation1 [shape = 'u32[144,128]{1,0:T(1,128)}', space=vmem, size = 0x12000, scoped, tag = 'internal scratch']
  %s0 = inlined_call_operand.vmem [shape: bf16[2,32,32], index: 0, kind: input, shape index: {}]
  %s1 = inlined_call_operand.vmem [shape: f32[2,4,32], index: 1, kind: input, shape index: {}]
  %s2 = inlined_call_operand.vmem [shape: bf16[32,32], index: 2, kind: input, shape index: {}]
  %s3 = inlined_call_operand.vmem [shape: f32[1,32], index: 3, kind: input, shape index: {}]
  %s4 = inlined_call_operand.vmem [shape: bf16[32,32], index: 4, kind: input, shape index: {}]
  %s5 = inlined_call_operand.vmem [shape: f32[1,32], index: 5, kind: input, shape index: {}]
  %s6 = inlined_call_operand.vmem [shape: bf16[32,32], index: 6, kind: input, shape index: {}]
  %s7 = inlined_call_operand.vmem [shape: f32[1,32], index: 7, kind: input, shape index: {}]
  %s8 = inlined_call_operand.vmem [shape: bf16[32,16], index: 8, kind: input, shape index: {}]
  %s9 = inlined_call_operand.vmem [shape: f32[1,16], index: 9, kind: input, shape index: {}]
  %s10 = inlined_call_operand.vmem [shape: bf16[16,32], index: 10, kind: input, shape index: {}]
  %s11 = inlined_call_operand.vmem [shape: f32[1,32], index: 11, kind: input, shape index: {}]
  %s12 = inlined_call_operand.vmem [shape: bf16[32,32], index: 12, kind: input, shape index: {}]
  %s13 = inlined_call_operand.vmem [shape: f32[1,32], index: 13, kind: input, shape index: {}]
  %s14 = inlined_call_operand.vmem [shape: bf16[32,32], index: 14, kind: input, shape index: {}]
  %s15 = inlined_call_operand.vmem [shape: f32[1,32], index: 15, kind: input, shape index: {}]
  %s16 = inlined_call_operand.vmem [shape: bf16[32,32], index: 16, kind: input, shape index: {}]
  %s17 = inlined_call_operand.vmem [shape: f32[1,32], index: 17, kind: input, shape index: {}]
  %s18 = inlined_call_operand.vmem [shape: bf16[32,32], index: 18, kind: input, shape index: {}]
  %s19 = inlined_call_operand.vmem [shape: f32[1,32], index: 19, kind: input, shape index: {}]
  %s20 = inlined_call_operand.vmem [shape: bf16[32,16], index: 20, kind: input, shape index: {}]
  %s21 = inlined_call_operand.vmem [shape: f32[1,16], index: 21, kind: input, shape index: {}]
  %s22 = inlined_call_operand.vmem [shape: bf16[16,3], index: 22, kind: input, shape index: {}]
  %s23 = inlined_call_operand.vmem [shape: f32[1,3], index: 23, kind: input, shape index: {}]
  %s24 = inlined_call_operand.hbm [shape: f32[2,32,32], index: 24, kind: output, shape index: {0}]
  %s25 = inlined_call_operand.vmem [shape: f32[2,32,3], index: 25, kind: output, shape index: {1}]
  %26 = xla_tuple %s24, %s25
  %s27 = sld [smem:[#allocation0]]
  $region137: #{pallas_forward.5} parent=0
    _
  %s29 = ssub.s32 1, %s27
  %s30 = scalar_select 0, %s29, %s27
  $region1: #{pallas_forward.5} parent=0
    #allocation2 [shape = 'u8[32768]{0}', space=vmem, size = 0x8000, scoped, tag = 'output window, operand 0']
    #allocation3 [shape = 's32[2]{0}', space=sflag, size = 0x8, scoped, tag = 'scoped memory for pallas_forward.5']
    %31 = vsyncpa [#allocation3], 0
    %s32 = scalar_lea.sflag [#allocation3], 1
    %33 = vsyncpa %s32, 0
    loop: start=0, step=1, limit=4
    $region2: #{pallas_forward.5} parent=1 // loop_pre_header
      _
    $region3: #{pallas_forward.5} parent=1 // loop_header
      %s35 = sphi 0, %s39
      %p36 = scmp.ge.s32.totalorder %s35, 4
      %s42 = sphi 0, %s54
      %s43 = sphi 0, %s50
      %s44 = sphi 0, %s42
      %s45 = sphi 0, %s43
      %s46 = sphi 0, %s44
      %s47 = sphi 0, %s45
      %s59 = sphi 0, %s61
      %s62 = sphi 0, %s59
      %s63 = sphi 0, %s62
      %s79 = sphi 0, %s63
      %s85 = sphi 0, %s87
      %s88 = sphi 0, %s85
      %s89 = sphi 0, %s88
      %s105 = sphi 0, %s89
      %s109 = sphi 0, %s109
      %s111 = sphi 0, %s109
      %s112 = sphi 0, %s111
      %s126 = sphi 0, %s112
      %s130 = sphi 0, %s130
      %s132 = sphi 0, %s130
      %s133 = sphi 0, %s132
      %s147 = sphi 0, %s133
      %s151 = sphi 0, %s151
      %s153 = sphi 0, %s151
      %s154 = sphi 0, %s153
      %s168 = sphi 0, %s154
      %s172 = sphi 0, %s172
      %s174 = sphi 0, %s172
      %s175 = sphi 0, %s174
      %s189 = sphi 0, %s175
      %s193 = sphi 0, %s193
      %s195 = sphi 0, %s193
      %s196 = sphi 0, %s195
      %s210 = sphi 0, %s196
      %s214 = sphi 0, %s214
      %s216 = sphi 0, %s214
      %s217 = sphi 0, %s216
      %s231 = sphi 0, %s217
      %s235 = sphi 0, %s235
      %s237 = sphi 0, %s235
      %s238 = sphi 0, %s237
      %s252 = sphi 0, %s238
      %s256 = sphi 0, %s256
      %s258 = sphi 0, %s256
      %s259 = sphi 0, %s258
      %s273 = sphi 0, %s259
      %s277 = sphi 0, %s277
      %s279 = sphi 0, %s277
      %s280 = sphi 0, %s279
      %s294 = sphi 0, %s280
      %s298 = sphi 0, %s298
      %s300 = sphi 0, %s298
      %s301 = sphi 0, %s300
      %s315 = sphi 0, %s301
      %s319 = sphi 0, %s319
      %s321 = sphi 0, %s319
      %s322 = sphi 0, %s321
      %s336 = sphi 0, %s322
      %s340 = sphi 0, %s340
      %s342 = sphi 0, %s340
      %s343 = sphi 0, %s342
      %s357 = sphi 0, %s343
      %s361 = sphi 0, %s361
      %s363 = sphi 0, %s361
      %s364 = sphi 0, %s363
      %s378 = sphi 0, %s364
      %s382 = sphi 0, %s382
      %s384 = sphi 0, %s382
      %s385 = sphi 0, %s384
      %s399 = sphi 0, %s385
      %s403 = sphi 0, %s403
      %s405 = sphi 0, %s403
      %s406 = sphi 0, %s405
      %s420 = sphi 0, %s406
      %s424 = sphi 0, %s424
      %s426 = sphi 0, %s424
      %s427 = sphi 0, %s426
      %s441 = sphi 0, %s427
      %s445 = sphi 0, %s445
      %s447 = sphi 0, %s445
      %s448 = sphi 0, %s447
      %s462 = sphi 0, %s448
      %s466 = sphi 0, %s466
      %s468 = sphi 0, %s466
      %s469 = sphi 0, %s468
      %s483 = sphi 0, %s469
      %s487 = sphi 0, %s487
      %s489 = sphi 0, %s487
      %s490 = sphi 0, %s489
      %s504 = sphi 0, %s490
      %s508 = sphi 0, %s508
      %s510 = sphi 0, %s508
      %s511 = sphi 0, %s510
      %s525 = sphi 0, %s511
      %s529 = sphi 0, %s529
      %s531 = sphi 0, %s529
      %s532 = sphi 0, %s531
      %s546 = sphi 0, %s532
      %s550 = sphi 0, %s550
      %s552 = sphi 0, %s550
      %s553 = sphi 0, %s552
      %s567 = sphi 0, %s553
      %s575 = sphi 0, %s577
      %s578 = sphi 0, %s575
      %s579 = sphi 0, %s578
      %s595 = sphi 0, %s579
      %s603 = sphi 0, %s605
      %s606 = sphi 0, %s603
      %s607 = sphi 0, %s606
      %s623 = sphi 0, %s607
    $region4: #{pallas_forward.5} parent=1 // loop_header_branch
      %38 = sbr.rel (%p36) target = $region8
    $region5: #{pallas_forward.5} parent=1 // loop_body
      %s40 = ssub.s32 %s35, 1
      %s41 = ssub.s32 %s35, 2
      %s48 = sadd.s32 1, %s43
      %p49 = scmp.ge.s32.totalorder %s48, 1
      %s50 = scalar_select %p49, 0, %s48
      %s51 = sadd.s32 1, %s42
      %s52 = scalar_select %p49, %s51, %s42
      %p53 = scmp.ge.s32.totalorder %s52, 2
      %s54 = scalar_select %p53, 0, %s52
      %s55 = ssub.s32 %s42, %s54
      %s56 = ssub.s32 %s43, %s50
      %s57 = sor.u32 %s55, %s56
      %p58 = scmp.eq.s32.totalorder %s57, 0
      %s60 = sadd.s32 %s59, 1
      %s61 = scalar_select %p58, %s59, %s60
      %p64 = pneg %p58
      %p65 = scmp.eq.s32.totalorder %s35, 1
      %p66 = por %p64, %p65
      %p67 = scmp.ne.s32.totalorder %s59, %s62
      %p68 = scmp.eq.s32.totalorder %s35, 0
      %p69 = por %p67, %p68
      %p70 = scmp.ne.s32.totalorder %s59, %s62
      %p71 = scmp.eq.s32.totalorder %s40, 1
      %p72 = por %p70, %p71
      %p73 = scmp.ne.s32.totalorder %s62, %s63
      %p74 = scmp.eq.s32.totalorder %s40, 0
      %p75 = por %p73, %p74
      %p76 = scmp.ne.s32.totalorder %s62, %s63
      %p77 = scmp.eq.s32.totalorder %s41, 1
      %p78 = por %p76, %p77
      %p80 = scmp.ne.s32.totalorder %s63, %s79
      %p81 = scmp.eq.s32.totalorder %s41, 0
      %p82 = por %p80, %p81
      %s83 = ssub.s32 %s42, %s54
      %p84 = scmp.eq.s32.totalorder %s83, 0
      %s86 = sadd.s32 %s85, 1
      %s87 = scalar_select %p84, %s85, %s86
      %p90 = pneg %p84
      %p91 = scmp.eq.s32.totalorder %s35, 1
      %p92 = por %p90, %p91
      %p93 = scmp.ne.s32.totalorder %s85, %s88
      %p94 = scmp.eq.s32.totalorder %s35, 0
      %p95 = por %p93, %p94
      %p96 = scmp.ne.s32.totalorder %s85, %s88
      %p97 = scmp.eq.s32.totalorder %s40, 1
      %p98 = por %p96, %p97
      %p99 = scmp.ne.s32.totalorder %s88, %s89
      %p100 = scmp.eq.s32.totalorder %s40, 0
      %p101 = por %p99, %p100
      %p102 = scmp.ne.s32.totalorder %s88, %s89
      %p103 = scmp.eq.s32.totalorder %s41, 1
      %p104 = por %p102, %p103
      %p106 = scmp.ne.s32.totalorder %s89, %s105
      %p107 = scmp.eq.s32.totalorder %s41, 0
      %p108 = por %p106, %p107
      %s110 = sadd.s32 %s109, 1
      %p113 = scmp.eq.s32.totalorder %s35, 1
      %p114 = scmp.ne.s32.totalorder %s109, %s111
      %p115 = scmp.eq.s32.totalorder %s35, 0
      %p116 = por %p114, %p115
      %p117 = scmp.ne.s32.totalorder %s109, %s111
      %p118 = scmp.eq.s32.totalorder %s40, 1
      %p119 = por %p117, %p118
      %p120 = scmp.ne.s32.totalorder %s111, %s112
      %p121 = scmp.eq.s32.totalorder %s40, 0
      %p122 = por %p120, %p121
      %p123 = scmp.ne.s32.totalorder %s111, %s112
      %p124 = scmp.eq.s32.totalorder %s41, 1
      %p125 = por %p123, %p124
      %p127 = scmp.ne.s32.totalorder %s112, %s126
      %p128 = scmp.eq.s32.totalorder %s41, 0
      %p129 = por %p127, %p128
      %s131 = sadd.s32 %s130, 1
      %p134 = scmp.eq.s32.totalorder %s35, 1
      %p135 = scmp.ne.s32.totalorder %s130, %s132
      %p136 = scmp.eq.s32.totalorder %s35, 0
      %p137 = por %p135, %p136
      %p138 = scmp.ne.s32.totalorder %s130, %s132
      %p139 = scmp.eq.s32.totalorder %s40, 1
      %p140 = por %p138, %p139
      %p141 = scmp.ne.s32.totalorder %s132, %s133
      %p142 = scmp.eq.s32.totalorder %s40, 0
      %p143 = por %p141, %p142
      %p144 = scmp.ne.s32.totalorder %s132, %s133
      %p145 = scmp.eq.s32.totalorder %s41, 1
      %p146 = por %p144, %p145
      %p148 = scmp.ne.s32.totalorder %s133, %s147
      %p149 = scmp.eq.s32.totalorder %s41, 0
      %p150 = por %p148, %p149
      %s152 = sadd.s32 %s151, 1
      %p155 = scmp.eq.s32.totalorder %s35, 1
      %p156 = scmp.ne.s32.totalorder %s151, %s153
      %p157 = scmp.eq.s32.totalorder %s35, 0
      %p158 = por %p156, %p157
      %p159 = scmp.ne.s32.totalorder %s151, %s153
      %p160 = scmp.eq.s32.totalorder %s40, 1
      %p161 = por %p159, %p160
      %p162 = scmp.ne.s32.totalorder %s153, %s154
      %p163 = scmp.eq.s32.totalorder %s40, 0
      %p164 = por %p162, %p163
      %p165 = scmp.ne.s32.totalorder %s153, %s154
      %p166 = scmp.eq.s32.totalorder %s41, 1
      %p167 = por %p165, %p166
      %p169 = scmp.ne.s32.totalorder %s154, %s168
      %p170 = scmp.eq.s32.totalorder %s41, 0
      %p171 = por %p169, %p170
      %s173 = sadd.s32 %s172, 1
      %p176 = scmp.eq.s32.totalorder %s35, 1
      %p177 = scmp.ne.s32.totalorder %s172, %s174
      %p178 = scmp.eq.s32.totalorder %s35, 0
      %p179 = por %p177, %p178
      %p180 = scmp.ne.s32.totalorder %s172, %s174
      %p181 = scmp.eq.s32.totalorder %s40, 1
      %p182 = por %p180, %p181
      %p183 = scmp.ne.s32.totalorder %s174, %s175
      %p184 = scmp.eq.s32.totalorder %s40, 0
      %p185 = por %p183, %p184
      %p186 = scmp.ne.s32.totalorder %s174, %s175
      %p187 = scmp.eq.s32.totalorder %s41, 1
      %p188 = por %p186, %p187
      %p190 = scmp.ne.s32.totalorder %s175, %s189
      %p191 = scmp.eq.s32.totalorder %s41, 0
      %p192 = por %p190, %p191
      %s194 = sadd.s32 %s193, 1
      %p197 = scmp.eq.s32.totalorder %s35, 1
      %p198 = scmp.ne.s32.totalorder %s193, %s195
      %p199 = scmp.eq.s32.totalorder %s35, 0
      %p200 = por %p198, %p199
      %p201 = scmp.ne.s32.totalorder %s193, %s195
      %p202 = scmp.eq.s32.totalorder %s40, 1
      %p203 = por %p201, %p202
      %p204 = scmp.ne.s32.totalorder %s195, %s196
      %p205 = scmp.eq.s32.totalorder %s40, 0
      %p206 = por %p204, %p205
      %p207 = scmp.ne.s32.totalorder %s195, %s196
      %p208 = scmp.eq.s32.totalorder %s41, 1
      %p209 = por %p207, %p208
      %p211 = scmp.ne.s32.totalorder %s196, %s210
      %p212 = scmp.eq.s32.totalorder %s41, 0
      %p213 = por %p211, %p212
      %s215 = sadd.s32 %s214, 1
      %p218 = scmp.eq.s32.totalorder %s35, 1
      %p219 = scmp.ne.s32.totalorder %s214, %s216
      %p220 = scmp.eq.s32.totalorder %s35, 0
      %p221 = por %p219, %p220
      %p222 = scmp.ne.s32.totalorder %s214, %s216
      %p223 = scmp.eq.s32.totalorder %s40, 1
      %p224 = por %p222, %p223
      %p225 = scmp.ne.s32.totalorder %s216, %s217
      %p226 = scmp.eq.s32.totalorder %s40, 0
      %p227 = por %p225, %p226
      %p228 = scmp.ne.s32.totalorder %s216, %s217
      %p229 = scmp.eq.s32.totalorder %s41, 1
      %p230 = por %p228, %p229
      %p232 = scmp.ne.s32.totalorder %s217, %s231
      %p233 = scmp.eq.s32.totalorder %s41, 0
      %p234 = por %p232, %p233
      %s236 = sadd.s32 %s235, 1
      %p239 = scmp.eq.s32.totalorder %s35, 1
      %p240 = scmp.ne.s32.totalorder %s235, %s237
      %p241 = scmp.eq.s32.totalorder %s35, 0
      %p242 = por %p240, %p241
      %p243 = scmp.ne.s32.totalorder %s235, %s237
      %p244 = scmp.eq.s32.totalorder %s40, 1
      %p245 = por %p243, %p244
      %p246 = scmp.ne.s32.totalorder %s237, %s238
      %p247 = scmp.eq.s32.totalorder %s40, 0
      %p248 = por %p246, %p247
      %p249 = scmp.ne.s32.totalorder %s237, %s238
      %p250 = scmp.eq.s32.totalorder %s41, 1
      %p251 = por %p249, %p250
      %p253 = scmp.ne.s32.totalorder %s238, %s252
      %p254 = scmp.eq.s32.totalorder %s41, 0
      %p255 = por %p253, %p254
      %s257 = sadd.s32 %s256, 1
      %p260 = scmp.eq.s32.totalorder %s35, 1
      %p261 = scmp.ne.s32.totalorder %s256, %s258
      %p262 = scmp.eq.s32.totalorder %s35, 0
      %p263 = por %p261, %p262
      %p264 = scmp.ne.s32.totalorder %s256, %s258
      %p265 = scmp.eq.s32.totalorder %s40, 1
      %p266 = por %p264, %p265
      %p267 = scmp.ne.s32.totalorder %s258, %s259
      %p268 = scmp.eq.s32.totalorder %s40, 0
      %p269 = por %p267, %p268
      %p270 = scmp.ne.s32.totalorder %s258, %s259
      %p271 = scmp.eq.s32.totalorder %s41, 1
      %p272 = por %p270, %p271
      %p274 = scmp.ne.s32.totalorder %s259, %s273
      %p275 = scmp.eq.s32.totalorder %s41, 0
      %p276 = por %p274, %p275
      %s278 = sadd.s32 %s277, 1
      %p281 = scmp.eq.s32.totalorder %s35, 1
      %p282 = scmp.ne.s32.totalorder %s277, %s279
      %p283 = scmp.eq.s32.totalorder %s35, 0
      %p284 = por %p282, %p283
      %p285 = scmp.ne.s32.totalorder %s277, %s279
      %p286 = scmp.eq.s32.totalorder %s40, 1
      %p287 = por %p285, %p286
      %p288 = scmp.ne.s32.totalorder %s279, %s280
      %p289 = scmp.eq.s32.totalorder %s40, 0
      %p290 = por %p288, %p289
      %p291 = scmp.ne.s32.totalorder %s279, %s280
      %p292 = scmp.eq.s32.totalorder %s41, 1
      %p293 = por %p291, %p292
      %p295 = scmp.ne.s32.totalorder %s280, %s294
      %p296 = scmp.eq.s32.totalorder %s41, 0
      %p297 = por %p295, %p296
      %s299 = sadd.s32 %s298, 1
      %p302 = scmp.eq.s32.totalorder %s35, 1
      %p303 = scmp.ne.s32.totalorder %s298, %s300
      %p304 = scmp.eq.s32.totalorder %s35, 0
      %p305 = por %p303, %p304
      %p306 = scmp.ne.s32.totalorder %s298, %s300
      %p307 = scmp.eq.s32.totalorder %s40, 1
      %p308 = por %p306, %p307
      %p309 = scmp.ne.s32.totalorder %s300, %s301
      %p310 = scmp.eq.s32.totalorder %s40, 0
      %p311 = por %p309, %p310
      %p312 = scmp.ne.s32.totalorder %s300, %s301
      %p313 = scmp.eq.s32.totalorder %s41, 1
      %p314 = por %p312, %p313
      %p316 = scmp.ne.s32.totalorder %s301, %s315
      %p317 = scmp.eq.s32.totalorder %s41, 0
      %p318 = por %p316, %p317
      %s320 = sadd.s32 %s319, 1
      %p323 = scmp.eq.s32.totalorder %s35, 1
      %p324 = scmp.ne.s32.totalorder %s319, %s321
      %p325 = scmp.eq.s32.totalorder %s35, 0
      %p326 = por %p324, %p325
      %p327 = scmp.ne.s32.totalorder %s319, %s321
      %p328 = scmp.eq.s32.totalorder %s40, 1
      %p329 = por %p327, %p328
      %p330 = scmp.ne.s32.totalorder %s321, %s322
      %p331 = scmp.eq.s32.totalorder %s40, 0
      %p332 = por %p330, %p331
      %p333 = scmp.ne.s32.totalorder %s321, %s322
      %p334 = scmp.eq.s32.totalorder %s41, 1
      %p335 = por %p333, %p334
      %p337 = scmp.ne.s32.totalorder %s322, %s336
      %p338 = scmp.eq.s32.totalorder %s41, 0
      %p339 = por %p337, %p338
      %s341 = sadd.s32 %s340, 1
      %p344 = scmp.eq.s32.totalorder %s35, 1
      %p345 = scmp.ne.s32.totalorder %s340, %s342
      %p346 = scmp.eq.s32.totalorder %s35, 0
      %p347 = por %p345, %p346
      %p348 = scmp.ne.s32.totalorder %s340, %s342
      %p349 = scmp.eq.s32.totalorder %s40, 1
      %p350 = por %p348, %p349
      %p351 = scmp.ne.s32.totalorder %s342, %s343
      %p352 = scmp.eq.s32.totalorder %s40, 0
      %p353 = por %p351, %p352
      %p354 = scmp.ne.s32.totalorder %s342, %s343
      %p355 = scmp.eq.s32.totalorder %s41, 1
      %p356 = por %p354, %p355
      %p358 = scmp.ne.s32.totalorder %s343, %s357
      %p359 = scmp.eq.s32.totalorder %s41, 0
      %p360 = por %p358, %p359
      %s362 = sadd.s32 %s361, 1
      %p365 = scmp.eq.s32.totalorder %s35, 1
      %p366 = scmp.ne.s32.totalorder %s361, %s363
      %p367 = scmp.eq.s32.totalorder %s35, 0
      %p368 = por %p366, %p367
      %p369 = scmp.ne.s32.totalorder %s361, %s363
      %p370 = scmp.eq.s32.totalorder %s40, 1
      %p371 = por %p369, %p370
      %p372 = scmp.ne.s32.totalorder %s363, %s364
      %p373 = scmp.eq.s32.totalorder %s40, 0
      %p374 = por %p372, %p373
      %p375 = scmp.ne.s32.totalorder %s363, %s364
      %p376 = scmp.eq.s32.totalorder %s41, 1
      %p377 = por %p375, %p376
      %p379 = scmp.ne.s32.totalorder %s364, %s378
      %p380 = scmp.eq.s32.totalorder %s41, 0
      %p381 = por %p379, %p380
      %s383 = sadd.s32 %s382, 1
      %p386 = scmp.eq.s32.totalorder %s35, 1
      %p387 = scmp.ne.s32.totalorder %s382, %s384
      %p388 = scmp.eq.s32.totalorder %s35, 0
      %p389 = por %p387, %p388
      %p390 = scmp.ne.s32.totalorder %s382, %s384
      %p391 = scmp.eq.s32.totalorder %s40, 1
      %p392 = por %p390, %p391
      %p393 = scmp.ne.s32.totalorder %s384, %s385
      %p394 = scmp.eq.s32.totalorder %s40, 0
      %p395 = por %p393, %p394
      %p396 = scmp.ne.s32.totalorder %s384, %s385
      %p397 = scmp.eq.s32.totalorder %s41, 1
      %p398 = por %p396, %p397
      %p400 = scmp.ne.s32.totalorder %s385, %s399
      %p401 = scmp.eq.s32.totalorder %s41, 0
      %p402 = por %p400, %p401
      %s404 = sadd.s32 %s403, 1
      %p407 = scmp.eq.s32.totalorder %s35, 1
      %p408 = scmp.ne.s32.totalorder %s403, %s405
      %p409 = scmp.eq.s32.totalorder %s35, 0
      %p410 = por %p408, %p409
      %p411 = scmp.ne.s32.totalorder %s403, %s405
      %p412 = scmp.eq.s32.totalorder %s40, 1
      %p413 = por %p411, %p412
      %p414 = scmp.ne.s32.totalorder %s405, %s406
      %p415 = scmp.eq.s32.totalorder %s40, 0
      %p416 = por %p414, %p415
      %p417 = scmp.ne.s32.totalorder %s405, %s406
      %p418 = scmp.eq.s32.totalorder %s41, 1
      %p419 = por %p417, %p418
      %p421 = scmp.ne.s32.totalorder %s406, %s420
      %p422 = scmp.eq.s32.totalorder %s41, 0
      %p423 = por %p421, %p422
      %s425 = sadd.s32 %s424, 1
      %p428 = scmp.eq.s32.totalorder %s35, 1
      %p429 = scmp.ne.s32.totalorder %s424, %s426
      %p430 = scmp.eq.s32.totalorder %s35, 0
      %p431 = por %p429, %p430
      %p432 = scmp.ne.s32.totalorder %s424, %s426
      %p433 = scmp.eq.s32.totalorder %s40, 1
      %p434 = por %p432, %p433
      %p435 = scmp.ne.s32.totalorder %s426, %s427
      %p436 = scmp.eq.s32.totalorder %s40, 0
      %p437 = por %p435, %p436
      %p438 = scmp.ne.s32.totalorder %s426, %s427
      %p439 = scmp.eq.s32.totalorder %s41, 1
      %p440 = por %p438, %p439
      %p442 = scmp.ne.s32.totalorder %s427, %s441
      %p443 = scmp.eq.s32.totalorder %s41, 0
      %p444 = por %p442, %p443
      %s446 = sadd.s32 %s445, 1
      %p449 = scmp.eq.s32.totalorder %s35, 1
      %p450 = scmp.ne.s32.totalorder %s445, %s447
      %p451 = scmp.eq.s32.totalorder %s35, 0
      %p452 = por %p450, %p451
      %p453 = scmp.ne.s32.totalorder %s445, %s447
      %p454 = scmp.eq.s32.totalorder %s40, 1
      %p455 = por %p453, %p454
      %p456 = scmp.ne.s32.totalorder %s447, %s448
      %p457 = scmp.eq.s32.totalorder %s40, 0
      %p458 = por %p456, %p457
      %p459 = scmp.ne.s32.totalorder %s447, %s448
      %p460 = scmp.eq.s32.totalorder %s41, 1
      %p461 = por %p459, %p460
      %p463 = scmp.ne.s32.totalorder %s448, %s462
      %p464 = scmp.eq.s32.totalorder %s41, 0
      %p465 = por %p463, %p464
      %s467 = sadd.s32 %s466, 1
      %p470 = scmp.eq.s32.totalorder %s35, 1
      %p471 = scmp.ne.s32.totalorder %s466, %s468
      %p472 = scmp.eq.s32.totalorder %s35, 0
      %p473 = por %p471, %p472
      %p474 = scmp.ne.s32.totalorder %s466, %s468
      %p475 = scmp.eq.s32.totalorder %s40, 1
      %p476 = por %p474, %p475
      %p477 = scmp.ne.s32.totalorder %s468, %s469
      %p478 = scmp.eq.s32.totalorder %s40, 0
      %p479 = por %p477, %p478
      %p480 = scmp.ne.s32.totalorder %s468, %s469
      %p481 = scmp.eq.s32.totalorder %s41, 1
      %p482 = por %p480, %p481
      %p484 = scmp.ne.s32.totalorder %s469, %s483
      %p485 = scmp.eq.s32.totalorder %s41, 0
      %p486 = por %p484, %p485
      %s488 = sadd.s32 %s487, 1
      %p491 = scmp.eq.s32.totalorder %s35, 1
      %p492 = scmp.ne.s32.totalorder %s487, %s489
      %p493 = scmp.eq.s32.totalorder %s35, 0
      %p494 = por %p492, %p493
      %p495 = scmp.ne.s32.totalorder %s487, %s489
      %p496 = scmp.eq.s32.totalorder %s40, 1
      %p497 = por %p495, %p496
      %p498 = scmp.ne.s32.totalorder %s489, %s490
      %p499 = scmp.eq.s32.totalorder %s40, 0
      %p500 = por %p498, %p499
      %p501 = scmp.ne.s32.totalorder %s489, %s490
      %p502 = scmp.eq.s32.totalorder %s41, 1
      %p503 = por %p501, %p502
      %p505 = scmp.ne.s32.totalorder %s490, %s504
      %p506 = scmp.eq.s32.totalorder %s41, 0
      %p507 = por %p505, %p506
      %s509 = sadd.s32 %s508, 1
      %p512 = scmp.eq.s32.totalorder %s35, 1
      %p513 = scmp.ne.s32.totalorder %s508, %s510
      %p514 = scmp.eq.s32.totalorder %s35, 0
      %p515 = por %p513, %p514
      %p516 = scmp.ne.s32.totalorder %s508, %s510
      %p517 = scmp.eq.s32.totalorder %s40, 1
      %p518 = por %p516, %p517
      %p519 = scmp.ne.s32.totalorder %s510, %s511
      %p520 = scmp.eq.s32.totalorder %s40, 0
      %p521 = por %p519, %p520
      %p522 = scmp.ne.s32.totalorder %s510, %s511
      %p523 = scmp.eq.s32.totalorder %s41, 1
      %p524 = por %p522, %p523
      %p526 = scmp.ne.s32.totalorder %s511, %s525
      %p527 = scmp.eq.s32.totalorder %s41, 0
      %p528 = por %p526, %p527
      %s530 = sadd.s32 %s529, 1
      %p533 = scmp.eq.s32.totalorder %s35, 1
      %p534 = scmp.ne.s32.totalorder %s529, %s531
      %p535 = scmp.eq.s32.totalorder %s35, 0
      %p536 = por %p534, %p535
      %p537 = scmp.ne.s32.totalorder %s529, %s531
      %p538 = scmp.eq.s32.totalorder %s40, 1
      %p539 = por %p537, %p538
      %p540 = scmp.ne.s32.totalorder %s531, %s532
      %p541 = scmp.eq.s32.totalorder %s40, 0
      %p542 = por %p540, %p541
      %p543 = scmp.ne.s32.totalorder %s531, %s532
      %p544 = scmp.eq.s32.totalorder %s41, 1
      %p545 = por %p543, %p544
      %p547 = scmp.ne.s32.totalorder %s532, %s546
      %p548 = scmp.eq.s32.totalorder %s41, 0
      %p549 = por %p547, %p548
      %s551 = sadd.s32 %s550, 1
      %p554 = scmp.eq.s32.totalorder %s35, 1
      %p555 = scmp.ne.s32.totalorder %s550, %s552
      %p556 = scmp.eq.s32.totalorder %s35, 0
      %p557 = por %p555, %p556
      %p558 = scmp.ne.s32.totalorder %s550, %s552
      %p559 = scmp.eq.s32.totalorder %s40, 1
      %p560 = por %p558, %p559
      %p561 = scmp.ne.s32.totalorder %s552, %s553
      %p562 = scmp.eq.s32.totalorder %s40, 0
      %p563 = por %p561, %p562
      %p564 = scmp.ne.s32.totalorder %s552, %s553
      %p565 = scmp.eq.s32.totalorder %s41, 1
      %p566 = por %p564, %p565
      %p568 = scmp.ne.s32.totalorder %s553, %s567
      %p569 = scmp.eq.s32.totalorder %s41, 0
      %p570 = por %p568, %p569
      %s571 = ssub.s32 %s42, %s54
      %s572 = ssub.s32 %s43, %s50
      %s573 = sor.u32 %s571, %s572
      %p574 = scmp.eq.s32.totalorder %s573, 0
      %s576 = sadd.s32 %s575, 1
      %s577 = scalar_select %p574, %s575, %s576
      %p580 = pneg %p574
      %p581 = scmp.eq.s32.totalorder %s35, 1
      %p582 = por %p580, %p581
      %p583 = scmp.ne.s32.totalorder %s575, %s578
      %p584 = scmp.eq.s32.totalorder %s35, 0
      %p585 = por %p583, %p584
      %p586 = scmp.ne.s32.totalorder %s575, %s578
      %p587 = scmp.eq.s32.totalorder %s40, 1
      %p588 = por %p586, %p587
      %p589 = scmp.ne.s32.totalorder %s578, %s579
      %p590 = scmp.eq.s32.totalorder %s40, 0
      %p591 = por %p589, %p590
      %p592 = scmp.ne.s32.totalorder %s578, %s579
      %p593 = scmp.eq.s32.totalorder %s41, 1
      %p594 = por %p592, %p593
      %p596 = scmp.ne.s32.totalorder %s579, %s595
      %p597 = scmp.eq.s32.totalorder %s41, 0
      %p598 = por %p596, %p597
      %s599 = ssub.s32 %s42, %s54
      %s600 = ssub.s32 %s43, %s50
      %s601 = sor.u32 %s599, %s600
      %p602 = scmp.eq.s32.totalorder %s601, 0
      %s604 = sadd.s32 %s603, 1
      %s605 = scalar_select %p602, %s603, %s604
      %p608 = pneg %p602
      %p609 = scmp.eq.s32.totalorder %s35, 1
      %p610 = por %p608, %p609
      %p611 = scmp.ne.s32.totalorder %s603, %s606
      %p612 = scmp.eq.s32.totalorder %s35, 0
      %p613 = por %p611, %p612
      %p614 = scmp.ne.s32.totalorder %s603, %s606
      %p615 = scmp.eq.s32.totalorder %s40, 1
      %p616 = por %p614, %p615
      %p617 = scmp.ne.s32.totalorder %s606, %s607
      %p618 = scmp.eq.s32.totalorder %s40, 0
      %p619 = por %p617, %p618
      %p620 = scmp.ne.s32.totalorder %s606, %s607
      %p621 = scmp.eq.s32.totalorder %s41, 1
      %p622 = por %p620, %p621
      %p624 = scmp.ne.s32.totalorder %s607, %s623
      %p625 = scmp.eq.s32.totalorder %s41, 0
      %p626 = por %p624, %p625
      %p627 = scmp.le.s32.totalorder 1, %s35
      %p628 = scmp.lt.s32.totalorder %s35, 3
      %p629 = pnand %p627, %p628
      %p630 = pneg %p629
      // Predicated region
      $region9: #{pallas_forward.5} parent=5 // pred_check
        _
      $region10: #{pallas_forward.5} parent=5 // pred_check_branch
        %632 = sbr.rel (%p629) target = $region12
      $region11: #{pallas_forward.5} parent=5 // pred_region
        %s633 = ssub.s32 %s35, 1
        // Predicated region
        $region13: #{pallas_forward.5} parent=11 // pred_check
          %p634 = pneg %p122
        $region14: #{pallas_forward.5} parent=11 // pred_check_branch
          %636 = sbr.rel (%p634) target = $region16
        $region15: #{pallas_forward.5} parent=11 // pred_region
          _
        $region16: #{pallas_forward.5} parent=11 // pred_fallthru
          _
        // Predicated region
        $region17: #{pallas_forward.5} parent=11 // pred_check
          %p637 = pneg %p143
        $region18: #{pallas_forward.5} parent=11 // pred_check_branch
          %639 = sbr.rel (%p637) target = $region20
        $region19: #{pallas_forward.5} parent=11 // pred_region
          _
        $region20: #{pallas_forward.5} parent=11 // pred_fallthru
          _
        // Predicated region
        $region21: #{pallas_forward.5} parent=11 // pred_check
          %p640 = pneg %p164
        $region22: #{pallas_forward.5} parent=11 // pred_check_branch
          %642 = sbr.rel (%p640) target = $region24
        $region23: #{pallas_forward.5} parent=11 // pred_region
          _
        $region24: #{pallas_forward.5} parent=11 // pred_fallthru
          _
        // Predicated region
        $region25: #{pallas_forward.5} parent=11 // pred_check
          %p643 = pneg %p185
        $region26: #{pallas_forward.5} parent=11 // pred_check_branch
          %645 = sbr.rel (%p643) target = $region28
        $region27: #{pallas_forward.5} parent=11 // pred_region
          _
        $region28: #{pallas_forward.5} parent=11 // pred_fallthru
          _
        // Predicated region
        $region29: #{pallas_forward.5} parent=11 // pred_check
          %p646 = pneg %p206
        $region30: #{pallas_forward.5} parent=11 // pred_check_branch
          %648 = sbr.rel (%p646) target = $region32
        $region31: #{pallas_forward.5} parent=11 // pred_region
          _
        $region32: #{pallas_forward.5} parent=11 // pred_fallthru
          _
        // Predicated region
        $region33: #{pallas_forward.5} parent=11 // pred_check
          %p649 = pneg %p227
        $region34: #{pallas_forward.5} parent=11 // pred_check_branch
          %651 = sbr.rel (%p649) target = $region36
        $region35: #{pallas_forward.5} parent=11 // pred_region
          _
        $region36: #{pallas_forward.5} parent=11 // pred_fallthru
          _
        // Predicated region
        $region37: #{pallas_forward.5} parent=11 // pred_check
          %p652 = pneg %p248
        $region38: #{pallas_forward.5} parent=11 // pred_check_branch
          %654 = sbr.rel (%p652) target = $region40
        $region39: #{pallas_forward.5} parent=11 // pred_region
          _
        $region40: #{pallas_forward.5} parent=11 // pred_fallthru
          _
        // Predicated region
        $region41: #{pallas_forward.5} parent=11 // pred_check
          %p655 = pneg %p269
        $region42: #{pallas_forward.5} parent=11 // pred_check_branch
          %657 = sbr.rel (%p655) target = $region44
        $region43: #{pallas_forward.5} parent=11 // pred_region
          _
        $region44: #{pallas_forward.5} parent=11 // pred_fallthru
          _
        // Predicated region
        $region45: #{pallas_forward.5} parent=11 // pred_check
          %p658 = pneg %p290
        $region46: #{pallas_forward.5} parent=11 // pred_check_branch
          %660 = sbr.rel (%p658) target = $region48
        $region47: #{pallas_forward.5} parent=11 // pred_region
          _
        $region48: #{pallas_forward.5} parent=11 // pred_fallthru
          _
        // Predicated region
        $region49: #{pallas_forward.5} parent=11 // pred_check
          %p661 = pneg %p311
        $region50: #{pallas_forward.5} parent=11 // pred_check_branch
          %663 = sbr.rel (%p661) target = $region52
        $region51: #{pallas_forward.5} parent=11 // pred_region
          _
        $region52: #{pallas_forward.5} parent=11 // pred_fallthru
          _
        // Predicated region
        $region53: #{pallas_forward.5} parent=11 // pred_check
          %p664 = pneg %p332
        $region54: #{pallas_forward.5} parent=11 // pred_check_branch
          %666 = sbr.rel (%p664) target = $region56
        $region55: #{pallas_forward.5} parent=11 // pred_region
          _
        $region56: #{pallas_forward.5} parent=11 // pred_fallthru
          _
        // Predicated region
        $region57: #{pallas_forward.5} parent=11 // pred_check
          %p667 = pneg %p353
        $region58: #{pallas_forward.5} parent=11 // pred_check_branch
          %669 = sbr.rel (%p667) target = $region60
        $region59: #{pallas_forward.5} parent=11 // pred_region
          _
        $region60: #{pallas_forward.5} parent=11 // pred_fallthru
          _
        // Predicated region
        $region61: #{pallas_forward.5} parent=11 // pred_check
          %p670 = pneg %p374
        $region62: #{pallas_forward.5} parent=11 // pred_check_branch
          %672 = sbr.rel (%p670) target = $region64
        $region63: #{pallas_forward.5} parent=11 // pred_region
          _
        $region64: #{pallas_forward.5} parent=11 // pred_fallthru
          _
        // Predicated region
        $region65: #{pallas_forward.5} parent=11 // pred_check
          %p673 = pneg %p395
        $region66: #{pallas_forward.5} parent=11 // pred_check_branch
          %675 = sbr.rel (%p673) target = $region68
        $region67: #{pallas_forward.5} parent=11 // pred_region
          _
        $region68: #{pallas_forward.5} parent=11 // pred_fallthru
          _
        // Predicated region
        $region69: #{pallas_forward.5} parent=11 // pred_check
          %p676 = pneg %p416
        $region70: #{pallas_forward.5} parent=11 // pred_check_branch
          %678 = sbr.rel (%p676) target = $region72
        $region71: #{pallas_forward.5} parent=11 // pred_region
          _
        $region72: #{pallas_forward.5} parent=11 // pred_fallthru
          _
        // Predicated region
        $region73: #{pallas_forward.5} parent=11 // pred_check
          %p679 = pneg %p437
        $region74: #{pallas_forward.5} parent=11 // pred_check_branch
          %681 = sbr.rel (%p679) target = $region76
        $region75: #{pallas_forward.5} parent=11 // pred_region
          _
        $region76: #{pallas_forward.5} parent=11 // pred_fallthru
          _
        // Predicated region
        $region77: #{pallas_forward.5} parent=11 // pred_check
          %p682 = pneg %p458
        $region78: #{pallas_forward.5} parent=11 // pred_check_branch
          %684 = sbr.rel (%p682) target = $region80
        $region79: #{pallas_forward.5} parent=11 // pred_region
          _
        $region80: #{pallas_forward.5} parent=11 // pred_fallthru
          _
        // Predicated region
        $region81: #{pallas_forward.5} parent=11 // pred_check
          %p685 = pneg %p479
        $region82: #{pallas_forward.5} parent=11 // pred_check_branch
          %687 = sbr.rel (%p685) target = $region84
        $region83: #{pallas_forward.5} parent=11 // pred_region
          _
        $region84: #{pallas_forward.5} parent=11 // pred_fallthru
          _
        // Predicated region
        $region85: #{pallas_forward.5} parent=11 // pred_check
          %p688 = pneg %p500
        $region86: #{pallas_forward.5} parent=11 // pred_check_branch
          %690 = sbr.rel (%p688) target = $region88
        $region87: #{pallas_forward.5} parent=11 // pred_region
          _
        $region88: #{pallas_forward.5} parent=11 // pred_fallthru
          _
        // Predicated region
        $region89: #{pallas_forward.5} parent=11 // pred_check
          %p691 = pneg %p521
        $region90: #{pallas_forward.5} parent=11 // pred_check_branch
          %693 = sbr.rel (%p691) target = $region92
        $region91: #{pallas_forward.5} parent=11 // pred_region
          _
        $region92: #{pallas_forward.5} parent=11 // pred_fallthru
          _
        // Predicated region
        $region93: #{pallas_forward.5} parent=11 // pred_check
          %p694 = pneg %p542
        $region94: #{pallas_forward.5} parent=11 // pred_check_branch
          %696 = sbr.rel (%p694) target = $region96
        $region95: #{pallas_forward.5} parent=11 // pred_region
          _
        $region96: #{pallas_forward.5} parent=11 // pred_fallthru
          _
        // Predicated region
        $region97: #{pallas_forward.5} parent=11 // pred_check
          %p697 = pneg %p563
        $region98: #{pallas_forward.5} parent=11 // pred_check_branch
          %699 = sbr.rel (%p697) target = $region100
        $region99: #{pallas_forward.5} parent=11 // pred_region
          _
        $region100: #{pallas_forward.5} parent=11 // pred_fallthru
          _
      $region12: #{pallas_forward.5} parent=5 // pred_fallthru
        _
      %p700 = scmp.lt.s32.totalorder %s35, 2
      // Predicated region
      $region101: #{pallas_forward.5} parent=5 // pred_check
        %p701 = pneg %p700
      $region102: #{pallas_forward.5} parent=5 // pred_check_branch
        %703 = sbr.rel (%p701) target = $region104
      $region103: #{pallas_forward.5} parent=5 // pred_region
        // Predicated region
        $region105: #{pallas_forward.5} parent=103 // pred_check
          %p704 = pneg %p69
        $region106: #{pallas_forward.5} parent=103 // pred_check_branch
          %706 = sbr.rel (%p704) target = $region108
        $region107: #{pallas_forward.5} parent=103 // pred_region
          %s707 = smul.u32 4, %s43
          %p708 = scmp.lt.s32.totalorder %s42, 1
          %s709 = scalar_select %p708, %s42, 1
          %p710 = scmp.lt.s32.totalorder %s707, 3
          %s711 = scalar_select %p710, %s707, 3
          %s712 = smul.addr %s709, 4
          %s713 = sadd.s32 %s711, %s712
          %s714 = smul.addr %s713, 4
          %s715 = scalar_lea.vmem %s0, %s714
          %s716 = smul.u32 4, %s43
        $region108: #{pallas_forward.5} parent=103 // pred_fallthru
          _
        // Predicated region
        $region109: #{pallas_forward.5} parent=103 // pred_check
          %p717 = pneg %p95
        $region110: #{pallas_forward.5} parent=103 // pred_check_branch
          %719 = sbr.rel (%p717) target = $region112
        $region111: #{pallas_forward.5} parent=103 // pred_region
          %p720 = scmp.lt.s32.totalorder %s42, 1
          %s721 = scalar_select %p720, %s42, 1
          %s722 = smul.addr %s721, 4
          %s723 = scalar_lea.vmem %s1, %s722
        $region112: #{pallas_forward.5} parent=103 // pred_fallthru
          _
      $region104: #{pallas_forward.5} parent=5 // pred_fallthru
        _
      %p724 = scmp.le.s32.totalorder 1, %s35
      %p725 = scmp.lt.s32.totalorder %s35, 3
      %p726 = pnand %p724, %p725
      %p727 = pneg %p726
      // Predicated region
      $region113: #{pallas_forward.5} parent=5 // pred_check
        _
      $region114: #{pallas_forward.5} parent=5 // pred_check_branch
        %729 = sbr.rel (%p726) target = $region116
      $region115: #{pallas_forward.5} parent=5 // pred_region
        %s730 = ssub.s32 %s35, 1
        %s731 = smul.u32 4, %s45
        %p732 = scmp.lt.s32.totalorder %s44, 1
        %s733 = scalar_select %p732, %s44, 1
        %p734 = scmp.lt.s32.totalorder %s731, 3
        %s735 = scalar_select %p734, %s731, 3
        %s736 = smul.addr %s733, 4
        %s737 = sadd.s32 %s735, %s736
        %s738 = smul.addr %s737, 4
        %s739 = scalar_lea.vmem %s0, %s738
        %p740 = pneg %p75
        %p741 = pneg %p72
        %p742 = scmp.lt.s32.totalorder %s44, 1
        %s743 = scalar_select %p742, %s44, 1
        %s744 = smul.addr %s743, 4
        %s745 = scalar_lea.vmem %s1, %s744
        %p746 = pneg %p101
        %p747 = pneg %p98
        %p748 = pneg %p122
        %p749 = pneg %p119
        %p750 = pneg %p143
        %p751 = pneg %p140
        %p752 = pneg %p164
        %p753 = pneg %p161
        %p754 = pneg %p185
        %p755 = pneg %p182
        %p756 = pneg %p206
        %p757 = pneg %p203
        %p758 = pneg %p227
        %p759 = pneg %p224
        %p760 = pneg %p248
        %p761 = pneg %p245
        %p762 = pneg %p269
        %p763 = pneg %p266
        %p764 = pneg %p290
        %p765 = pneg %p287
        %p766 = pneg %p311
        %p767 = pneg %p308
        %p768 = pneg %p332
        %p769 = pneg %p329
        %p770 = pneg %p353
        %p771 = pneg %p350
        %p772 = pneg %p374
        %p773 = pneg %p371
        %p774 = pneg %p395
        %p775 = pneg %p392
        %p776 = pneg %p416
        %p777 = pneg %p413
        %p778 = pneg %p437
        %p779 = pneg %p434
        %p780 = pneg %p458
        %p781 = pneg %p455
        %p782 = pneg %p479
        %p783 = pneg %p476
        %p784 = pneg %p500
        %p785 = pneg %p497
        %p786 = pneg %p521
        %p787 = pneg %p518
        %p788 = pneg %p542
        %p789 = pneg %p539
        %p790 = pneg %p563
        %p791 = pneg %p560
        %p792 = pneg %p591
        %p793 = pneg %p588
        %s794 = sand.u32 %s578, 1
        %s795 = scalar_lea.sflag [#allocation3], %s794
        %s796 = sand.u32 %s578, 1
        %s797 = smul.addr %s796, 32
        %s798 = scalar_lea.vmem [#allocation2], %s797
        %p799 = pneg %p619
        %p800 = pneg %p616
        %s801 = smul.u32 4, %s45
        %p802 = scmp.lt.s32.totalorder %s44, 1
        %s803 = scalar_select %p802, %s44, 1
        %p804 = scmp.lt.s32.totalorder %s801, 3
        %s805 = scalar_select %p804, %s801, 3
        %s806 = smul.addr %s803, 4
        %s807 = sadd.s32 %s805, %s806
        %s808 = smul.addr %s807, 8
        %s809 = scalar_lea.vmem %s25, %s808
        %s810 = smul.u32 4, %s45
        %p811 = scmp.lt.s32.totalorder %s44, 1
        %s812 = scalar_select %p811, %s44, 1
        %p813 = scmp.lt.s32.totalorder %s810, 3
        %s814 = scalar_select %p813, %s810, 3
        %s815 = smul.addr %s812, 4
        %s816 = sadd.s32 %s814, %s815
        %s817 = smul.addr %s816, 4
        %s818 = scalar_lea.vmem %s0, %s817
        %s819 = smul.u32 4, %s45
        %p820 = scmp.lt.s32.totalorder %s44, 1
        %s821 = scalar_select %p820, %s44, 1
        %s822 = smul.addr %s821, 4
        %s823 = scalar_lea.vmem %s1, %s822
        %s824 = smul.u32 4, %s45
        %s825 = smul.u32 4, %s45
        %p826 = scmp.lt.s32.totalorder %s44, 1
        %s827 = scalar_select %p826, %s44, 1
        %p828 = scmp.lt.s32.totalorder %s825, 3
        %s829 = scalar_select %p828, %s825, 3
        %s830 = smul.addr %s827, 4
        %s831 = sadd.s32 %s829, %s830
        %s832 = smul.addr %s831, 8
        %s833 = scalar_lea.vmem %s25, %s832
        %s834 = smul.u32 4, %s45
        %v836 = vld [vmem:[%s823] sm:$0xf]
        %v837 = vld [vmem:[%s818] sm:$0xf]
        %v838 = vld [vmem:[%s818 + $0x4] sm:$0xf]
        %v839 = vld [vmem:[%s818 + $0x8] sm:$0xf]
        %v840 = vld [vmem:[%s818 + $0xc] sm:$0xf]
        %v841 = vld [vmem:[%s2] sm:$0xf]
        %v842 = vld [vmem:[%s2 + $0x4] sm:$0xf]
        %v843 = vld [vmem:[%s2 + $0x8] sm:$0xf]
        %v844 = vld [vmem:[%s2 + $0xc] sm:$0xf]
        %v845 = vld [vmem:[%s3] sm:$0x1]
        %v847 = vlaneseq
        %v848 = vshrl.u32 %v847, 7
        %v849 = vsub.s32 0, %v848
        %v850 = vrot.slane %v845, %v849
        %v856 = vunpack.c.l.b16 %v837
        %v857 = vunpack.c.l.b16 %v838
        %v858 = vunpack.c.l.b16 %v839
        %v859 = vunpack.c.l.b16 %v840
        %v860 = vpack.c.b16 %v857, %v856
        %v861 = vpack.c.b16 %v859, %v858
        %v866 = vunpack.c.l.b16 %v841
        %v867 = vunpack.c.l.b16 %v842
        %v868 = vunpack.c.l.b16 %v843
        %v869 = vunpack.c.l.b16 %v844
        %v870 = vpack.c.b16 %v867, %v866
        %v871 = vpack.c.b16 %v869, %v868
        %vm874 = vcmask 261120
        %v876 = vsel %vm874, %v860, 0
        %v879 = vsel %vm874, %v861, 0
        %881 = vmatprep.subr.bf16.mxu0 0
        %882 = vmatpush1.bf16.msra.mxu0 0
        %883 = vmatprep.subr.bf16.mxu0 0
        %884 = vmatpush1.bf16.msra.mxu0 0
        %885 = vmatprep.subr.bf16.mxu0 0
        %886 = vmatpush1.bf16.msra.mxu0 0
        %887 = vmatprep.subr.bf16.mxu0 0
        %888 = vmatpush1.bf16.msra.mxu0 0
        %889 = vmatprep.subr.bf16.mxu0 0
        %890 = vmatpush1.bf16.msra.mxu0 0
        %891 = vmatprep.subr.bf16.mxu0 0
        %892 = vmatpush1.bf16.msra.mxu0 0
        %893 = vmatprep.subr.bf16.mxu0 0
        %894 = vmatpush1.bf16.msra.mxu0 %v871
        %895 = vmatprep.subr.bf16.mxu0 0
        %896 = vmatpush1.bf16.msra.mxu0 %v870
        %897 = vmatprep.subr.bf16.mxu0 0
        %898 = vmatpush2.bf16.msra.mxu0 0
        %899 = vmatprep.subr.bf16.mxu0 0
        %900 = vmatpush2.bf16.msra.mxu0 0
        %901 = vmatprep.subr.bf16.mxu0 0
        %902 = vmatpush2.bf16.msra.mxu0 0
        %903 = vmatprep.subr.bf16.mxu0 0
        %904 = vmatpush2.bf16.msra.mxu0 0
        %905 = vmatprep.subr.bf16.mxu0 0
        %906 = vmatpush2.bf16.msra.mxu0 0
        %907 = vmatprep.subr.bf16.mxu0 0
        %908 = vmatpush2.bf16.msra.mxu0 0
        %909 = vmatprep.subr.bf16.mxu0 0
        %910 = vmatpush2.bf16.msra.mxu0 0
        %911 = vmatprep.subr.bf16.mxu0 0
        %912 = vmatpush2.bf16.msra.mxu0 0
        %913 = vmatprep.mubr.bf16.mxu0 0
        %914 = vmatmul.mubr.bf16.gmra.mxu0 %v876
        %v915 = vpop.f32.mrf.mxu0
        %v916 = vadd.f32 %v850, %v915
        %v917 = vpop.f32.mrf.mxu0
        %v918 = vpop.f32.mrf.mxu0
        %v919 = vadd.f32 %v850, %v918
        %v920 = vpop.f32.mrf.mxu0
        %921 = vmatprep.mubr.bf16.mxu0 0
        %922 = vmatmul.mubr.bf16.gmra.mxu0 %v879
        %v923 = vpop.f32.mrf.mxu0
        %v924 = vadd.f32 %v850, %v923
        %v925 = vpop.f32.mrf.mxu0
        %v926 = vpop.f32.mrf.mxu0
        %v927 = vadd.f32 %v850, %v926
        %v928 = vpop.f32.mrf.mxu0
        %929 = vdwg.mxu0
        %v930 = vlaneseq
        %v931 = vshrl.u32 %v930, 7
        %v932 = vsub.s32 0, %v931
        %v933 = vrot.slane %v836, %v932
        %v934 = vadd.f32 %v916, %v933
        %v935 = vadd.f32 %v919, %v933
        %v936 = vadd.f32 %v924, %v933
        %v937 = vadd.f32 %v927, %v933
        %v938 = vmax.f32 %v934, 0.0
        %v939 = vmax.f32 %v935, 0.0
        %v940 = vmax.f32 %v936, 0.0
        %v941 = vmax.f32 %v937, 0.0
        %v942 = vld [vmem:[%s4] sm:$0xf]
        %v943 = vld [vmem:[%s4 + $0x4] sm:$0xf]
        %v944 = vld [vmem:[%s4 + $0x8] sm:$0xf]
        %v945 = vld [vmem:[%s4 + $0xc] sm:$0xf]
        %v946 = vpack.c.bf16 %v939, %v938
        %v947 = vpack.c.bf16 %v941, %v940
        %v948 = vld [vmem:[%s5] sm:$0x1]
        %v950 = vlaneseq
        %v951 = vshrl.u32 %v950, 7
        %v952 = vsub.s32 0, %v951
        %v953 = vrot.slane %v948, %v952
        %v959 = vunpack.c.l.b16 %v942
        %v960 = vunpack.c.l.b16 %v943
        %v961 = vunpack.c.l.b16 %v944
        %v962 = vunpack.c.l.b16 %v945
        %v963 = vpack.c.b16 %v960, %v959
        %v964 = vpack.c.b16 %v962, %v961
        %v968 = vsel %vm874, %v946, 0
        %v971 = vsel %vm874, %v947, 0
        %973 = vmatprep.subr.bf16.mxu0 0
        %974 = vmatpush1.bf16.msra.mxu0 0
        %975 = vmatprep.subr.bf16.mxu0 0
        %976 = vmatpush1.bf16.msra.mxu0 0
        %977 = vmatprep.subr.bf16.mxu0 0
        %978 = vmatpush1.bf16.msra.mxu0 0
        %979 = vmatprep.subr.bf16.mxu0 0
        %980 = vmatpush1.bf16.msra.mxu0 0
        %981 = vmatprep.subr.bf16.mxu0 0
        %982 = vmatpush1.bf16.msra.mxu0 0
        %983 = vmatprep.subr.bf16.mxu0 0
        %984 = vmatpush1.bf16.msra.mxu0 0
        %985 = vmatprep.subr.bf16.mxu0 0
        %986 = vmatpush1.bf16.msra.mxu0 %v964
        %987 = vmatprep.subr.bf16.mxu0 0
        %988 = vmatpush1.bf16.msra.mxu0 %v963
        %989 = vmatprep.subr.bf16.mxu0 0
        %990 = vmatpush2.bf16.msra.mxu0 0
        %991 = vmatprep.subr.bf16.mxu0 0
        %992 = vmatpush2.bf16.msra.mxu0 0
        %993 = vmatprep.subr.bf16.mxu0 0
        %994 = vmatpush2.bf16.msra.mxu0 0
        %995 = vmatprep.subr.bf16.mxu0 0
        %996 = vmatpush2.bf16.msra.mxu0 0
        %997 = vmatprep.subr.bf16.mxu0 0
        %998 = vmatpush2.bf16.msra.mxu0 0
        %999 = vmatprep.subr.bf16.mxu0 0
        %1000 = vmatpush2.bf16.msra.mxu0 0
        %1001 = vmatprep.subr.bf16.mxu0 0
        %1002 = vmatpush2.bf16.msra.mxu0 0
        %1003 = vmatprep.subr.bf16.mxu0 0
        %1004 = vmatpush2.bf16.msra.mxu0 0
        %1005 = vmatprep.mubr.bf16.mxu0 0
        %1006 = vmatmul.mubr.bf16.gmra.mxu0 %v968
        %v1007 = vpop.f32.mrf.mxu0
        %v1008 = vadd.f32 %v953, %v1007
        %v1009 = vpop.f32.mrf.mxu0
        %v1010 = vpop.f32.mrf.mxu0
        %v1011 = vadd.f32 %v953, %v1010
        %v1012 = vpop.f32.mrf.mxu0
        %1013 = vmatprep.mubr.bf16.mxu0 0
        %1014 = vmatmul.mubr.bf16.gmra.mxu0 %v971
        %v1015 = vpop.f32.mrf.mxu0
        %v1016 = vadd.f32 %v953, %v1015
        %v1017 = vpop.f32.mrf.mxu0
        %v1018 = vpop.f32.mrf.mxu0
        %v1019 = vadd.f32 %v953, %v1018
        %v1020 = vpop.f32.mrf.mxu0
        %1021 = vdwg.mxu0
        %v1022 = vld [vmem:[%s6] sm:$0xf]
        %v1023 = vld [vmem:[%s6 + $0x4] sm:$0xf]
        %v1024 = vld [vmem:[%s6 + $0x8] sm:$0xf]
        %v1025 = vld [vmem:[%s6 + $0xc] sm:$0xf]
        %v1030 = vunpack.c.l.b16 %v1022
        %v1031 = vunpack.c.l.b16 %v1023
        %v1032 = vunpack.c.l.b16 %v1024
        %v1033 = vunpack.c.l.b16 %v1025
        %v1034 = vpack.c.b16 %v1031, %v1030
        %v1035 = vpack.c.b16 %v1033, %v1032
        %1038 = vmatprep.subr.bf16.mxu0 0
        %1039 = vmatpush1.bf16.msra.mxu0 0
        %1040 = vmatprep.subr.bf16.mxu0 0
        %1041 = vmatpush1.bf16.msra.mxu0 0
        %1042 = vmatprep.subr.bf16.mxu0 0
        %1043 = vmatpush1.bf16.msra.mxu0 0
        %1044 = vmatprep.subr.bf16.mxu0 0
        %1045 = vmatpush1.bf16.msra.mxu0 0
        %1046 = vmatprep.subr.bf16.mxu0 0
        %1047 = vmatpush1.bf16.msra.mxu0 0
        %1048 = vmatprep.subr.bf16.mxu0 0
        %1049 = vmatpush1.bf16.msra.mxu0 0
        %1050 = vmatprep.subr.bf16.mxu0 0
        %1051 = vmatpush1.bf16.msra.mxu0 %v1035
        %1052 = vmatprep.subr.bf16.mxu0 0
        %1053 = vmatpush1.bf16.msra.mxu0 %v1034
        %1054 = vmatprep.subr.bf16.mxu0 0
        %1055 = vmatpush2.bf16.msra.mxu0 0
        %1056 = vmatprep.subr.bf16.mxu0 0
        %1057 = vmatpush2.bf16.msra.mxu0 0
        %1058 = vmatprep.subr.bf16.mxu0 0
        %1059 = vmatpush2.bf16.msra.mxu0 0
        %1060 = vmatprep.subr.bf16.mxu0 0
        %1061 = vmatpush2.bf16.msra.mxu0 0
        %1062 = vmatprep.subr.bf16.mxu0 0
        %1063 = vmatpush2.bf16.msra.mxu0 0
        %1064 = vmatprep.subr.bf16.mxu0 0
        %1065 = vmatpush2.bf16.msra.mxu0 0
        %1066 = vmatprep.subr.bf16.mxu0 0
        %1067 = vmatpush2.bf16.msra.mxu0 0
        %1068 = vmatprep.subr.bf16.mxu0 0
        %1069 = vmatpush2.bf16.msra.mxu0 0
        %1070 = vmatprep.mubr.bf16.mxu0 0
        %1071 = vmatmul.mubr.bf16.gmra.mxu0 %v876
        %v1072 = vpop.f32.mrf.mxu0
        %v1073 = vadd.f32 0.0, %v1072
        %v1074 = vpop.f32.mrf.mxu0
        %v1075 = vpop.f32.mrf.mxu0
        %v1076 = vadd.f32 0.0, %v1075
        %v1077 = vpop.f32.mrf.mxu0
        %1078 = vmatprep.mubr.bf16.mxu0 0
        %1079 = vmatmul.mubr.bf16.gmra.mxu0 %v879
        %v1080 = vpop.f32.mrf.mxu0
        %v1081 = vadd.f32 0.0, %v1080
        %v1082 = vpop.f32.mrf.mxu0
        %v1083 = vpop.f32.mrf.mxu0
        %v1084 = vadd.f32 0.0, %v1083
        %v1085 = vpop.f32.mrf.mxu0
        %1086 = vdwg.mxu0
        %v1087 = vadd.f32 %v1008, %v1073
        %v1088 = vadd.f32 %v1011, %v1076
        %v1089 = vadd.f32 %v1016, %v1081
        %v1090 = vadd.f32 %v1019, %v1084
        %v1091 = vld [vmem:[%s7] sm:$0x1]
        %v1093 = vlaneseq
        %v1094 = vshrl.u32 %v1093, 7
        %v1095 = vsub.s32 0, %v1094
        %v1096 = vrot.slane %v1091, %v1095
        %v1098 = vadd.f32 %v1087, %v1096
        %v1099 = vadd.f32 %v1088, %v1096
        %v1100 = vadd.f32 %v1089, %v1096
        %v1101 = vadd.f32 %v1090, %v1096
        %v1102 = vlaneseq
        %v1103 = vshrl.u32 %v1102, 7
        %v1104 = vsub.s32 1, %v1103
        %v1105 = vrot.slane %v836, %v1104
        %v1106 = vadd.f32 %v1098, %v1105
        %v1107 = vadd.f32 %v1099, %v1105
        %v1108 = vadd.f32 %v1100, %v1105
        %v1109 = vadd.f32 %v1101, %v1105
        %v1110 = vpack.c.bf16 %v1107, %v1106
        %v1111 = vpack.c.bf16 %v1109, %v1108
        %v1112 = vld [vmem:[%s8] sm:$0xf]
        %v1113 = vld [vmem:[%s8 + $0x4] sm:$0xf]
        %v1114 = vld [vmem:[%s8 + $0x8] sm:$0xf]
        %v1115 = vld [vmem:[%s8 + $0xc] sm:$0xf]
        %v1116 = vld [vmem:[%s9] sm:$0x1]
        %v1118 = vlaneseq
        %v1119 = vshrl.u32 %v1118, 7
        %v1120 = vsub.s32 0, %v1119
        %v1121 = vrot.slane %v1116, %v1120
        %v1127 = vunpack.c.l.b16 %v1112
        %v1128 = vunpack.c.l.b16 %v1113
        %v1129 = vunpack.c.l.b16 %v1114
        %v1130 = vunpack.c.l.b16 %v1115
        %v1131 = vpack.c.b16 %v1128, %v1127
        %v1132 = vpack.c.b16 %v1130, %v1129
        %v1136 = vsel %vm874, %v1110, 0
        %v1139 = vsel %vm874, %v1111, 0
        %1141 = vmatprep.subr.bf16.mxu0 0
        %1142 = vmatpush1.bf16.msra.mxu0 0
        %1143 = vmatprep.subr.bf16.mxu0 0
        %1144 = vmatpush1.bf16.msra.mxu0 0
        %1145 = vmatprep.subr.bf16.mxu0 0
        %1146 = vmatpush1.bf16.msra.mxu0 0
        %1147 = vmatprep.subr.bf16.mxu0 0
        %1148 = vmatpush1.bf16.msra.mxu0 0
        %1149 = vmatprep.subr.bf16.mxu0 0
        %1150 = vmatpush1.bf16.msra.mxu0 0
        %1151 = vmatprep.subr.bf16.mxu0 0
        %1152 = vmatpush1.bf16.msra.mxu0 0
        %1153 = vmatprep.subr.bf16.mxu0 0
        %1154 = vmatpush1.bf16.msra.mxu0 %v1132
        %1155 = vmatprep.subr.bf16.mxu0 0
        %1156 = vmatpush1.bf16.msra.mxu0 %v1131
        %1157 = vmatprep.subr.bf16.mxu0 0
        %1158 = vmatpush2.bf16.msra.mxu0 0
        %1159 = vmatprep.subr.bf16.mxu0 0
        %1160 = vmatpush2.bf16.msra.mxu0 0
        %1161 = vmatprep.subr.bf16.mxu0 0
        %1162 = vmatpush2.bf16.msra.mxu0 0
        %1163 = vmatprep.subr.bf16.mxu0 0
        %1164 = vmatpush2.bf16.msra.mxu0 0
        %1165 = vmatprep.subr.bf16.mxu0 0
        %1166 = vmatpush2.bf16.msra.mxu0 0
        %1167 = vmatprep.subr.bf16.mxu0 0
        %1168 = vmatpush2.bf16.msra.mxu0 0
        %1169 = vmatprep.subr.bf16.mxu0 0
        %1170 = vmatpush2.bf16.msra.mxu0 0
        %1171 = vmatprep.subr.bf16.mxu0 0
        %1172 = vmatpush2.bf16.msra.mxu0 0
        %1173 = vmatprep.mubr.bf16.mxu0 0
        %1174 = vmatmul.mubr.bf16.gmra.mxu0 %v1136
        %v1175 = vpop.f32.mrf.mxu0
        %v1176 = vadd.f32 %v1121, %v1175
        %v1177 = vpop.f32.mrf.mxu0
        %v1178 = vpop.f32.mrf.mxu0
        %v1179 = vadd.f32 %v1121, %v1178
        %v1180 = vpop.f32.mrf.mxu0
        %1181 = vmatprep.mubr.bf16.mxu0 0
        %1182 = vmatmul.mubr.bf16.gmra.mxu0 %v1139
        %v1183 = vpop.f32.mrf.mxu0
        %v1184 = vadd.f32 %v1121, %v1183
        %v1185 = vpop.f32.mrf.mxu0
        %v1186 = vpop.f32.mrf.mxu0
        %v1187 = vadd.f32 %v1121, %v1186
        %v1188 = vpop.f32.mrf.mxu0
        %1189 = vdwg.mxu0
        %v1190 = vmax.f32 %v1176, 0.0
        %v1191 = vmax.f32 %v1179, 0.0
        %v1192 = vmax.f32 %v1184, 0.0
        %v1193 = vmax.f32 %v1187, 0.0
        %v1194 = vld [vmem:[%s10] sm:$0xf]
        %v1195 = vld [vmem:[%s10 + $0x4] sm:$0xf]
        %v1196 = vpack.c.bf16 %v1191, %v1190
        %v1197 = vpack.c.bf16 %v1193, %v1192
        %v1198 = vld [vmem:[%s11] sm:$0x1]
        %v1200 = vlaneseq
        %v1201 = vshrl.u32 %v1200, 7
        %v1202 = vsub.s32 0, %v1201
        %v1203 = vrot.slane %v1198, %v1202
        %v1207 = vunpack.c.l.b16 %v1194
        %v1208 = vunpack.c.l.b16 %v1195
        %v1209 = vpack.c.b16 %v1208, %v1207
        %vm1211 = vcmask 130048
        %v1213 = vsel %vm1211, %v1196, 0
        %v1216 = vsel %vm1211, %v1197, 0
        %1218 = vmatprep.subr.bf16.mxu0 0
        %1219 = vmatpush1.bf16.msra.mxu0 0
        %1220 = vmatprep.subr.bf16.mxu0 0
        %1221 = vmatpush1.bf16.msra.mxu0 0
        %1222 = vmatprep.subr.bf16.mxu0 0
        %1223 = vmatpush1.bf16.msra.mxu0 0
        %1224 = vmatprep.subr.bf16.mxu0 0
        %1225 = vmatpush1.bf16.msra.mxu0 0
        %1226 = vmatprep.subr.bf16.mxu0 0
        %1227 = vmatpush1.bf16.msra.mxu0 0
        %1228 = vmatprep.subr.bf16.mxu0 0
        %1229 = vmatpush1.bf16.msra.mxu0 0
        %1230 = vmatprep.subr.bf16.mxu0 0
        %1231 = vmatpush1.bf16.msra.mxu0 0
        %1232 = vmatprep.subr.bf16.mxu0 0
        %1233 = vmatpush1.bf16.msra.mxu0 %v1209
        %1234 = vmatprep.subr.bf16.mxu0 0
        %1235 = vmatpush2.bf16.msra.mxu0 0
        %1236 = vmatprep.subr.bf16.mxu0 0
        %1237 = vmatpush2.bf16.msra.mxu0 0
        %1238 = vmatprep.subr.bf16.mxu0 0
        %1239 = vmatpush2.bf16.msra.mxu0 0
        %1240 = vmatprep.subr.bf16.mxu0 0
        %1241 = vmatpush2.bf16.msra.mxu0 0
        %1242 = vmatprep.subr.bf16.mxu0 0
        %1243 = vmatpush2.bf16.msra.mxu0 0
        %1244 = vmatprep.subr.bf16.mxu0 0
        %1245 = vmatpush2.bf16.msra.mxu0 0
        %1246 = vmatprep.subr.bf16.mxu0 0
        %1247 = vmatpush2.bf16.msra.mxu0 0
        %1248 = vmatprep.subr.bf16.mxu0 0
        %1249 = vmatpush2.bf16.msra.mxu0 0
        %1250 = vmatprep.mubr.bf16.mxu0 0
        %1251 = vmatmul.mubr.bf16.gmra.mxu0 %v1213
        %v1252 = vpop.f32.mrf.mxu0
        %v1253 = vadd.f32 %v1203, %v1252
        %v1254 = vpop.f32.mrf.mxu0
        %v1255 = vpop.f32.mrf.mxu0
        %v1256 = vadd.f32 %v1203, %v1255
        %v1257 = vpop.f32.mrf.mxu0
        %1258 = vmatprep.mubr.bf16.mxu0 0
        %1259 = vmatmul.mubr.bf16.gmra.mxu0 %v1216
        %v1260 = vpop.f32.mrf.mxu0
        %v1261 = vadd.f32 %v1203, %v1260
        %v1262 = vpop.f32.mrf.mxu0
        %v1263 = vpop.f32.mrf.mxu0
        %v1264 = vadd.f32 %v1203, %v1263
        %v1265 = vpop.f32.mrf.mxu0
        %1266 = vdwg.mxu0
        %v1267 = vld [vmem:[%s12] sm:$0xf]
        %v1268 = vld [vmem:[%s12 + $0x4] sm:$0xf]
        %v1269 = vld [vmem:[%s12 + $0x8] sm:$0xf]
        %v1270 = vld [vmem:[%s12 + $0xc] sm:$0xf]
        %v1275 = vunpack.c.l.b16 %v1267
        %v1276 = vunpack.c.l.b16 %v1268
        %v1277 = vunpack.c.l.b16 %v1269
        %v1278 = vunpack.c.l.b16 %v1270
        %v1279 = vpack.c.b16 %v1276, %v1275
        %v1280 = vpack.c.b16 %v1278, %v1277
        %1283 = vmatprep.subr.bf16.mxu0 0
        %1284 = vmatpush1.bf16.msra.mxu0 0
        %1285 = vmatprep.subr.bf16.mxu0 0
        %1286 = vmatpush1.bf16.msra.mxu0 0
        %1287 = vmatprep.subr.bf16.mxu0 0
        %1288 = vmatpush1.bf16.msra.mxu0 0
        %1289 = vmatprep.subr.bf16.mxu0 0
        %1290 = vmatpush1.bf16.msra.mxu0 0
        %1291 = vmatprep.subr.bf16.mxu0 0
        %1292 = vmatpush1.bf16.msra.mxu0 0
        %1293 = vmatprep.subr.bf16.mxu0 0
        %1294 = vmatpush1.bf16.msra.mxu0 0
        %1295 = vmatprep.subr.bf16.mxu0 0
        %1296 = vmatpush1.bf16.msra.mxu0 %v1280
        %1297 = vmatprep.subr.bf16.mxu0 0
        %1298 = vmatpush1.bf16.msra.mxu0 %v1279
        %1299 = vmatprep.subr.bf16.mxu0 0
        %1300 = vmatpush2.bf16.msra.mxu0 0
        %1301 = vmatprep.subr.bf16.mxu0 0
        %1302 = vmatpush2.bf16.msra.mxu0 0
        %1303 = vmatprep.subr.bf16.mxu0 0
        %1304 = vmatpush2.bf16.msra.mxu0 0
        %1305 = vmatprep.subr.bf16.mxu0 0
        %1306 = vmatpush2.bf16.msra.mxu0 0
        %1307 = vmatprep.subr.bf16.mxu0 0
        %1308 = vmatpush2.bf16.msra.mxu0 0
        %1309 = vmatprep.subr.bf16.mxu0 0
        %1310 = vmatpush2.bf16.msra.mxu0 0
        %1311 = vmatprep.subr.bf16.mxu0 0
        %1312 = vmatpush2.bf16.msra.mxu0 0
        %1313 = vmatprep.subr.bf16.mxu0 0
        %1314 = vmatpush2.bf16.msra.mxu0 0
        %1315 = vmatprep.mubr.bf16.mxu0 0
        %1316 = vmatmul.mubr.bf16.gmra.mxu0 %v1136
        %v1317 = vpop.f32.mrf.mxu0
        %v1318 = vadd.f32 0.0, %v1317
        %v1319 = vpop.f32.mrf.mxu0
        %v1320 = vpop.f32.mrf.mxu0
        %v1321 = vadd.f32 0.0, %v1320
        %v1322 = vpop.f32.mrf.mxu0
        %1323 = vmatprep.mubr.bf16.mxu0 0
        %1324 = vmatmul.mubr.bf16.gmra.mxu0 %v1139
        %v1325 = vpop.f32.mrf.mxu0
        %v1326 = vadd.f32 0.0, %v1325
        %v1327 = vpop.f32.mrf.mxu0
        %v1328 = vpop.f32.mrf.mxu0
        %v1329 = vadd.f32 0.0, %v1328
        %v1330 = vpop.f32.mrf.mxu0
        %1331 = vdwg.mxu0
        %v1332 = vadd.f32 %v1253, %v1318
        %v1333 = vadd.f32 %v1256, %v1321
        %v1334 = vadd.f32 %v1261, %v1326
        %v1335 = vadd.f32 %v1264, %v1329
        %v1336 = vld [vmem:[%s13] sm:$0x1]
        %v1338 = vlaneseq
        %v1339 = vshrl.u32 %v1338, 7
        %v1340 = vsub.s32 0, %v1339
        %v1341 = vrot.slane %v1336, %v1340
        %v1343 = vadd.f32 %v1332, %v1341
        %v1344 = vadd.f32 %v1333, %v1341
        %v1345 = vadd.f32 %v1334, %v1341
        %v1346 = vadd.f32 %v1335, %v1341
        %v1347 = vpack.c.bf16 %v1344, %v1343
        %v1348 = vpack.c.bf16 %v1346, %v1345
        %v1349 = vld [vmem:[%s14] sm:$0xf]
        %v1350 = vld [vmem:[%s14 + $0x4] sm:$0xf]
        %v1351 = vld [vmem:[%s14 + $0x8] sm:$0xf]
        %v1352 = vld [vmem:[%s14 + $0xc] sm:$0xf]
        %v1353 = vld [vmem:[%s15] sm:$0x1]
        %v1355 = vlaneseq
        %v1356 = vshrl.u32 %v1355, 7
        %v1357 = vsub.s32 0, %v1356
        %v1358 = vrot.slane %v1353, %v1357
        %v1364 = vunpack.c.l.b16 %v1349
        %v1365 = vunpack.c.l.b16 %v1350
        %v1366 = vunpack.c.l.b16 %v1351
        %v1367 = vunpack.c.l.b16 %v1352
        %v1368 = vpack.c.b16 %v1365, %v1364
        %v1369 = vpack.c.b16 %v1367, %v1366
        %v1373 = vsel %vm874, %v1347, 0
        %v1376 = vsel %vm874, %v1348, 0
        %1378 = vmatprep.subr.bf16.mxu0 0
        %1379 = vmatpush1.bf16.msra.mxu0 0
        %1380 = vmatprep.subr.bf16.mxu0 0
        %1381 = vmatpush1.bf16.msra.mxu0 0
        %1382 = vmatprep.subr.bf16.mxu0 0
        %1383 = vmatpush1.bf16.msra.mxu0 0
        %1384 = vmatprep.subr.bf16.mxu0 0
        %1385 = vmatpush1.bf16.msra.mxu0 0
        %1386 = vmatprep.subr.bf16.mxu0 0
        %1387 = vmatpush1.bf16.msra.mxu0 0
        %1388 = vmatprep.subr.bf16.mxu0 0
        %1389 = vmatpush1.bf16.msra.mxu0 0
        %1390 = vmatprep.subr.bf16.mxu0 0
        %1391 = vmatpush1.bf16.msra.mxu0 %v1369
        %1392 = vmatprep.subr.bf16.mxu0 0
        %1393 = vmatpush1.bf16.msra.mxu0 %v1368
        %1394 = vmatprep.subr.bf16.mxu0 0
        %1395 = vmatpush2.bf16.msra.mxu0 0
        %1396 = vmatprep.subr.bf16.mxu0 0
        %1397 = vmatpush2.bf16.msra.mxu0 0
        %1398 = vmatprep.subr.bf16.mxu0 0
        %1399 = vmatpush2.bf16.msra.mxu0 0
        %1400 = vmatprep.subr.bf16.mxu0 0
        %1401 = vmatpush2.bf16.msra.mxu0 0
        %1402 = vmatprep.subr.bf16.mxu0 0
        %1403 = vmatpush2.bf16.msra.mxu0 0
        %1404 = vmatprep.subr.bf16.mxu0 0
        %1405 = vmatpush2.bf16.msra.mxu0 0
        %1406 = vmatprep.subr.bf16.mxu0 0
        %1407 = vmatpush2.bf16.msra.mxu0 0
        %1408 = vmatprep.subr.bf16.mxu0 0
        %1409 = vmatpush2.bf16.msra.mxu0 0
        %1410 = vmatprep.mubr.bf16.mxu0 0
        %1411 = vmatmul.mubr.bf16.gmra.mxu0 %v1373
        %v1412 = vpop.f32.mrf.mxu0
        %v1413 = vadd.f32 %v1358, %v1412
        %v1414 = vpop.f32.mrf.mxu0
        %v1415 = vpop.f32.mrf.mxu0
        %v1416 = vadd.f32 %v1358, %v1415
        %v1417 = vpop.f32.mrf.mxu0
        %1418 = vmatprep.mubr.bf16.mxu0 0
        %1419 = vmatmul.mubr.bf16.gmra.mxu0 %v1376
        %v1420 = vpop.f32.mrf.mxu0
        %v1421 = vadd.f32 %v1358, %v1420
        %v1422 = vpop.f32.mrf.mxu0
        %v1423 = vpop.f32.mrf.mxu0
        %v1424 = vadd.f32 %v1358, %v1423
        %v1425 = vpop.f32.mrf.mxu0
        %1426 = vdwg.mxu0
        %v1427 = vlaneseq
        %v1428 = vshrl.u32 %v1427, 7
        %v1429 = vsub.s32 2, %v1428
        %v1430 = vrot.slane %v836, %v1429
        %v1431 = vadd.f32 %v1413, %v1430
        %v1432 = vadd.f32 %v1416, %v1430
        %v1433 = vadd.f32 %v1421, %v1430
        %v1434 = vadd.f32 %v1424, %v1430
        %v1435 = vmax.f32 %v1431, 0.0
        %v1436 = vmax.f32 %v1432, 0.0
        %v1437 = vmax.f32 %v1433, 0.0
        %v1438 = vmax.f32 %v1434, 0.0
        %v1439 = vld [vmem:[%s16] sm:$0xf]
        %v1440 = vld [vmem:[%s16 + $0x4] sm:$0xf]
        %v1441 = vld [vmem:[%s16 + $0x8] sm:$0xf]
        %v1442 = vld [vmem:[%s16 + $0xc] sm:$0xf]
        %v1443 = vpack.c.bf16 %v1436, %v1435
        %v1444 = vpack.c.bf16 %v1438, %v1437
        %v1445 = vld [vmem:[%s17] sm:$0x1]
        %v1447 = vlaneseq
        %v1448 = vshrl.u32 %v1447, 7
        %v1449 = vsub.s32 0, %v1448
        %v1450 = vrot.slane %v1445, %v1449
        %v1456 = vunpack.c.l.b16 %v1439
        %v1457 = vunpack.c.l.b16 %v1440
        %v1458 = vunpack.c.l.b16 %v1441
        %v1459 = vunpack.c.l.b16 %v1442
        %v1460 = vpack.c.b16 %v1457, %v1456
        %v1461 = vpack.c.b16 %v1459, %v1458
        %v1465 = vsel %vm874, %v1443, 0
        %v1468 = vsel %vm874, %v1444, 0
        %1470 = vmatprep.subr.bf16.mxu0 0
        %1471 = vmatpush1.bf16.msra.mxu0 0
        %1472 = vmatprep.subr.bf16.mxu0 0
        %1473 = vmatpush1.bf16.msra.mxu0 0
        %1474 = vmatprep.subr.bf16.mxu0 0
        %1475 = vmatpush1.bf16.msra.mxu0 0
        %1476 = vmatprep.subr.bf16.mxu0 0
        %1477 = vmatpush1.bf16.msra.mxu0 0
        %1478 = vmatprep.subr.bf16.mxu0 0
        %1479 = vmatpush1.bf16.msra.mxu0 0
        %1480 = vmatprep.subr.bf16.mxu0 0
        %1481 = vmatpush1.bf16.msra.mxu0 0
        %1482 = vmatprep.subr.bf16.mxu0 0
        %1483 = vmatpush1.bf16.msra.mxu0 %v1461
        %1484 = vmatprep.subr.bf16.mxu0 0
        %1485 = vmatpush1.bf16.msra.mxu0 %v1460
        %1486 = vmatprep.subr.bf16.mxu0 0
        %1487 = vmatpush2.bf16.msra.mxu0 0
        %1488 = vmatprep.subr.bf16.mxu0 0
        %1489 = vmatpush2.bf16.msra.mxu0 0
        %1490 = vmatprep.subr.bf16.mxu0 0
        %1491 = vmatpush2.bf16.msra.mxu0 0
        %1492 = vmatprep.subr.bf16.mxu0 0
        %1493 = vmatpush2.bf16.msra.mxu0 0
        %1494 = vmatprep.subr.bf16.mxu0 0
        %1495 = vmatpush2.bf16.msra.mxu0 0
        %1496 = vmatprep.subr.bf16.mxu0 0
        %1497 = vmatpush2.bf16.msra.mxu0 0
        %1498 = vmatprep.subr.bf16.mxu0 0
        %1499 = vmatpush2.bf16.msra.mxu0 0
        %1500 = vmatprep.subr.bf16.mxu0 0
        %1501 = vmatpush2.bf16.msra.mxu0 0
        %1502 = vmatprep.mubr.bf16.mxu0 0
        %1503 = vmatmul.mubr.bf16.gmra.mxu0 %v1465
        %v1504 = vpop.f32.mrf.mxu0
        %v1505 = vadd.f32 %v1450, %v1504
        %v1506 = vpop.f32.mrf.mxu0
        %v1507 = vpop.f32.mrf.mxu0
        %v1508 = vadd.f32 %v1450, %v1507
        %v1509 = vpop.f32.mrf.mxu0
        %1510 = vmatprep.mubr.bf16.mxu0 0
        %1511 = vmatmul.mubr.bf16.gmra.mxu0 %v1468
        %v1512 = vpop.f32.mrf.mxu0
        %v1513 = vadd.f32 %v1450, %v1512
        %v1514 = vpop.f32.mrf.mxu0
        %v1515 = vpop.f32.mrf.mxu0
        %v1516 = vadd.f32 %v1450, %v1515
        %v1517 = vpop.f32.mrf.mxu0
        %1518 = vdwg.mxu0
        %v1519 = vld [vmem:[%s18] sm:$0xf]
        %v1520 = vld [vmem:[%s18 + $0x4] sm:$0xf]
        %v1521 = vld [vmem:[%s18 + $0x8] sm:$0xf]
        %v1522 = vld [vmem:[%s18 + $0xc] sm:$0xf]
        %v1527 = vunpack.c.l.b16 %v1519
        %v1528 = vunpack.c.l.b16 %v1520
        %v1529 = vunpack.c.l.b16 %v1521
        %v1530 = vunpack.c.l.b16 %v1522
        %v1531 = vpack.c.b16 %v1528, %v1527
        %v1532 = vpack.c.b16 %v1530, %v1529
        %1535 = vmatprep.subr.bf16.mxu0 0
        %1536 = vmatpush1.bf16.msra.mxu0 0
        %1537 = vmatprep.subr.bf16.mxu0 0
        %1538 = vmatpush1.bf16.msra.mxu0 0
        %1539 = vmatprep.subr.bf16.mxu0 0
        %1540 = vmatpush1.bf16.msra.mxu0 0
        %1541 = vmatprep.subr.bf16.mxu0 0
        %1542 = vmatpush1.bf16.msra.mxu0 0
        %1543 = vmatprep.subr.bf16.mxu0 0
        %1544 = vmatpush1.bf16.msra.mxu0 0
        %1545 = vmatprep.subr.bf16.mxu0 0
        %1546 = vmatpush1.bf16.msra.mxu0 0
        %1547 = vmatprep.subr.bf16.mxu0 0
        %1548 = vmatpush1.bf16.msra.mxu0 %v1532
        %1549 = vmatprep.subr.bf16.mxu0 0
        %1550 = vmatpush1.bf16.msra.mxu0 %v1531
        %1551 = vmatprep.subr.bf16.mxu0 0
        %1552 = vmatpush2.bf16.msra.mxu0 0
        %1553 = vmatprep.subr.bf16.mxu0 0
        %1554 = vmatpush2.bf16.msra.mxu0 0
        %1555 = vmatprep.subr.bf16.mxu0 0
        %1556 = vmatpush2.bf16.msra.mxu0 0
        %1557 = vmatprep.subr.bf16.mxu0 0
        %1558 = vmatpush2.bf16.msra.mxu0 0
        %1559 = vmatprep.subr.bf16.mxu0 0
        %1560 = vmatpush2.bf16.msra.mxu0 0
        %1561 = vmatprep.subr.bf16.mxu0 0
        %1562 = vmatpush2.bf16.msra.mxu0 0
        %1563 = vmatprep.subr.bf16.mxu0 0
        %1564 = vmatpush2.bf16.msra.mxu0 0
        %1565 = vmatprep.subr.bf16.mxu0 0
        %1566 = vmatpush2.bf16.msra.mxu0 0
        %1567 = vmatprep.mubr.bf16.mxu0 0
        %1568 = vmatmul.mubr.bf16.gmra.mxu0 %v1373
        %v1569 = vpop.f32.mrf.mxu0
        %v1570 = vadd.f32 0.0, %v1569
        %v1571 = vpop.f32.mrf.mxu0
        %v1572 = vpop.f32.mrf.mxu0
        %v1573 = vadd.f32 0.0, %v1572
        %v1574 = vpop.f32.mrf.mxu0
        %1575 = vmatprep.mubr.bf16.mxu0 0
        %1576 = vmatmul.mubr.bf16.gmra.mxu0 %v1376
        %v1577 = vpop.f32.mrf.mxu0
        %v1578 = vadd.f32 0.0, %v1577
        %v1579 = vpop.f32.mrf.mxu0
        %v1580 = vpop.f32.mrf.mxu0
        %v1581 = vadd.f32 0.0, %v1580
        %v1582 = vpop.f32.mrf.mxu0
        %1583 = vdwg.mxu0
        %v1584 = vadd.f32 %v1505, %v1570
        %v1585 = vadd.f32 %v1508, %v1573
        %v1586 = vadd.f32 %v1513, %v1578
        %v1587 = vadd.f32 %v1516, %v1581
        %v1588 = vld [vmem:[%s19] sm:$0x1]
        %v1590 = vlaneseq
        %v1591 = vshrl.u32 %v1590, 7
        %v1592 = vsub.s32 0, %v1591
        %v1593 = vrot.slane %v1588, %v1592
        %v1595 = vadd.f32 %v1584, %v1593
        %v1596 = vadd.f32 %v1585, %v1593
        %v1597 = vadd.f32 %v1586, %v1593
        %v1598 = vadd.f32 %v1587, %v1593
        %v1599 = vlaneseq
        %v1600 = vshrl.u32 %v1599, 7
        %v1601 = vsub.s32 3, %v1600
        %v1602 = vrot.slane %v836, %v1601
        %v1603 = vadd.f32 %v1595, %v1602
        %v1604 = vadd.f32 %v1596, %v1602
        %v1605 = vadd.f32 %v1597, %v1602
        %v1606 = vadd.f32 %v1598, %v1602
        %1607 = vst.msk [vmem:[%s798] sm:$0xff] %vm874, %v1603
        %1608 = vst.msk [vmem:[%s798 + $0x8] sm:$0xff] %vm874, %v1604
        %1609 = vst.msk [vmem:[%s798 + $0x10] sm:$0xff] %vm874, %v1605
        %1610 = vst.msk [vmem:[%s798 + $0x18] sm:$0xff] %vm874, %v1606
        %v1611 = vpack.c.bf16 %v1604, %v1603
        %v1612 = vpack.c.bf16 %v1606, %v1605
        %v1613 = vld [vmem:[%s20] sm:$0xf]
        %v1614 = vld [vmem:[%s20 + $0x4] sm:$0xf]
        %v1615 = vld [vmem:[%s20 + $0x8] sm:$0xf]
        %v1616 = vld [vmem:[%s20 + $0xc] sm:$0xf]
        %v1617 = vld [vmem:[%s21] sm:$0x1]
        %v1619 = vlaneseq
        %v1620 = vshrl.u32 %v1619, 7
        %v1621 = vsub.s32 0, %v1620
        %v1622 = vrot.slane %v1617, %v1621
        %v1628 = vunpack.c.l.b16 %v1613
        %v1629 = vunpack.c.l.b16 %v1614
        %v1630 = vunpack.c.l.b16 %v1615
        %v1631 = vunpack.c.l.b16 %v1616
        %v1632 = vpack.c.b16 %v1629, %v1628
        %v1633 = vpack.c.b16 %v1631, %v1630
        %v1637 = vsel %vm874, %v1611, 0
        %v1640 = vsel %vm874, %v1612, 0
        %1642 = vmatprep.subr.bf16.mxu0 0
        %1643 = vmatpush1.bf16.msra.mxu0 0
        %1644 = vmatprep.subr.bf16.mxu0 0
        %1645 = vmatpush1.bf16.msra.mxu0 0
        %1646 = vmatprep.subr.bf16.mxu0 0
        %1647 = vmatpush1.bf16.msra.mxu0 0
        %1648 = vmatprep.subr.bf16.mxu0 0
        %1649 = vmatpush1.bf16.msra.mxu0 0
        %1650 = vmatprep.subr.bf16.mxu0 0
        %1651 = vmatpush1.bf16.msra.mxu0 0
        %1652 = vmatprep.subr.bf16.mxu0 0
        %1653 = vmatpush1.bf16.msra.mxu0 0
        %1654 = vmatprep.subr.bf16.mxu0 0
        %1655 = vmatpush1.bf16.msra.mxu0 %v1633
        %1656 = vmatprep.subr.bf16.mxu0 0
        %1657 = vmatpush1.bf16.msra.mxu0 %v1632
        %1658 = vmatprep.subr.bf16.mxu0 0
        %1659 = vmatpush2.bf16.msra.mxu0 0
        %1660 = vmatprep.subr.bf16.mxu0 0
        %1661 = vmatpush2.bf16.msra.mxu0 0
        %1662 = vmatprep.subr.bf16.mxu0 0
        %1663 = vmatpush2.bf16.msra.mxu0 0
        %1664 = vmatprep.subr.bf16.mxu0 0
        %1665 = vmatpush2.bf16.msra.mxu0 0
        %1666 = vmatprep.subr.bf16.mxu0 0
        %1667 = vmatpush2.bf16.msra.mxu0 0
        %1668 = vmatprep.subr.bf16.mxu0 0
        %1669 = vmatpush2.bf16.msra.mxu0 0
        %1670 = vmatprep.subr.bf16.mxu0 0
        %1671 = vmatpush2.bf16.msra.mxu0 0
        %1672 = vmatprep.subr.bf16.mxu0 0
        %1673 = vmatpush2.bf16.msra.mxu0 0
        %1674 = vmatprep.mubr.bf16.mxu0 0
        %1675 = vmatmul.mubr.bf16.gmra.mxu0 %v1637
        %v1676 = vpop.f32.mrf.mxu0
        %v1677 = vadd.f32 %v1622, %v1676
        %v1678 = vpop.f32.mrf.mxu0
        %v1679 = vpop.f32.mrf.mxu0
        %v1680 = vadd.f32 %v1622, %v1679
        %v1681 = vpop.f32.mrf.mxu0
        %1682 = vmatprep.mubr.bf16.mxu0 0
        %1683 = vmatmul.mubr.bf16.gmra.mxu0 %v1640
        %v1684 = vpop.f32.mrf.mxu0
        %v1685 = vadd.f32 %v1622, %v1684
        %v1686 = vpop.f32.mrf.mxu0
        %v1687 = vpop.f32.mrf.mxu0
        %v1688 = vadd.f32 %v1622, %v1687
        %v1689 = vpop.f32.mrf.mxu0
        %1690 = vdwg.mxu0
        %v1691 = vmax.f32 %v1677, 0.0
        %v1692 = vmax.f32 %v1680, 0.0
        %v1693 = vmax.f32 %v1685, 0.0
        %v1694 = vmax.f32 %v1688, 0.0
        %v1695 = vld [vmem:[%s22] sm:$0xf]
        %v1696 = vld [vmem:[%s22 + $0x4] sm:$0xf]
        %v1697 = vpack.c.bf16 %v1692, %v1691
        %v1698 = vpack.c.bf16 %v1694, %v1693
        %v1699 = vld [vmem:[%s23] sm:$0x1]
        %v1701 = vlaneseq
        %v1702 = vshrl.u32 %v1701, 7
        %v1703 = vsub.s32 0, %v1702
        %v1704 = vrot.slane %v1699, %v1703
        %v1708 = vunpack.c.l.b16 %v1695
        %v1709 = vunpack.c.l.b16 %v1696
        %v1710 = vpack.c.b16 %v1709, %v1708
        %v1713 = vsel %vm1211, %v1697, 0
        %v1716 = vsel %vm1211, %v1698, 0
        %1718 = vmatprep.subr.bf16.mxu0 0
        %1719 = vmatpush1.bf16.msra.mxu0 0
        %1720 = vmatprep.subr.bf16.mxu0 0
        %1721 = vmatpush1.bf16.msra.mxu0 0
        %1722 = vmatprep.subr.bf16.mxu0 0
        %1723 = vmatpush1.bf16.msra.mxu0 0
        %1724 = vmatprep.subr.bf16.mxu0 0
        %1725 = vmatpush1.bf16.msra.mxu0 0
        %1726 = vmatprep.subr.bf16.mxu0 0
        %1727 = vmatpush1.bf16.msra.mxu0 0
        %1728 = vmatprep.subr.bf16.mxu0 0
        %1729 = vmatpush1.bf16.msra.mxu0 0
        %1730 = vmatprep.subr.bf16.mxu0 0
        %1731 = vmatpush1.bf16.msra.mxu0 0
        %1732 = vmatprep.subr.bf16.mxu0 0
        %1733 = vmatpush1.bf16.msra.mxu0 %v1710
        %1734 = vmatprep.subr.bf16.mxu0 0
        %1735 = vmatpush2.bf16.msra.mxu0 0
        %1736 = vmatprep.subr.bf16.mxu0 0
        %1737 = vmatpush2.bf16.msra.mxu0 0
        %1738 = vmatprep.subr.bf16.mxu0 0
        %1739 = vmatpush2.bf16.msra.mxu0 0
        %1740 = vmatprep.subr.bf16.mxu0 0
        %1741 = vmatpush2.bf16.msra.mxu0 0
        %1742 = vmatprep.subr.bf16.mxu0 0
        %1743 = vmatpush2.bf16.msra.mxu0 0
        %1744 = vmatprep.subr.bf16.mxu0 0
        %1745 = vmatpush2.bf16.msra.mxu0 0
        %1746 = vmatprep.subr.bf16.mxu0 0
        %1747 = vmatpush2.bf16.msra.mxu0 0
        %1748 = vmatprep.subr.bf16.mxu0 0
        %1749 = vmatpush2.bf16.msra.mxu0 0
        %1750 = vmatprep.mubr.bf16.mxu0 0
        %1751 = vmatmul.mubr.bf16.gmra.mxu0 %v1713
        %v1752 = vpop.f32.mrf.mxu0
        %v1753 = vadd.f32 %v1704, %v1752
        %v1754 = vpop.f32.mrf.mxu0
        %v1755 = vpop.f32.mrf.mxu0
        %v1756 = vadd.f32 %v1704, %v1755
        %v1757 = vpop.f32.mrf.mxu0
        %1758 = vmatprep.mubr.bf16.mxu0 0
        %1759 = vmatmul.mubr.bf16.gmra.mxu0 %v1716
        %v1760 = vpop.f32.mrf.mxu0
        %v1761 = vadd.f32 %v1704, %v1760
        %v1762 = vpop.f32.mrf.mxu0
        %v1763 = vpop.f32.mrf.mxu0
        %v1764 = vadd.f32 %v1704, %v1763
        %v1765 = vpop.f32.mrf.mxu0
        %1766 = vdwg.mxu0
        %v1767 = vtanh.pop %v1753
        %v1768 = vtanh.pop %v1756
        %v1769 = vtanh.pop %v1761
        %v1770 = vtanh.pop %v1764
        %vm1771 = vcmask 23552
        %1772 = vst.msk [vmem:[%s833] sm:$0xff] %vm1771, %v1767
        %1773 = vst.msk [vmem:[%s833 + $0x8] sm:$0xff] %vm1771, %v1768
        %1774 = vst.msk [vmem:[%s833 + $0x10] sm:$0xff] %vm1771, %v1769
        %1775 = vst.msk [vmem:[%s833 + $0x18] sm:$0xff] %vm1771, %v1770
        %s1776 = sand.u32 %s578, 1
        %s1777 = scalar_lea.sflag [#allocation3], %s1776
        %s1778 = sand.u32 %s578, 1
        %s1779 = smul.addr %s1778, 32
        %s1780 = scalar_lea.vmem [#allocation2], %s1779
        %s1781 = smul.u32 4, %s45
        %p1782 = scmp.lt.s32.totalorder %s44, 1
        %s1783 = scalar_select %p1782, %s44, 1
        %p1784 = scmp.lt.s32.totalorder %s1781, 3
        %s1785 = scalar_select %p1784, %s1781, 3
        %s1786 = smul.addr %s1783, 4
        %s1787 = sadd.s32 %s1785, %s1786
        %s1788 = smul.addr %s1787, 8
        %s1789 = scalar_lea.vmem %s25, %s1788
        // Predicated region
        $region117: #{pallas_forward.5} parent=115 // pred_check
          %p1790 = pneg %p588
        $region118: #{pallas_forward.5} parent=115 // pred_check_branch
          %1792 = sbr.rel (%p1790) target = $region120
        $region119: #{pallas_forward.5} parent=115 // pred_region
          %s1793 = smul.u32 4, %s45
          %s1795 = ssub.s32 512, 512
          %1796 = vsyncadd %s1777, %s1795
          %s1797 = smul.addr %s44, 4
          %s1798 = sadd.s32 %s1793, %s1797
          %s1799 = smul.addr %s1798, 128
          %s1800 = scalar_lea.hbm %s24, %s1799
          %s1801 = sshll.u32 %s1780, 4
          %s1802 = int_to_ptr.vmem [resolvable:$true] %s1801
          %1807 = dma.vmem_to_hbm [thread:$0]  %s1802, 512, %s1800, %s1777, 128, 128, 8
        $region120: #{pallas_forward.5} parent=115 // pred_fallthru
          _
        // Predicated region
        $region121: #{pallas_forward.5} parent=115 // pred_check
          %p1808 = pneg %p616
        $region122: #{pallas_forward.5} parent=115 // pred_check_branch
          %1810 = sbr.rel (%p1808) target = $region124
        $region123: #{pallas_forward.5} parent=115 // pred_region
          %s1811 = smul.u32 4, %s45
        $region124: #{pallas_forward.5} parent=115 // pred_fallthru
          _
      $region116: #{pallas_forward.5} parent=5 // pred_fallthru
        _
      %p1812 = scmp.le.s32.totalorder 2, %s35
      // Predicated region
      $region125: #{pallas_forward.5} parent=5 // pred_check
        %p1813 = pneg %p1812
      $region126: #{pallas_forward.5} parent=5 // pred_check_branch
        %1815 = sbr.rel (%p1813) target = $region128
      $region127: #{pallas_forward.5} parent=5 // pred_region
        %s1816 = ssub.s32 %s35, 2
        // Predicated region
        $region129: #{pallas_forward.5} parent=127 // pred_check
          %p1817 = pneg %p594
        $region130: #{pallas_forward.5} parent=127 // pred_check_branch
          %1819 = sbr.rel (%p1817) target = $region132
        $region131: #{pallas_forward.5} parent=127 // pred_region
          %s1820 = sand.u32 %s579, 1
          %s1821 = scalar_lea.sflag [#allocation3], %s1820
          %s1822 = sand.u32 %s579, 1
          %s1823 = smul.addr %s1822, 32
          %s1824 = scalar_lea.vmem [#allocation2], %s1823
          %1825 = dma.done %s1821, 512
        $region132: #{pallas_forward.5} parent=127 // pred_fallthru
          _
        // Predicated region
        $region133: #{pallas_forward.5} parent=127 // pred_check
          %p1826 = pneg %p622
        $region134: #{pallas_forward.5} parent=127 // pred_check_branch
          %1828 = sbr.rel (%p1826) target = $region136
        $region135: #{pallas_forward.5} parent=127 // pred_region
          %s1829 = smul.u32 4, %s47
          %p1830 = scmp.lt.s32.totalorder %s46, 1
          %s1831 = scalar_select %p1830, %s46, 1
          %p1832 = scmp.lt.s32.totalorder %s1829, 3
          %s1833 = scalar_select %p1832, %s1829, 3
          %s1834 = smul.addr %s1831, 4
          %s1835 = sadd.s32 %s1833, %s1834
          %s1836 = smul.addr %s1835, 8
          %s1837 = scalar_lea.vmem %s25, %s1836
        $region136: #{pallas_forward.5} parent=127 // pred_fallthru
          _
      $region128: #{pallas_forward.5} parent=5 // pred_fallthru
        _
    $region6: #{pallas_forward.5} parent=1 // loop_footer
      %s39 = sadd.s32 1, %s35
    $region7: #{pallas_forward.5} parent=1 // loop_footer_branch
      %34 = sbr.rel target = $region3
    $region8: #{pallas_forward.5} parent=1 // loop_exit
      _
    %1838 = vsyncpa [#allocation3], 1
    %s1839 = scalar_lea.sflag [#allocation3], 1
    %1840 = vsyncpa %s1839, 1

</llo_original>
